<compile_context>
chip_gen: v7x
topology: tpu7x:2x2x1
jax: 0.10.0
libtpu: 0.0.40
codegen_flags: <defaults>
</compile_context>

<pallas_src>
import functools

import jax
import jax.numpy as jnp
from jax.experimental import pallas as pl
from jax.experimental.pallas import tpu as pltpu


# ----------------------------- Pallas kernel ------------------------------ #

def resblock_kernel(H, W, x_ref, wA_ref, w2_ref, w3_ref,
                    g1_ref, b1_ref, g2_ref, b2_ref, g3_ref, b3_ref,
                    out_ref, tap_ref):
    """Fused: [shortcut | conv1](1x1) -> bn1+relu -> conv2(3x3, p=1, im2col
    via roll+mask) -> bn2+relu -> conv3(1x1) -> bn3 -> +shortcut -> relu.

    H, W    : static spatial sizes (bound via functools.partial)
    x_ref   : (M, Cin)      bf16, M = N*H*W, NHWC row-major
    wA_ref  : (Cin, C1+C0)  bf16, [ws | w1] concatenated along out-channels
    w2_ref  : (9*C0, C0)    bf16, (kh, kw, cin) -> cout
    w3_ref  : (C0, C1)      bf16
    g*/b*   : (1, C)        f32 batchnorm gamma / beta
    out_ref : (M, C1)       f32
    tap_ref : (M, 9*C0)     bf16 scratch (im2col tap slab)
    """
    eps = jnp.float32(1e-5)
    M, C1 = out_ref.shape
    C0 = w2_ref.shape[1]

    def bn(y, g_ref, b_ref, relu):
        # Training-mode batch norm over rows; centered (two-pass) variance is
        # numerically safer than E[y^2]-mean^2; gamma*rsqrt(var+eps) folded
        # into a single per-channel scale + shift, ReLU fused into the apply.
        mean = jnp.mean(y, axis=0, keepdims=True)
        yc = y - mean
        var = jnp.mean(yc * yc, axis=0, keepdims=True)
        scale = g_ref[...] * jax.lax.rsqrt(var + eps)
        z = yc * scale + b_ref[...]
        return jnp.maximum(z, 0.0) if relu else z

    # --- conv1 (1x1) and projection shortcut fused into ONE matmul.
    #     [ws | w1] order: the shortcut slice starts at lane 0 (aligned). ---
    yA = jnp.dot(x_ref[...], wA_ref[...],
                 preferred_element_type=jnp.float32)         # (M, C1+C0) f32
    sc = yA[:, :C1]                      # conv1x1(x); no BN on the shortcut
    y1 = bn(yA[:, C1:C1 + C0], g1_ref, b1_ref, relu=True)    # relu(bn1(conv1))

    # --- conv2 (3x3, padding=1): im2col via XLU rolls + iota boundary masks,
    #     written straight into the bf16 tap slab (no padded 4-D scratch). ---
    # Row m = n*H*W + h*W + w.  Tap (kh, kw) of output row m reads input row
    # m + (kh-1)*W + (kw-1) when that pixel is inside the image, else 0.
    hw_idx = jax.lax.broadcasted_iota(           # h*W + w per row (2nd-minor)
        jnp.int32, (M // (H * W), H * W, C0), 1).reshape(M, C0)
    w_idx = jax.lax.broadcasted_iota(            # w per row (2nd-minor)
        jnp.int32, (M // W, W, C0), 1).reshape(M, C0)
    h_ok = (hw_idx >= W, None, hw_idx < (H - 1) * W)         # kh = 0, 1, 2
    w_ok = (w_idx >= 1, None, w_idx <= W - 2)                # kw = 0, 1, 2

    for t in range(9):
        kh, kw = divmod(t, 3)
        delta = (kh - 1) * W + (kw - 1)
        tap = y1 if delta == 0 else pltpu.roll(y1, shift=(-delta) % M, axis=0)
        mask = h_ok[kh]
        if w_ok[kw] is not None:
            mask = w_ok[kw] if mask is None else (mask & w_ok[kw])
        if mask is not None:
            tap = jnp.where(mask, tap, 0.0)
        tap_ref[:, t * C0:(t + 1) * C0] = tap.astype(jnp.bfloat16)

    # ... one K = 9*C0 MXU matmul instead of 9 accumulating skinny ones.
    y2 = bn(jnp.dot(tap_ref[...], w2_ref[...],
                    preferred_element_type=jnp.float32),     # (M, C0)
            g2_ref, b2_ref, relu=True)

    # --- conv3 (1x1) + bn3 + residual add + relu ---
    y3 = bn(jnp.dot(y2.astype(jnp.bfloat16), w3_ref[...],
                    preferred_element_type=jnp.float32),     # (M, C1)
            g3_ref, b3_ref, relu=False)
    out_ref[...] = jnp.maximum(y3 + sc, 0.0)


# ------------------------------ JAX wrapper -------------------------------- #

@jax.jit
def first_residual_block(x_nchw, w1, w2, w3, ws, g1, b1, g2, b2, g3, b3):
    """x_nchw: (N, Cin, H, W).  Conv weights in PyTorch OIHW.  Returns NCHW."""
    N, Cin, H, W = x_nchw.shape
    C0 = w1.shape[0]
    C1 = w3.shape[0]
    M = N * H * W

    # Layout / precision prep (bf16 matmul inputs, f32 BN params).
    # TODO(synk): the NCHW<->NHWC transposes are extra HBM passes that only
    #   exist to honor the PyTorch module's NCHW contract; drop them if the
    #   surrounding graph can stay NHWC.
    x_rows = (jnp.transpose(x_nchw, (0, 2, 3, 1))
              .reshape(M, Cin).astype(jnp.bfloat16))                  # NHWC rows
    w1_k = jnp.transpose(w1[:, :, 0, 0])                              # (Cin, C0)
    ws_k = jnp.transpose(ws[:, :, 0, 0])                              # (Cin, C1)
    wA_k = jnp.concatenate([ws_k, w1_k], axis=1).astype(jnp.bfloat16)  # [ws|w1]
    w2_k = (jnp.transpose(w2, (2, 3, 1, 0))                           # (3,3,Ci,Co)
            .reshape(9 * C0, C0).astype(jnp.bfloat16))
    w3_k = jnp.transpose(w3[:, :, 0, 0]).astype(jnp.bfloat16)         # (C0, C1)

    vmem = pltpu.MemorySpace.VMEM
    call = pl.pallas_call(
        functools.partial(resblock_kernel, H, W),
        out_shape=jax.ShapeDtypeStruct((M, C1), jnp.float32),
        in_specs=[pl.BlockSpec(memory_space=vmem)] * 10,
        out_specs=pl.BlockSpec(memory_space=vmem),
        scratch_shapes=[pltpu.VMEM((M, 9 * C0), jnp.bfloat16)],
    )
    out_rows = call(x_rows, wA_k, w2_k, w3_k,
                    g1.reshape(1, -1).astype(jnp.float32),
                    b1.reshape(1, -1).astype(jnp.float32),
                    g2.reshape(1, -1).astype(jnp.float32),
                    b2.reshape(1, -1).astype(jnp.float32),
                    g3.reshape(1, -1).astype(jnp.float32),
                    b3.reshape(1, -1).astype(jnp.float32))

    return jnp.transpose(out_rows.reshape(N, H, W, C1), (0, 3, 1, 2))  # NCHW


# --------------------------- pure-JAX references ---------------------------- #

def _conv_f32(x, w, padding):
    return jax.lax.conv_general_dilated(
        x, w, (1, 1), padding,
        dimension_numbers=("NCHW", "OIHW", "NCHW"),
        precision=jax.lax.Precision.HIGHEST)


def _conv_bf16(x, w, padding):
    # Same bf16-input / f32-accumulate precision as the kernel's MXU matmuls.
    return jax.lax.conv_general_dilated(
        x.astype(jnp.bfloat16), w.astype(jnp.bfloat16), (1, 1), padding,
        dimension_numbers=("NCHW", "OIHW", "NCHW"),
        preferred_element_type=jnp.float32)


def _bn_train(y, g, b, eps=1e-5):
    mean = jnp.mean(y, axis=(0, 2, 3), keepdims=True)
    var = jnp.mean((y - mean) ** 2, axis=(0, 2, 3), keepdims=True)
    return ((y - mean) * jax.lax.rsqrt(var + eps) * g.reshape(1, -1, 1, 1)
            + b.reshape(1, -1, 1, 1))


def _reference(conv, x, w1, w2, w3, ws, g1, b1, g2, b2, g3, b3):
    # Matches the PyTorch module: the conv1x1 projection shortcut has NO BN.
    y = jax.nn.relu(_bn_train(conv(x, w1, "VALID"), g1, b1))
    y = jax.nn.relu(_bn_train(conv(y, w2, ((1, 1), (1, 1))), g2, b2))
    y = _bn_train(conv(y, w3, "VALID"), g3, b3)
    y = y + conv(x, ws, "VALID")
    return jax.nn.relu(y)


# ---------------------------------- main ----------------------------------- #

if __name__ == "__main__":
    N, Cin, H, W = 2, 4, 16, 16
    C0, C1 = 8, 16          # output_channels = (8, 16)

    key = jax.random.PRNGKey(0)
    kx, k1, k2, k3, k4 = jax.random.split(key, 5)

    x = jax.random.normal(kx, (N, Cin, H, W), jnp.float32)

    # Deterministic synthetic parameters (PyTorch OIHW conv weight shapes).
    w1 = 0.3 * jax.random.normal(k1, (C0, Cin, 1, 1), jnp.float32)
    w2 = 0.2 * jax.random.normal(k2, (C0, C0, 3, 3), jnp.float32)
    w3 = 0.3 * jax.random.normal(k3, (C1, C0, 1, 1), jnp.float32)
    ws = 0.3 * jax.random.normal(k4, (C1, Cin, 1, 1), jnp.float32)
    g1, b1 = jnp.ones((C0,), jnp.float32), jnp.zeros((C0,), jnp.float32)
    g2, b2 = jnp.ones((C0,), jnp.float32), jnp.zeros((C0,), jnp.float32)
    g3, b3 = jnp.ones((C1,), jnp.float32), jnp.zeros((C1,), jnp.float32)

    args = (x, w1, w2, w3, ws, g1, b1, g2, b2, g3, b3)

    out = first_residual_block(*args)
    out = jax.block_until_ready(out)

    ref_matched = jax.block_until_ready(_reference(_conv_bf16, *args))
    ref_f32 = jax.block_until_ready(_reference(_conv_f32, *args))

    assert out.shape == (N, C1, H, W), out.shape

    # Strict check against a reference using the SAME bf16-input / f32-accum
    # conv precision as the kernel (isolates structural errors from the
    # intentional bf16-MXU precision change).
    err_matched = float(jnp.max(jnp.abs(out - ref_matched)))
    assert err_matched < 5e-3, "matched-precision max abs err = %e" % err_matched

    # Loose sanity check against the full-f32 reference (bf16 matmul inputs
    # contribute ~1e-2 absolute rounding at these value magnitudes).
    err_f32 = float(jnp.max(jnp.abs(out - ref_f32)))
    assert jnp.allclose(out, ref_f32, rtol=5e-2, atol=5e-2), (
        "f32-reference max abs err = %e" % err_f32)

    print("KERNEL_OK")
</pallas_src>

<mosaic_0001>
module attributes {stable_mosaic.version = 11 : i64} {
  func.func @resblock_kernel(%arg0: memref<512x4xbf16, #tpu.memory_space<vmem>>, %arg1: memref<4x24xbf16, #tpu.memory_space<vmem>>, %arg2: memref<72x8xbf16, #tpu.memory_space<vmem>>, %arg3: memref<8x16xbf16, #tpu.memory_space<vmem>>, %arg4: memref<1x8xf32, #tpu.memory_space<vmem>>, %arg5: memref<1x8xf32, #tpu.memory_space<vmem>>, %arg6: memref<1x8xf32, #tpu.memory_space<vmem>>, %arg7: memref<1x8xf32, #tpu.memory_space<vmem>>, %arg8: memref<1x16xf32, #tpu.memory_space<vmem>>, %arg9: memref<1x16xf32, #tpu.memory_space<vmem>>, %arg10: memref<512x16xf32, #tpu.memory_space<vmem>>, %arg11: memref<512x72xbf16, #tpu.memory_space<vmem>>) attributes {dimension_semantics = [], scalar_prefetch = 0 : i64, scratch_operands = 1 : i64, tpu.core_type = #tpu.core_type<tc>} {
    %c0 = arith.constant 0 : index
    %c0_0 = arith.constant 0 : index
    %0 = vector.load %arg0[%c0, %c0_0] : memref<512x4xbf16, #tpu.memory_space<vmem>>, vector<512x4xbf16>
    %c0_1 = arith.constant 0 : index
    %c0_2 = arith.constant 0 : index
    %1 = vector.load %arg1[%c0_1, %c0_2] : memref<4x24xbf16, #tpu.memory_space<vmem>>, vector<4x24xbf16>
    %cst = arith.constant dense<0.000000e+00> : vector<512x24xf32>
    %2 = tpu.matmul %0, %1, %cst {dimension_numbers = #tpu.dot_dimension_numbers<[1], [0], [0], [1], [0, 0, 1, 1], [], []>} : vector<512x4xbf16>, vector<4x24xbf16>, vector<512x24xf32> -> vector<512x24xf32>
    %3 = vector.extract_strided_slice %2 {offsets = [0, 0], sizes = [512, 16], strides = [1, 1]} : vector<512x24xf32> to vector<512x16xf32>
    %4 = vector.extract_strided_slice %2 {offsets = [0, 16], sizes = [512, 8], strides = [1, 1]} : vector<512x24xf32> to vector<512x8xf32>
    %cst_3 = arith.constant dense<0.000000e+00> : vector<8xf32>
    %5 = vector.multi_reduction <add>, %4, %cst_3 [0] : vector<512x8xf32> to vector<8xf32>
    %6 = vector.shape_cast %5 : vector<8xf32> to vector<1x8xf32>
    %cst_4 = arith.constant 5.120000e+02 : f32
    %7 = vector.broadcast %cst_4 : f32 to vector<1x8xf32>
    %8 = arith.divf %6, %7 : vector<1x8xf32>
    %9 = vector.broadcast %8 : vector<1x8xf32> to vector<512x8xf32>
    %10 = arith.subf %4, %9 : vector<512x8xf32>
    %11 = arith.mulf %10, %10 : vector<512x8xf32>
    %cst_5 = arith.constant dense<0.000000e+00> : vector<8xf32>
    %12 = vector.multi_reduction <add>, %11, %cst_5 [0] : vector<512x8xf32> to vector<8xf32>
    %13 = vector.shape_cast %12 : vector<8xf32> to vector<1x8xf32>
    %cst_6 = arith.constant 5.120000e+02 : f32
    %14 = vector.broadcast %cst_6 : f32 to vector<1x8xf32>
    %15 = arith.divf %13, %14 : vector<1x8xf32>
    %c0_7 = arith.constant 0 : index
    %c0_8 = arith.constant 0 : index
    %16 = vector.load %arg4[%c0_7, %c0_8] : memref<1x8xf32, #tpu.memory_space<vmem>>, vector<1x8xf32>
    %cst_9 = arith.constant 9.99999974E-6 : f32
    %17 = vector.broadcast %cst_9 : f32 to vector<1x8xf32>
    %18 = arith.addf %15, %17 : vector<1x8xf32>
    %19 = math.rsqrt %18 : vector<1x8xf32>
    %20 = arith.mulf %16, %19 : vector<1x8xf32>
    %21 = vector.broadcast %20 : vector<1x8xf32> to vector<512x8xf32>
    %22 = arith.mulf %10, %21 : vector<512x8xf32>
    %c0_10 = arith.constant 0 : index
    %c0_11 = arith.constant 0 : index
    %23 = vector.load %arg5[%c0_10, %c0_11] : memref<1x8xf32, #tpu.memory_space<vmem>>, vector<1x8xf32>
    %24 = vector.broadcast %23 : vector<1x8xf32> to vector<512x8xf32>
    %25 = arith.addf %22, %24 : vector<512x8xf32>
    %cst_12 = arith.constant 0.000000e+00 : f32
    %26 = vector.broadcast %cst_12 : f32 to vector<512x8xf32>
    %27 = arith.maximumf %25, %26 : vector<512x8xf32>
    %28 = tpu.iota {dimensions = array<i32: 1>} : vector<2x256x8xi32>
    %29 = vector.shape_cast %28 : vector<2x256x8xi32> to vector<512x8xi32>
    %30 = tpu.iota {dimensions = array<i32: 1>} : vector<32x16x8xi32>
    %31 = vector.shape_cast %30 : vector<32x16x8xi32> to vector<512x8xi32>
    %c16_i32 = arith.constant 16 : i32
    %32 = vector.broadcast %c16_i32 : i32 to vector<512x8xi32>
    %33 = arith.cmpi sge, %29, %32 : vector<512x8xi32>
    %c240_i32 = arith.constant 240 : i32
    %34 = vector.broadcast %c240_i32 : i32 to vector<512x8xi32>
    %35 = arith.cmpi slt, %29, %34 : vector<512x8xi32>
    %c1_i32 = arith.constant 1 : i32
    %36 = vector.broadcast %c1_i32 : i32 to vector<512x8xi32>
    %37 = arith.cmpi sge, %31, %36 : vector<512x8xi32>
    %c14_i32 = arith.constant 14 : i32
    %38 = vector.broadcast %c14_i32 : i32 to vector<512x8xi32>
    %39 = arith.cmpi sle, %31, %38 : vector<512x8xi32>
    %c17_i32 = arith.constant 17 : i32
    %40 = tpu.dynamic_rotate %27 by %c17_i32 dim 0 : vector<512x8xf32>, i32 -> vector<512x8xf32>
    %41 = arith.andi %33, %37 : vector<512x8xi1>
    %cst_13 = arith.constant 0.000000e+00 : f32
    %42 = vector.broadcast %cst_13 : f32 to vector<512x8xf32>
    %43 = arith.select %41, %40, %42 : vector<512x8xi1>, vector<512x8xf32>
    %44 = arith.truncf %43 : vector<512x8xf32> to vector<512x8xbf16>
    %c0_14 = arith.constant 0 : index
    %c0_15 = arith.constant 0 : index
    %45 = vector.load %arg11[%c0_14, %c0_15] : memref<512x72xbf16, #tpu.memory_space<vmem>>, vector<512x8xbf16>
    tpu.vector_store %arg11[%c0_14, %c0_15], %44 {strides = array<i32>} : memref<512x72xbf16, #tpu.memory_space<vmem>>, vector<512x8xbf16>,
    %c16_i32_16 = arith.constant 16 : i32
    %46 = tpu.dynamic_rotate %27 by %c16_i32_16 dim 0 : vector<512x8xf32>, i32 -> vector<512x8xf32>
    %cst_17 = arith.constant 0.000000e+00 : f32
    %47 = vector.broadcast %cst_17 : f32 to vector<512x8xf32>
    %48 = arith.select %33, %46, %47 : vector<512x8xi1>, vector<512x8xf32>
    %49 = arith.truncf %48 : vector<512x8xf32> to vector<512x8xbf16>
    %c0_18 = arith.constant 0 : index
    %c8 = arith.constant 8 : index
    %50 = vector.load %arg11[%c0_18, %c8] : memref<512x72xbf16, #tpu.memory_space<vmem>>, vector<512x8xbf16>
    tpu.vector_store %arg11[%c0_18, %c8], %49 {strides = array<i32>} : memref<512x72xbf16, #tpu.memory_space<vmem>>, vector<512x8xbf16>,
    %c15_i32 = arith.constant 15 : i32
    %51 = tpu.dynamic_rotate %27 by %c15_i32 dim 0 : vector<512x8xf32>, i32 -> vector<512x8xf32>
    %52 = arith.andi %33, %39 : vector<512x8xi1>
    %cst_19 = arith.constant 0.000000e+00 : f32
    %53 = vector.broadcast %cst_19 : f32 to vector<512x8xf32>
    %54 = arith.select %52, %51, %53 : vector<512x8xi1>, vector<512x8xf32>
    %55 = arith.truncf %54 : vector<512x8xf32> to vector<512x8xbf16>
    %c0_20 = arith.constant 0 : index
    %c16 = arith.constant 16 : index
    %56 = vector.load %arg11[%c0_20, %c16] : memref<512x72xbf16, #tpu.memory_space<vmem>>, vector<512x8xbf16>
    tpu.vector_store %arg11[%c0_20, %c16], %55 {strides = array<i32>} : memref<512x72xbf16, #tpu.memory_space<vmem>>, vector<512x8xbf16>,
    %c1_i32_21 = arith.constant 1 : i32
    %57 = tpu.dynamic_rotate %27 by %c1_i32_21 dim 0 : vector<512x8xf32>, i32 -> vector<512x8xf32>
    %cst_22 = arith.constant 0.000000e+00 : f32
    %58 = vector.broadcast %cst_22 : f32 to vector<512x8xf32>
    %59 = arith.select %37, %57, %58 : vector<512x8xi1>, vector<512x8xf32>
    %60 = arith.truncf %59 : vector<512x8xf32> to vector<512x8xbf16>
    %c0_23 = arith.constant 0 : index
    %c24 = arith.constant 24 : index
    %61 = vector.load %arg11[%c0_23, %c24] : memref<512x72xbf16, #tpu.memory_space<vmem>>, vector<512x8xbf16>
    tpu.vector_store %arg11[%c0_23, %c24], %60 {strides = array<i32>} : memref<512x72xbf16, #tpu.memory_space<vmem>>, vector<512x8xbf16>,
    %62 = arith.truncf %27 : vector<512x8xf32> to vector<512x8xbf16>
    %c0_24 = arith.constant 0 : index
    %c32 = arith.constant 32 : index
    %63 = vector.load %arg11[%c0_24, %c32] : memref<512x72xbf16, #tpu.memory_space<vmem>>, vector<512x8xbf16>
    tpu.vector_store %arg11[%c0_24, %c32], %62 {strides = array<i32>} : memref<512x72xbf16, #tpu.memory_space<vmem>>, vector<512x8xbf16>,
    %c511_i32 = arith.constant 511 : i32
    %64 = tpu.dynamic_rotate %27 by %c511_i32 dim 0 : vector<512x8xf32>, i32 -> vector<512x8xf32>
    %cst_25 = arith.constant 0.000000e+00 : f32
    %65 = vector.broadcast %cst_25 : f32 to vector<512x8xf32>
    %66 = arith.select %39, %64, %65 : vector<512x8xi1>, vector<512x8xf32>
    %67 = arith.truncf %66 : vector<512x8xf32> to vector<512x8xbf16>
    %c0_26 = arith.constant 0 : index
    %c40 = arith.constant 40 : index
    %68 = vector.load %arg11[%c0_26, %c40] : memref<512x72xbf16, #tpu.memory_space<vmem>>, vector<512x8xbf16>
    tpu.vector_store %arg11[%c0_26, %c40], %67 {strides = array<i32>} : memref<512x72xbf16, #tpu.memory_space<vmem>>, vector<512x8xbf16>,
    %c497_i32 = arith.constant 497 : i32
    %69 = tpu.dynamic_rotate %27 by %c497_i32 dim 0 : vector<512x8xf32>, i32 -> vector<512x8xf32>
    %70 = arith.andi %35, %37 : vector<512x8xi1>
    %cst_27 = arith.constant 0.000000e+00 : f32
    %71 = vector.broadcast %cst_27 : f32 to vector<512x8xf32>
    %72 = arith.select %70, %69, %71 : vector<512x8xi1>, vector<512x8xf32>
    %73 = arith.truncf %72 : vector<512x8xf32> to vector<512x8xbf16>
    %c0_28 = arith.constant 0 : index
    %c48 = arith.constant 48 : index
    %74 = vector.load %arg11[%c0_28, %c48] : memref<512x72xbf16, #tpu.memory_space<vmem>>, vector<512x8xbf16>
    tpu.vector_store %arg11[%c0_28, %c48], %73 {strides = array<i32>} : memref<512x72xbf16, #tpu.memory_space<vmem>>, vector<512x8xbf16>,
    %c496_i32 = arith.constant 496 : i32
    %75 = tpu.dynamic_rotate %27 by %c496_i32 dim 0 : vector<512x8xf32>, i32 -> vector<512x8xf32>
    %cst_29 = arith.constant 0.000000e+00 : f32
    %76 = vector.broadcast %cst_29 : f32 to vector<512x8xf32>
    %77 = arith.select %35, %75, %76 : vector<512x8xi1>, vector<512x8xf32>
    %78 = arith.truncf %77 : vector<512x8xf32> to vector<512x8xbf16>
    %c0_30 = arith.constant 0 : index
    %c56 = arith.constant 56 : index
    %79 = vector.load %arg11[%c0_30, %c56] : memref<512x72xbf16, #tpu.memory_space<vmem>>, vector<512x8xbf16>
    tpu.vector_store %arg11[%c0_30, %c56], %78 {strides = array<i32>} : memref<512x72xbf16, #tpu.memory_space<vmem>>, vector<512x8xbf16>,
    %c495_i32 = arith.constant 495 : i32
    %80 = tpu.dynamic_rotate %27 by %c495_i32 dim 0 : vector<512x8xf32>, i32 -> vector<512x8xf32>
    %81 = arith.andi %35, %39 : vector<512x8xi1>
    %cst_31 = arith.constant 0.000000e+00 : f32
    %82 = vector.broadcast %cst_31 : f32 to vector<512x8xf32>
    %83 = arith.select %81, %80, %82 : vector<512x8xi1>, vector<512x8xf32>
    %84 = arith.truncf %83 : vector<512x8xf32> to vector<512x8xbf16>
    %c0_32 = arith.constant 0 : index
    %c64 = arith.constant 64 : index
    %85 = vector.load %arg11[%c0_32, %c64] : memref<512x72xbf16, #tpu.memory_space<vmem>>, vector<512x8xbf16>
    tpu.vector_store %arg11[%c0_32, %c64], %84 {strides = array<i32>} : memref<512x72xbf16, #tpu.memory_space<vmem>>, vector<512x8xbf16>,
    %c0_33 = arith.constant 0 : index
    %c0_34 = arith.constant 0 : index
    %86 = vector.load %arg11[%c0_33, %c0_34] : memref<512x72xbf16, #tpu.memory_space<vmem>>, vector<512x72xbf16>
    %c0_35 = arith.constant 0 : index
    %c0_36 = arith.constant 0 : index
    %87 = vector.load %arg2[%c0_35, %c0_36] : memref<72x8xbf16, #tpu.memory_space<vmem>>, vector<72x8xbf16>
    %cst_37 = arith.constant dense<0.000000e+00> : vector<512x8xf32>
    %88 = tpu.matmul %86, %87, %cst_37 {dimension_numbers = #tpu.dot_dimension_numbers<[1], [0], [0], [1], [0, 0, 1, 1], [], []>} : vector<512x72xbf16>, vector<72x8xbf16>, vector<512x8xf32> -> vector<512x8xf32>
    %cst_38 = arith.constant dense<0.000000e+00> : vector<8xf32>
    %89 = vector.multi_reduction <add>, %88, %cst_38 [0] : vector<512x8xf32> to vector<8xf32>
    %90 = vector.shape_cast %89 : vector<8xf32> to vector<1x8xf32>
    %cst_39 = arith.constant 5.120000e+02 : f32
    %91 = vector.broadcast %cst_39 : f32 to vector<1x8xf32>
    %92 = arith.divf %90, %91 : vector<1x8xf32>
    %93 = vector.broadcast %92 : vector<1x8xf32> to vector<512x8xf32>
    %94 = arith.subf %88, %93 : vector<512x8xf32>
    %95 = arith.mulf %94, %94 : vector<512x8xf32>
    %cst_40 = arith.constant dense<0.000000e+00> : vector<8xf32>
    %96 = vector.multi_reduction <add>, %95, %cst_40 [0] : vector<512x8xf32> to vector<8xf32>
    %97 = vector.shape_cast %96 : vector<8xf32> to vector<1x8xf32>
    %cst_41 = arith.constant 5.120000e+02 : f32
    %98 = vector.broadcast %cst_41 : f32 to vector<1x8xf32>
    %99 = arith.divf %97, %98 : vector<1x8xf32>
    %c0_42 = arith.constant 0 : index
    %c0_43 = arith.constant 0 : index
    %100 = vector.load %arg6[%c0_42, %c0_43] : memref<1x8xf32, #tpu.memory_space<vmem>>, vector<1x8xf32>
    %cst_44 = arith.constant 9.99999974E-6 : f32
    %101 = vector.broadcast %cst_44 : f32 to vector<1x8xf32>
    %102 = arith.addf %99, %101 : vector<1x8xf32>
    %103 = math.rsqrt %102 : vector<1x8xf32>
    %104 = arith.mulf %100, %103 : vector<1x8xf32>
    %105 = vector.broadcast %104 : vector<1x8xf32> to vector<512x8xf32>
    %106 = arith.mulf %94, %105 : vector<512x8xf32>
    %c0_45 = arith.constant 0 : index
    %c0_46 = arith.constant 0 : index
    %107 = vector.load %arg7[%c0_45, %c0_46] : memref<1x8xf32, #tpu.memory_space<vmem>>, vector<1x8xf32>
    %108 = vector.broadcast %107 : vector<1x8xf32> to vector<512x8xf32>
    %109 = arith.addf %106, %108 : vector<512x8xf32>
    %cst_47 = arith.constant 0.000000e+00 : f32
    %110 = vector.broadcast %cst_47 : f32 to vector<512x8xf32>
    %111 = arith.maximumf %109, %110 : vector<512x8xf32>
    %112 = arith.truncf %111 : vector<512x8xf32> to vector<512x8xbf16>
    %c0_48 = arith.constant 0 : index
    %c0_49 = arith.constant 0 : index
    %113 = vector.load %arg3[%c0_48, %c0_49] : memref<8x16xbf16, #tpu.memory_space<vmem>>, vector<8x16xbf16>
    %cst_50 = arith.constant dense<0.000000e+00> : vector<512x16xf32>
    %114 = tpu.matmul %112, %113, %cst_50 {dimension_numbers = #tpu.dot_dimension_numbers<[1], [0], [0], [1], [0, 0, 1, 1], [], []>} : vector<512x8xbf16>, vector<8x16xbf16>, vector<512x16xf32> -> vector<512x16xf32>
    %cst_51 = arith.constant dense<0.000000e+00> : vector<16xf32>
    %115 = vector.multi_reduction <add>, %114, %cst_51 [0] : vector<512x16xf32> to vector<16xf32>
    %116 = vector.shape_cast %115 : vector<16xf32> to vector<1x16xf32>
    %cst_52 = arith.constant 5.120000e+02 : f32
    %117 = vector.broadcast %cst_52 : f32 to vector<1x16xf32>
    %118 = arith.divf %116, %117 : vector<1x16xf32>
    %119 = vector.broadcast %118 : vector<1x16xf32> to vector<512x16xf32>
    %120 = arith.subf %114, %119 : vector<512x16xf32>
    %121 = arith.mulf %120, %120 : vector<512x16xf32>
    %cst_53 = arith.constant dense<0.000000e+00> : vector<16xf32>
    %122 = vector.multi_reduction <add>, %121, %cst_53 [0] : vector<512x16xf32> to vector<16xf32>
    %123 = vector.shape_cast %122 : vector<16xf32> to vector<1x16xf32>
    %cst_54 = arith.constant 5.120000e+02 : f32
    %124 = vector.broadcast %cst_54 : f32 to vector<1x16xf32>
    %125 = arith.divf %123, %124 : vector<1x16xf32>
    %c0_55 = arith.constant 0 : index
    %c0_56 = arith.constant 0 : index
    %126 = vector.load %arg8[%c0_55, %c0_56] : memref<1x16xf32, #tpu.memory_space<vmem>>, vector<1x16xf32>
    %cst_57 = arith.constant 9.99999974E-6 : f32
    %127 = vector.broadcast %cst_57 : f32 to vector<1x16xf32>
    %128 = arith.addf %125, %127 : vector<1x16xf32>
    %129 = math.rsqrt %128 : vector<1x16xf32>
    %130 = arith.mulf %126, %129 : vector<1x16xf32>
    %131 = vector.broadcast %130 : vector<1x16xf32> to vector<512x16xf32>
    %132 = arith.mulf %120, %131 : vector<512x16xf32>
    %c0_58 = arith.constant 0 : index
    %c0_59 = arith.constant 0 : index
    %133 = vector.load %arg9[%c0_58, %c0_59] : memref<1x16xf32, #tpu.memory_space<vmem>>, vector<1x16xf32>
    %134 = vector.broadcast %133 : vector<1x16xf32> to vector<512x16xf32>
    %135 = arith.addf %132, %134 : vector<512x16xf32>
    %136 = arith.addf %135, %3 : vector<512x16xf32>
    %cst_60 = arith.constant 0.000000e+00 : f32
    %137 = vector.broadcast %cst_60 : f32 to vector<512x16xf32>
    %138 = arith.maximumf %136, %137 : vector<512x16xf32>
    %c0_61 = arith.constant 0 : index
    %c0_62 = arith.constant 0 : index
    %139 = vector.load %arg10[%c0_61, %c0_62] : memref<512x16xf32, #tpu.memory_space<vmem>>, vector<512x16xf32>
    tpu.vector_store %arg10[%c0_61, %c0_62], %138 {strides = array<i32>} : memref<512x16xf32, #tpu.memory_space<vmem>>, vector<512x16xf32>,
    return
  }
}

</mosaic_0001>

<llo_original>
// kernel: first_residual_block.1
$region0: #{first_residual_block.1}
  #allocation0 [shape = 'u32[]', space=smem, size = 0x4, offset = 0x4, fixed_abs, tag = 'smem constant byte address 0x4 - core index']
  #allocation1 [shape = 'u32[144,128]{1,0:T(1,128)}', space=vmem, size = 0x12000, scoped, tag = 'internal scratch']
  #allocation2 [shape = 'bf16[512,72]{1,0:T(16,128)(2,1)}', space=vmem, size = 0x20000, scoped, tag = 'scratch operand']
  %s0 = inlined_call_operand.vmem [shape: bf16[512,4], index: 0, kind: input, shape index: {}]
  %s1 = inlined_call_operand.vmem [shape: bf16[4,24], index: 1, kind: input, shape index: {}]
  %s2 = inlined_call_operand.vmem [shape: bf16[72,8], index: 2, kind: input, shape index: {}]
  %s3 = inlined_call_operand.vmem [shape: bf16[8,16], index: 3, kind: input, shape index: {}]
  %s4 = inlined_call_operand.vmem [shape: f32[1,8], index: 4, kind: input, shape index: {}]
  %s5 = inlined_call_operand.vmem [shape: f32[1,8], index: 5, kind: input, shape index: {}]
  %s6 = inlined_call_operand.vmem [shape: f32[1,8], index: 6, kind: input, shape index: {}]
  %s7 = inlined_call_operand.vmem [shape: f32[1,8], index: 7, kind: input, shape index: {}]
  %s8 = inlined_call_operand.vmem [shape: f32[1,16], index: 8, kind: input, shape index: {}]
  %s9 = inlined_call_operand.vmem [shape: f32[1,16], index: 9, kind: input, shape index: {}]
  %s10 = inlined_call_operand.vmem [shape: f32[512,16], index: 10, kind: output, shape index: {}]
  %s11 = sld [smem:[#allocation0]]
  $region50: #{first_residual_block.1} parent=0
    _
  %s13 = ssub.s32 1, %s11
  %s14 = scalar_select 0, %s13, %s11
  // Predicated region
  $region2: #{first_residual_block.1} parent=0 // pred_check
    _
  $region3: #{first_residual_block.1} parent=0 // pred_check_branch
    %16 = sbr.rel (0) target = $region5
  $region4: #{first_residual_block.1} parent=0 // pred_region
    _
  $region5: #{first_residual_block.1} parent=0 // pred_fallthru
    _
  // Predicated region
  $region6: #{first_residual_block.1} parent=0 // pred_check
    _
  $region7: #{first_residual_block.1} parent=0 // pred_check_branch
    %18 = sbr.rel (0) target = $region9
  $region8: #{first_residual_block.1} parent=0 // pred_region
    _
  $region9: #{first_residual_block.1} parent=0 // pred_fallthru
    _
  // Predicated region
  $region10: #{first_residual_block.1} parent=0 // pred_check
    _
  $region11: #{first_residual_block.1} parent=0 // pred_check_branch
    %20 = sbr.rel (0) target = $region13
  $region12: #{first_residual_block.1} parent=0 // pred_region
    _
  $region13: #{first_residual_block.1} parent=0 // pred_fallthru
    _
  // Predicated region
  $region14: #{first_residual_block.1} parent=0 // pred_check
    _
  $region15: #{first_residual_block.1} parent=0 // pred_check_branch
    %22 = sbr.rel (0) target = $region17
  $region16: #{first_residual_block.1} parent=0 // pred_region
    _
  $region17: #{first_residual_block.1} parent=0 // pred_fallthru
    _
  // Predicated region
  $region18: #{first_residual_block.1} parent=0 // pred_check
    _
  $region19: #{first_residual_block.1} parent=0 // pred_check_branch
    %24 = sbr.rel (0) target = $region21
  $region20: #{first_residual_block.1} parent=0 // pred_region
    _
  $region21: #{first_residual_block.1} parent=0 // pred_fallthru
    _
  // Predicated region
  $region22: #{first_residual_block.1} parent=0 // pred_check
    _
  $region23: #{first_residual_block.1} parent=0 // pred_check_branch
    %26 = sbr.rel (0) target = $region25
  $region24: #{first_residual_block.1} parent=0 // pred_region
    _
  $region25: #{first_residual_block.1} parent=0 // pred_fallthru
    _
  // Predicated region
  $region26: #{first_residual_block.1} parent=0 // pred_check
    _
  $region27: #{first_residual_block.1} parent=0 // pred_check_branch
    %28 = sbr.rel (0) target = $region29
  $region28: #{first_residual_block.1} parent=0 // pred_region
    _
  $region29: #{first_residual_block.1} parent=0 // pred_fallthru
    _
  // Predicated region
  $region30: #{first_residual_block.1} parent=0 // pred_check
    _
  $region31: #{first_residual_block.1} parent=0 // pred_check_branch
    %30 = sbr.rel (0) target = $region33
  $region32: #{first_residual_block.1} parent=0 // pred_region
    _
  $region33: #{first_residual_block.1} parent=0 // pred_fallthru
    _
  // Predicated region
  $region34: #{first_residual_block.1} parent=0 // pred_check
    _
  $region35: #{first_residual_block.1} parent=0 // pred_check_branch
    %32 = sbr.rel (0) target = $region37
  $region36: #{first_residual_block.1} parent=0 // pred_region
    _
  $region37: #{first_residual_block.1} parent=0 // pred_fallthru
    _
  // Predicated region
  $region38: #{first_residual_block.1} parent=0 // pred_check
    _
  $region39: #{first_residual_block.1} parent=0 // pred_check_branch
    %34 = sbr.rel (0) target = $region41
  $region40: #{first_residual_block.1} parent=0 // pred_region
    _
  $region41: #{first_residual_block.1} parent=0 // pred_fallthru
    _
  %v36 = vld [vmem:[%s0] sm:$0xf]
  %v37 = vld [vmem:[%s0 + $0x4] sm:$0xf]
  %v38 = vld [vmem:[%s0 + $0x8] sm:$0xf]
  %v39 = vld [vmem:[%s0 + $0xc] sm:$0xf]
  %v40 = vld [vmem:[%s0 + $0x10] sm:$0xf]
  %v41 = vld [vmem:[%s0 + $0x14] sm:$0xf]
  %v42 = vld [vmem:[%s0 + $0x18] sm:$0xf]
  %v43 = vld [vmem:[%s0 + $0x1c] sm:$0xf]
  %v44 = vld [vmem:[%s0 + $0x20] sm:$0xf]
  %v45 = vld [vmem:[%s0 + $0x24] sm:$0xf]
  %v46 = vld [vmem:[%s0 + $0x28] sm:$0xf]
  %v47 = vld [vmem:[%s0 + $0x2c] sm:$0xf]
  %v48 = vld [vmem:[%s0 + $0x30] sm:$0xf]
  %v49 = vld [vmem:[%s0 + $0x34] sm:$0xf]
  %v50 = vld [vmem:[%s0 + $0x38] sm:$0xf]
  %v51 = vld [vmem:[%s0 + $0x3c] sm:$0xf]
  %v52 = vld [vmem:[%s0 + $0x40] sm:$0xf]
  %v53 = vld [vmem:[%s0 + $0x44] sm:$0xf]
  %v54 = vld [vmem:[%s0 + $0x48] sm:$0xf]
  %v55 = vld [vmem:[%s0 + $0x4c] sm:$0xf]
  %v56 = vld [vmem:[%s0 + $0x50] sm:$0xf]
  %v57 = vld [vmem:[%s0 + $0x54] sm:$0xf]
  %v58 = vld [vmem:[%s0 + $0x58] sm:$0xf]
  %v59 = vld [vmem:[%s0 + $0x5c] sm:$0xf]
  %v60 = vld [vmem:[%s0 + $0x60] sm:$0xf]
  %v61 = vld [vmem:[%s0 + $0x64] sm:$0xf]
  %v62 = vld [vmem:[%s0 + $0x68] sm:$0xf]
  %v63 = vld [vmem:[%s0 + $0x6c] sm:$0xf]
  %v64 = vld [vmem:[%s0 + $0x70] sm:$0xf]
  %v65 = vld [vmem:[%s0 + $0x74] sm:$0xf]
  %v66 = vld [vmem:[%s0 + $0x78] sm:$0xf]
  %v67 = vld [vmem:[%s0 + $0x7c] sm:$0xf]
  %v68 = vld [vmem:[%s0 + $0x80] sm:$0xf]
  %v69 = vld [vmem:[%s0 + $0x84] sm:$0xf]
  %v70 = vld [vmem:[%s0 + $0x88] sm:$0xf]
  %v71 = vld [vmem:[%s0 + $0x8c] sm:$0xf]
  %v72 = vld [vmem:[%s0 + $0x90] sm:$0xf]
  %v73 = vld [vmem:[%s0 + $0x94] sm:$0xf]
  %v74 = vld [vmem:[%s0 + $0x98] sm:$0xf]
  %v75 = vld [vmem:[%s0 + $0x9c] sm:$0xf]
  %v76 = vld [vmem:[%s0 + $0xa0] sm:$0xf]
  %v77 = vld [vmem:[%s0 + $0xa4] sm:$0xf]
  %v78 = vld [vmem:[%s0 + $0xa8] sm:$0xf]
  %v79 = vld [vmem:[%s0 + $0xac] sm:$0xf]
  %v80 = vld [vmem:[%s0 + $0xb0] sm:$0xf]
  %v81 = vld [vmem:[%s0 + $0xb4] sm:$0xf]
  %v82 = vld [vmem:[%s0 + $0xb8] sm:$0xf]
  %v83 = vld [vmem:[%s0 + $0xbc] sm:$0xf]
  %v84 = vld [vmem:[%s0 + $0xc0] sm:$0xf]
  %v85 = vld [vmem:[%s0 + $0xc4] sm:$0xf]
  %v86 = vld [vmem:[%s0 + $0xc8] sm:$0xf]
  %v87 = vld [vmem:[%s0 + $0xcc] sm:$0xf]
  %v88 = vld [vmem:[%s0 + $0xd0] sm:$0xf]
  %v89 = vld [vmem:[%s0 + $0xd4] sm:$0xf]
  %v90 = vld [vmem:[%s0 + $0xd8] sm:$0xf]
  %v91 = vld [vmem:[%s0 + $0xdc] sm:$0xf]
  %v92 = vld [vmem:[%s0 + $0xe0] sm:$0xf]
  %v93 = vld [vmem:[%s0 + $0xe4] sm:$0xf]
  %v94 = vld [vmem:[%s0 + $0xe8] sm:$0xf]
  %v95 = vld [vmem:[%s0 + $0xec] sm:$0xf]
  %v96 = vld [vmem:[%s0 + $0xf0] sm:$0xf]
  %v97 = vld [vmem:[%s0 + $0xf4] sm:$0xf]
  %v98 = vld [vmem:[%s0 + $0xf8] sm:$0xf]
  %v99 = vld [vmem:[%s0 + $0xfc] sm:$0xf]
  %v100 = vld [vmem:[%s1] sm:$0x3]
  %v165 = vunpack.c.l.b16 %v36
  %v166 = vunpack.c.l.b16 %v37
  %v167 = vunpack.c.l.b16 %v38
  %v168 = vunpack.c.l.b16 %v39
  %v169 = vunpack.c.l.b16 %v40
  %v170 = vunpack.c.l.b16 %v41
  %v171 = vunpack.c.l.b16 %v42
  %v172 = vunpack.c.l.b16 %v43
  %v173 = vunpack.c.l.b16 %v44
  %v174 = vunpack.c.l.b16 %v45
  %v175 = vunpack.c.l.b16 %v46
  %v176 = vunpack.c.l.b16 %v47
  %v177 = vunpack.c.l.b16 %v48
  %v178 = vunpack.c.l.b16 %v49
  %v179 = vunpack.c.l.b16 %v50
  %v180 = vunpack.c.l.b16 %v51
  %v181 = vunpack.c.l.b16 %v52
  %v182 = vunpack.c.l.b16 %v53
  %v183 = vunpack.c.l.b16 %v54
  %v184 = vunpack.c.l.b16 %v55
  %v185 = vunpack.c.l.b16 %v56
  %v186 = vunpack.c.l.b16 %v57
  %v187 = vunpack.c.l.b16 %v58
  %v188 = vunpack.c.l.b16 %v59
  %v189 = vunpack.c.l.b16 %v60
  %v190 = vunpack.c.l.b16 %v61
  %v191 = vunpack.c.l.b16 %v62
  %v192 = vunpack.c.l.b16 %v63
  %v193 = vunpack.c.l.b16 %v64
  %v194 = vunpack.c.l.b16 %v65
  %v195 = vunpack.c.l.b16 %v66
  %v196 = vunpack.c.l.b16 %v67
  %v197 = vunpack.c.l.b16 %v68
  %v198 = vunpack.c.l.b16 %v69
  %v199 = vunpack.c.l.b16 %v70
  %v200 = vunpack.c.l.b16 %v71
  %v201 = vunpack.c.l.b16 %v72
  %v202 = vunpack.c.l.b16 %v73
  %v203 = vunpack.c.l.b16 %v74
  %v204 = vunpack.c.l.b16 %v75
  %v205 = vunpack.c.l.b16 %v76
  %v206 = vunpack.c.l.b16 %v77
  %v207 = vunpack.c.l.b16 %v78
  %v208 = vunpack.c.l.b16 %v79
  %v209 = vunpack.c.l.b16 %v80
  %v210 = vunpack.c.l.b16 %v81
  %v211 = vunpack.c.l.b16 %v82
  %v212 = vunpack.c.l.b16 %v83
  %v213 = vunpack.c.l.b16 %v84
  %v214 = vunpack.c.l.b16 %v85
  %v215 = vunpack.c.l.b16 %v86
  %v216 = vunpack.c.l.b16 %v87
  %v217 = vunpack.c.l.b16 %v88
  %v218 = vunpack.c.l.b16 %v89
  %v219 = vunpack.c.l.b16 %v90
  %v220 = vunpack.c.l.b16 %v91
  %v221 = vunpack.c.l.b16 %v92
  %v222 = vunpack.c.l.b16 %v93
  %v223 = vunpack.c.l.b16 %v94
  %v224 = vunpack.c.l.b16 %v95
  %v225 = vunpack.c.l.b16 %v96
  %v226 = vunpack.c.l.b16 %v97
  %v227 = vunpack.c.l.b16 %v98
  %v228 = vunpack.c.l.b16 %v99
  %v229 = vpack.c.b16 %v166, %v165
  %v230 = vpack.c.b16 %v168, %v167
  %v231 = vpack.c.b16 %v170, %v169
  %v232 = vpack.c.b16 %v172, %v171
  %v233 = vpack.c.b16 %v174, %v173
  %v234 = vpack.c.b16 %v176, %v175
  %v235 = vpack.c.b16 %v178, %v177
  %v236 = vpack.c.b16 %v180, %v179
  %v237 = vpack.c.b16 %v182, %v181
  %v238 = vpack.c.b16 %v184, %v183
  %v239 = vpack.c.b16 %v186, %v185
  %v240 = vpack.c.b16 %v188, %v187
  %v241 = vpack.c.b16 %v190, %v189
  %v242 = vpack.c.b16 %v192, %v191
  %v243 = vpack.c.b16 %v194, %v193
  %v244 = vpack.c.b16 %v196, %v195
  %v245 = vpack.c.b16 %v198, %v197
  %v246 = vpack.c.b16 %v200, %v199
  %v247 = vpack.c.b16 %v202, %v201
  %v248 = vpack.c.b16 %v204, %v203
  %v249 = vpack.c.b16 %v206, %v205
  %v250 = vpack.c.b16 %v208, %v207
  %v251 = vpack.c.b16 %v210, %v209
  %v252 = vpack.c.b16 %v212, %v211
  %v253 = vpack.c.b16 %v214, %v213
  %v254 = vpack.c.b16 %v216, %v215
  %v255 = vpack.c.b16 %v218, %v217
  %v256 = vpack.c.b16 %v220, %v219
  %v257 = vpack.c.b16 %v222, %v221
  %v258 = vpack.c.b16 %v224, %v223
  %v259 = vpack.c.b16 %v226, %v225
  %v260 = vpack.c.b16 %v228, %v227
  %vm261 = vcmask 31744
  %v263 = vsel %vm261, %v229, 0
  %v266 = vsel %vm261, %v230, 0
  %v269 = vsel %vm261, %v231, 0
  %v272 = vsel %vm261, %v232, 0
  %v275 = vsel %vm261, %v233, 0
  %v278 = vsel %vm261, %v234, 0
  %v281 = vsel %vm261, %v235, 0
  %v284 = vsel %vm261, %v236, 0
  %v287 = vsel %vm261, %v237, 0
  %v290 = vsel %vm261, %v238, 0
  %v293 = vsel %vm261, %v239, 0
  %v296 = vsel %vm261, %v240, 0
  %v299 = vsel %vm261, %v241, 0
  %v302 = vsel %vm261, %v242, 0
  %v305 = vsel %vm261, %v243, 0
  %v308 = vsel %vm261, %v244, 0
  %v311 = vsel %vm261, %v245, 0
  %v314 = vsel %vm261, %v246, 0
  %v317 = vsel %vm261, %v247, 0
  %v320 = vsel %vm261, %v248, 0
  %v323 = vsel %vm261, %v249, 0
  %v326 = vsel %vm261, %v250, 0
  %v329 = vsel %vm261, %v251, 0
  %v332 = vsel %vm261, %v252, 0
  %v335 = vsel %vm261, %v253, 0
  %v338 = vsel %vm261, %v254, 0
  %v341 = vsel %vm261, %v255, 0
  %v344 = vsel %vm261, %v256, 0
  %v347 = vsel %vm261, %v257, 0
  %v350 = vsel %vm261, %v258, 0
  %v353 = vsel %vm261, %v259, 0
  %v356 = vsel %vm261, %v260, 0
  %vm358 = vcmask 1041408
  %v360 = vsel %vm358, %v100, 0
  %362 = vmatprep.subr.bf16.mxu0 0
  %363 = vmatpush1.bf16.msra.mxu0 %v360
  %364 = vmatprep.subr.bf16.mxu0 0
  %365 = vmatpush1.bf16.msra.mxu0 0
  %366 = vmatprep.subr.bf16.mxu0 0
  %367 = vmatpush1.bf16.msra.mxu0 0
  %368 = vmatprep.subr.bf16.mxu0 0
  %369 = vmatpush1.bf16.msra.mxu0 0
  %370 = vmatprep.subr.bf16.mxu0 0
  %371 = vmatpush1.bf16.msra.mxu0 0
  %372 = vmatprep.subr.bf16.mxu0 0
  %373 = vmatpush1.bf16.msra.mxu0 0
  %374 = vmatprep.subr.bf16.mxu0 0
  %375 = vmatpush1.bf16.msra.mxu0 0
  %376 = vmatprep.subr.bf16.mxu0 0
  %377 = vmatpush1.bf16.msra.mxu0 0
  %378 = vmatprep.subr.bf16.mxu0 0
  %379 = vmatpush1.bf16.msra.mxu0 0
  %380 = vmatprep.subr.bf16.mxu0 0
  %381 = vmatpush1.bf16.msra.mxu0 0
  %382 = vmatprep.subr.bf16.mxu0 0
  %383 = vmatpush1.bf16.msra.mxu0 0
  %384 = vmatprep.subr.bf16.mxu0 0
  %385 = vmatpush1.bf16.msra.mxu0 0
  %386 = vmatprep.subr.bf16.mxu0 0
  %387 = vmatpush1.bf16.msra.mxu0 0
  %388 = vmatprep.subr.bf16.mxu0 0
  %389 = vmatpush1.bf16.msra.mxu0 0
  %390 = vmatprep.subr.bf16.mxu0 0
  %391 = vmatpush1.bf16.msra.mxu0 0
  %392 = vmatprep.subr.bf16.mxu0 0
  %393 = vmatpush1.bf16.msra.mxu0 0
  %394 = vmatprep.mubr.bf16.mxu0 0
  %395 = vmatmul.mubr.bf16.gmra.mrb[0].mxu0 %v263
  %v396 = vpop.f32.mrb[0].mxu0
  %v397 = vadd.f32 0.0, %v396
  %v398 = vpop.f32.mrb[0].mxu0
  %v399 = vpop.f32.mrb[0].mxu0
  %v400 = vadd.f32 0.0, %v399
  %v401 = vpop.f32.mrb[0].mxu0
  %402 = vmatprep.mubr.bf16.mxu0 0
  %403 = vmatmul.mubr.bf16.gmra.mrb[0].mxu0 %v266
  %v404 = vpop.f32.mrb[0].mxu0
  %v405 = vadd.f32 0.0, %v404
  %v406 = vpop.f32.mrb[0].mxu0
  %v407 = vpop.f32.mrb[0].mxu0
  %v408 = vadd.f32 0.0, %v407
  %v409 = vpop.f32.mrb[0].mxu0
  %410 = vmatprep.mubr.bf16.mxu0 0
  %411 = vmatmul.mubr.bf16.gmra.mrb[0].mxu0 %v269
  %v412 = vpop.f32.mrb[0].mxu0
  %v413 = vadd.f32 0.0, %v412
  %v414 = vpop.f32.mrb[0].mxu0
  %v415 = vpop.f32.mrb[0].mxu0
  %v416 = vadd.f32 0.0, %v415
  %v417 = vpop.f32.mrb[0].mxu0
  %418 = vmatprep.mubr.bf16.mxu0 0
  %419 = vmatmul.mubr.bf16.gmra.mrb[0].mxu0 %v272
  %v420 = vpop.f32.mrb[0].mxu0
  %v421 = vadd.f32 0.0, %v420
  %v422 = vpop.f32.mrb[0].mxu0
  %v423 = vpop.f32.mrb[0].mxu0
  %v424 = vadd.f32 0.0, %v423
  %v425 = vpop.f32.mrb[0].mxu0
  %426 = vmatprep.mubr.bf16.mxu0 0
  %427 = vmatmul.mubr.bf16.gmra.mrb[0].mxu0 %v275
  %v428 = vpop.f32.mrb[0].mxu0
  %v429 = vadd.f32 0.0, %v428
  %v430 = vpop.f32.mrb[0].mxu0
  %v431 = vpop.f32.mrb[0].mxu0
  %v432 = vadd.f32 0.0, %v431
  %v433 = vpop.f32.mrb[0].mxu0
  %434 = vmatprep.mubr.bf16.mxu0 0
  %435 = vmatmul.mubr.bf16.gmra.mrb[0].mxu0 %v278
  %v436 = vpop.f32.mrb[0].mxu0
  %v437 = vadd.f32 0.0, %v436
  %v438 = vpop.f32.mrb[0].mxu0
  %v439 = vpop.f32.mrb[0].mxu0
  %v440 = vadd.f32 0.0, %v439
  %v441 = vpop.f32.mrb[0].mxu0
  %442 = vmatprep.mubr.bf16.mxu0 0
  %443 = vmatmul.mubr.bf16.gmra.mrb[0].mxu0 %v281
  %v444 = vpop.f32.mrb[0].mxu0
  %v445 = vadd.f32 0.0, %v444
  %v446 = vpop.f32.mrb[0].mxu0
  %v447 = vpop.f32.mrb[0].mxu0
  %v448 = vadd.f32 0.0, %v447
  %v449 = vpop.f32.mrb[0].mxu0
  %450 = vmatprep.mubr.bf16.mxu0 0
  %451 = vmatmul.mubr.bf16.gmra.mrb[0].mxu0 %v284
  %v452 = vpop.f32.mrb[0].mxu0
  %v453 = vadd.f32 0.0, %v452
  %v454 = vpop.f32.mrb[0].mxu0
  %v455 = vpop.f32.mrb[0].mxu0
  %v456 = vadd.f32 0.0, %v455
  %v457 = vpop.f32.mrb[0].mxu0
  %458 = vmatprep.mubr.bf16.mxu0 0
  %459 = vmatmul.mubr.bf16.gmra.mrb[0].mxu0 %v287
  %v460 = vpop.f32.mrb[0].mxu0
  %v461 = vadd.f32 0.0, %v460
  %v462 = vpop.f32.mrb[0].mxu0
  %v463 = vpop.f32.mrb[0].mxu0
  %v464 = vadd.f32 0.0, %v463
  %v465 = vpop.f32.mrb[0].mxu0
  %466 = vmatprep.mubr.bf16.mxu0 0
  %467 = vmatmul.mubr.bf16.gmra.mrb[0].mxu0 %v290
  %v468 = vpop.f32.mrb[0].mxu0
  %v469 = vadd.f32 0.0, %v468
  %v470 = vpop.f32.mrb[0].mxu0
  %v471 = vpop.f32.mrb[0].mxu0
  %v472 = vadd.f32 0.0, %v471
  %v473 = vpop.f32.mrb[0].mxu0
  %474 = vmatprep.mubr.bf16.mxu0 0
  %475 = vmatmul.mubr.bf16.gmra.mrb[0].mxu0 %v293
  %v476 = vpop.f32.mrb[0].mxu0
  %v477 = vadd.f32 0.0, %v476
  %v478 = vpop.f32.mrb[0].mxu0
  %v479 = vpop.f32.mrb[0].mxu0
  %v480 = vadd.f32 0.0, %v479
  %v481 = vpop.f32.mrb[0].mxu0
  %482 = vmatprep.mubr.bf16.mxu0 0
  %483 = vmatmul.mubr.bf16.gmra.mrb[0].mxu0 %v296
  %v484 = vpop.f32.mrb[0].mxu0
  %v485 = vadd.f32 0.0, %v484
  %v486 = vpop.f32.mrb[0].mxu0
  %v487 = vpop.f32.mrb[0].mxu0
  %v488 = vadd.f32 0.0, %v487
  %v489 = vpop.f32.mrb[0].mxu0
  %490 = vmatprep.mubr.bf16.mxu0 0
  %491 = vmatmul.mubr.bf16.gmra.mrb[0].mxu0 %v299
  %v492 = vpop.f32.mrb[0].mxu0
  %v493 = vadd.f32 0.0, %v492
  %v494 = vpop.f32.mrb[0].mxu0
  %v495 = vpop.f32.mrb[0].mxu0
  %v496 = vadd.f32 0.0, %v495
  %v497 = vpop.f32.mrb[0].mxu0
  %498 = vmatprep.mubr.bf16.mxu0 0
  %499 = vmatmul.mubr.bf16.gmra.mrb[0].mxu0 %v302
  %v500 = vpop.f32.mrb[0].mxu0
  %v501 = vadd.f32 0.0, %v500
  %v502 = vpop.f32.mrb[0].mxu0
  %v503 = vpop.f32.mrb[0].mxu0
  %v504 = vadd.f32 0.0, %v503
  %v505 = vpop.f32.mrb[0].mxu0
  %506 = vmatprep.mubr.bf16.mxu0 0
  %507 = vmatmul.mubr.bf16.gmra.mrb[0].mxu0 %v305
  %v508 = vpop.f32.mrb[0].mxu0
  %v509 = vadd.f32 0.0, %v508
  %v510 = vpop.f32.mrb[0].mxu0
  %v511 = vpop.f32.mrb[0].mxu0
  %v512 = vadd.f32 0.0, %v511
  %v513 = vpop.f32.mrb[0].mxu0
  %514 = vmatprep.mubr.bf16.mxu0 0
  %515 = vmatmul.mubr.bf16.gmra.mrb[0].mxu0 %v308
  %v516 = vpop.f32.mrb[0].mxu0
  %v517 = vadd.f32 0.0, %v516
  %v518 = vpop.f32.mrb[0].mxu0
  %v519 = vpop.f32.mrb[0].mxu0
  %v520 = vadd.f32 0.0, %v519
  %v521 = vpop.f32.mrb[0].mxu0
  %522 = vmatprep.mubr.bf16.mxu0 0
  %523 = vmatmul.mubr.bf16.gmra.mrb[0].mxu0 %v311
  %v524 = vpop.f32.mrb[0].mxu0
  %v525 = vadd.f32 0.0, %v524
  %v526 = vpop.f32.mrb[0].mxu0
  %v527 = vpop.f32.mrb[0].mxu0
  %v528 = vadd.f32 0.0, %v527
  %v529 = vpop.f32.mrb[0].mxu0
  %530 = vmatprep.mubr.bf16.mxu0 0
  %531 = vmatmul.mubr.bf16.gmra.mrb[0].mxu0 %v314
  %v532 = vpop.f32.mrb[0].mxu0
  %v533 = vadd.f32 0.0, %v532
  %v534 = vpop.f32.mrb[0].mxu0
  %v535 = vpop.f32.mrb[0].mxu0
  %v536 = vadd.f32 0.0, %v535
  %v537 = vpop.f32.mrb[0].mxu0
  %538 = vmatprep.mubr.bf16.mxu0 0
  %539 = vmatmul.mubr.bf16.gmra.mrb[0].mxu0 %v317
  %v540 = vpop.f32.mrb[0].mxu0
  %v541 = vadd.f32 0.0, %v540
  %v542 = vpop.f32.mrb[0].mxu0
  %v543 = vpop.f32.mrb[0].mxu0
  %v544 = vadd.f32 0.0, %v543
  %v545 = vpop.f32.mrb[0].mxu0
  %546 = vmatprep.mubr.bf16.mxu0 0
  %547 = vmatmul.mubr.bf16.gmra.mrb[0].mxu0 %v320
  %v548 = vpop.f32.mrb[0].mxu0
  %v549 = vadd.f32 0.0, %v548
  %v550 = vpop.f32.mrb[0].mxu0
  %v551 = vpop.f32.mrb[0].mxu0
  %v552 = vadd.f32 0.0, %v551
  %v553 = vpop.f32.mrb[0].mxu0
  %554 = vmatprep.mubr.bf16.mxu0 0
  %555 = vmatmul.mubr.bf16.gmra.mrb[0].mxu0 %v323
  %v556 = vpop.f32.mrb[0].mxu0
  %v557 = vadd.f32 0.0, %v556
  %v558 = vpop.f32.mrb[0].mxu0
  %v559 = vpop.f32.mrb[0].mxu0
  %v560 = vadd.f32 0.0, %v559
  %v561 = vpop.f32.mrb[0].mxu0
  %562 = vmatprep.mubr.bf16.mxu0 0
  %563 = vmatmul.mubr.bf16.gmra.mrb[0].mxu0 %v326
  %v564 = vpop.f32.mrb[0].mxu0
  %v565 = vadd.f32 0.0, %v564
  %v566 = vpop.f32.mrb[0].mxu0
  %v567 = vpop.f32.mrb[0].mxu0
  %v568 = vadd.f32 0.0, %v567
  %v569 = vpop.f32.mrb[0].mxu0
  %570 = vmatprep.mubr.bf16.mxu0 0
  %571 = vmatmul.mubr.bf16.gmra.mrb[0].mxu0 %v329
  %v572 = vpop.f32.mrb[0].mxu0
  %v573 = vadd.f32 0.0, %v572
  %v574 = vpop.f32.mrb[0].mxu0
  %v575 = vpop.f32.mrb[0].mxu0
  %v576 = vadd.f32 0.0, %v575
  %v577 = vpop.f32.mrb[0].mxu0
  %578 = vmatprep.mubr.bf16.mxu0 0
  %579 = vmatmul.mubr.bf16.gmra.mrb[0].mxu0 %v332
  %v580 = vpop.f32.mrb[0].mxu0
  %v581 = vadd.f32 0.0, %v580
  %v582 = vpop.f32.mrb[0].mxu0
  %v583 = vpop.f32.mrb[0].mxu0
  %v584 = vadd.f32 0.0, %v583
  %v585 = vpop.f32.mrb[0].mxu0
  %586 = vmatprep.mubr.bf16.mxu0 0
  %587 = vmatmul.mubr.bf16.gmra.mrb[0].mxu0 %v335
  %v588 = vpop.f32.mrb[0].mxu0
  %v589 = vadd.f32 0.0, %v588
  %v590 = vpop.f32.mrb[0].mxu0
  %v591 = vpop.f32.mrb[0].mxu0
  %v592 = vadd.f32 0.0, %v591
  %v593 = vpop.f32.mrb[0].mxu0
  %594 = vmatprep.mubr.bf16.mxu0 0
  %595 = vmatmul.mubr.bf16.gmra.mrb[0].mxu0 %v338
  %v596 = vpop.f32.mrb[0].mxu0
  %v597 = vadd.f32 0.0, %v596
  %v598 = vpop.f32.mrb[0].mxu0
  %v599 = vpop.f32.mrb[0].mxu0
  %v600 = vadd.f32 0.0, %v599
  %v601 = vpop.f32.mrb[0].mxu0
  %602 = vmatprep.mubr.bf16.mxu0 0
  %603 = vmatmul.mubr.bf16.gmra.mrb[0].mxu0 %v341
  %v604 = vpop.f32.mrb[0].mxu0
  %v605 = vadd.f32 0.0, %v604
  %v606 = vpop.f32.mrb[0].mxu0
  %v607 = vpop.f32.mrb[0].mxu0
  %v608 = vadd.f32 0.0, %v607
  %v609 = vpop.f32.mrb[0].mxu0
  %610 = vmatprep.mubr.bf16.mxu0 0
  %611 = vmatmul.mubr.bf16.gmra.mrb[0].mxu0 %v344
  %v612 = vpop.f32.mrb[0].mxu0
  %v613 = vadd.f32 0.0, %v612
  %v614 = vpop.f32.mrb[0].mxu0
  %v615 = vpop.f32.mrb[0].mxu0
  %v616 = vadd.f32 0.0, %v615
  %v617 = vpop.f32.mrb[0].mxu0
  %618 = vmatprep.mubr.bf16.mxu0 0
  %619 = vmatmul.mubr.bf16.gmra.mrb[0].mxu0 %v347
  %v620 = vpop.f32.mrb[0].mxu0
  %v621 = vadd.f32 0.0, %v620
  %v622 = vpop.f32.mrb[0].mxu0
  %v623 = vpop.f32.mrb[0].mxu0
  %v624 = vadd.f32 0.0, %v623
  %v625 = vpop.f32.mrb[0].mxu0
  %626 = vmatprep.mubr.bf16.mxu0 0
  %627 = vmatmul.mubr.bf16.gmra.mrb[0].mxu0 %v350
  %v628 = vpop.f32.mrb[0].mxu0
  %v629 = vadd.f32 0.0, %v628
  %v630 = vpop.f32.mrb[0].mxu0
  %v631 = vpop.f32.mrb[0].mxu0
  %v632 = vadd.f32 0.0, %v631
  %v633 = vpop.f32.mrb[0].mxu0
  %634 = vmatprep.mubr.bf16.mxu0 0
  %635 = vmatmul.mubr.bf16.gmra.mrb[0].mxu0 %v353
  %v636 = vpop.f32.mrb[0].mxu0
  %v637 = vadd.f32 0.0, %v636
  %v638 = vpop.f32.mrb[0].mxu0
  %v639 = vpop.f32.mrb[0].mxu0
  %v640 = vadd.f32 0.0, %v639
  %v641 = vpop.f32.mrb[0].mxu0
  %642 = vmatprep.mubr.bf16.mxu0 0
  %643 = vmatmul.mubr.bf16.gmra.mrb[0].mxu0 %v356
  %v644 = vpop.f32.mrb[0].mxu0
  %v645 = vadd.f32 0.0, %v644
  %v646 = vpop.f32.mrb[0].mxu0
  %v647 = vpop.f32.mrb[0].mxu0
  %v648 = vadd.f32 0.0, %v647
  %v649 = vpop.f32.mrb[0].mxu0
  %650 = vdwg.mxu0
  %vm651 = vcmask 195712
  %v652 = vsel %vm651, %v397, 0.0
  %v653 = vsel %vm651, %v400, 0.0
  %v654 = vadd.f32 %v652, %v653
  %v655 = vsel %vm651, %v405, 0.0
  %v656 = vadd.f32 %v654, %v655
  %v657 = vsel %vm651, %v408, 0.0
  %v658 = vadd.f32 %v656, %v657
  %v659 = vsel %vm651, %v413, 0.0
  %v660 = vadd.f32 %v658, %v659
  %v661 = vsel %vm651, %v416, 0.0
  %v662 = vadd.f32 %v660, %v661
  %v663 = vsel %vm651, %v421, 0.0
  %v664 = vadd.f32 %v662, %v663
  %v665 = vsel %vm651, %v424, 0.0
  %v666 = vadd.f32 %v664, %v665
  %v667 = vsel %vm651, %v429, 0.0
  %v668 = vadd.f32 %v666, %v667
  %v669 = vsel %vm651, %v432, 0.0
  %v670 = vadd.f32 %v668, %v669
  %v671 = vsel %vm651, %v437, 0.0
  %v672 = vadd.f32 %v670, %v671
  %v673 = vsel %vm651, %v440, 0.0
  %v674 = vadd.f32 %v672, %v673
  %v675 = vsel %vm651, %v445, 0.0
  %v676 = vadd.f32 %v674, %v675
  %v677 = vsel %vm651, %v448, 0.0
  %v678 = vadd.f32 %v676, %v677
  %v679 = vsel %vm651, %v453, 0.0
  %v680 = vadd.f32 %v678, %v679
  %v681 = vsel %vm651, %v456, 0.0
  %v682 = vadd.f32 %v680, %v681
  %v683 = vsel %vm651, %v461, 0.0
  %v684 = vadd.f32 %v682, %v683
  %v685 = vsel %vm651, %v464, 0.0
  %v686 = vadd.f32 %v684, %v685
  %v687 = vsel %vm651, %v469, 0.0
  %v688 = vadd.f32 %v686, %v687
  %v689 = vsel %vm651, %v472, 0.0
  %v690 = vadd.f32 %v688, %v689
  %v691 = vsel %vm651, %v477, 0.0
  %v692 = vadd.f32 %v690, %v691
  %v693 = vsel %vm651, %v480, 0.0
  %v694 = vadd.f32 %v692, %v693
  %v695 = vsel %vm651, %v485, 0.0
  %v696 = vadd.f32 %v694, %v695
  %v697 = vsel %vm651, %v488, 0.0
  %v698 = vadd.f32 %v696, %v697
  %v699 = vsel %vm651, %v493, 0.0
  %v700 = vadd.f32 %v698, %v699
  %v701 = vsel %vm651, %v496, 0.0
  %v702 = vadd.f32 %v700, %v701
  %v703 = vsel %vm651, %v501, 0.0
  %v704 = vadd.f32 %v702, %v703
  %v705 = vsel %vm651, %v504, 0.0
  %v706 = vadd.f32 %v704, %v705
  %v707 = vsel %vm651, %v509, 0.0
  %v708 = vadd.f32 %v706, %v707
  %v709 = vsel %vm651, %v512, 0.0
  %v710 = vadd.f32 %v708, %v709
  %v711 = vsel %vm651, %v517, 0.0
  %v712 = vadd.f32 %v710, %v711
  %v713 = vsel %vm651, %v520, 0.0
  %v714 = vadd.f32 %v712, %v713
  %v715 = vsel %vm651, %v525, 0.0
  %v716 = vadd.f32 %v714, %v715
  %v717 = vsel %vm651, %v528, 0.0
  %v718 = vadd.f32 %v716, %v717
  %v719 = vsel %vm651, %v533, 0.0
  %v720 = vadd.f32 %v718, %v719
  %v721 = vsel %vm651, %v536, 0.0
  %v722 = vadd.f32 %v720, %v721
  %v723 = vsel %vm651, %v541, 0.0
  %v724 = vadd.f32 %v722, %v723
  %v725 = vsel %vm651, %v544, 0.0
  %v726 = vadd.f32 %v724, %v725
  %v727 = vsel %vm651, %v549, 0.0
  %v728 = vadd.f32 %v726, %v727
  %v729 = vsel %vm651, %v552, 0.0
  %v730 = vadd.f32 %v728, %v729
  %v731 = vsel %vm651, %v557, 0.0
  %v732 = vadd.f32 %v730, %v731
  %v733 = vsel %vm651, %v560, 0.0
  %v734 = vadd.f32 %v732, %v733
  %v735 = vsel %vm651, %v565, 0.0
  %v736 = vadd.f32 %v734, %v735
  %v737 = vsel %vm651, %v568, 0.0
  %v738 = vadd.f32 %v736, %v737
  %v739 = vsel %vm651, %v573, 0.0
  %v740 = vadd.f32 %v738, %v739
  %v741 = vsel %vm651, %v576, 0.0
  %v742 = vadd.f32 %v740, %v741
  %v743 = vsel %vm651, %v581, 0.0
  %v744 = vadd.f32 %v742, %v743
  %v745 = vsel %vm651, %v584, 0.0
  %v746 = vadd.f32 %v744, %v745
  %v747 = vsel %vm651, %v589, 0.0
  %v748 = vadd.f32 %v746, %v747
  %v749 = vsel %vm651, %v592, 0.0
  %v750 = vadd.f32 %v748, %v749
  %v751 = vsel %vm651, %v597, 0.0
  %v752 = vadd.f32 %v750, %v751
  %v753 = vsel %vm651, %v600, 0.0
  %v754 = vadd.f32 %v752, %v753
  %v755 = vsel %vm651, %v605, 0.0
  %v756 = vadd.f32 %v754, %v755
  %v757 = vsel %vm651, %v608, 0.0
  %v758 = vadd.f32 %v756, %v757
  %v759 = vsel %vm651, %v613, 0.0
  %v760 = vadd.f32 %v758, %v759
  %v761 = vsel %vm651, %v616, 0.0
  %v762 = vadd.f32 %v760, %v761
  %v763 = vsel %vm651, %v621, 0.0
  %v764 = vadd.f32 %v762, %v763
  %v765 = vsel %vm651, %v624, 0.0
  %v766 = vadd.f32 %v764, %v765
  %v767 = vsel %vm651, %v629, 0.0
  %v768 = vadd.f32 %v766, %v767
  %v769 = vsel %vm651, %v632, 0.0
  %v770 = vadd.f32 %v768, %v769
  %v771 = vsel %vm651, %v637, 0.0
  %v772 = vadd.f32 %v770, %v771
  %v773 = vsel %vm651, %v640, 0.0
  %v774 = vadd.f32 %v772, %v773
  %v775 = vsel %vm651, %v645, 0.0
  %v776 = vadd.f32 %v774, %v775
  %v777 = vsel %vm651, %v648, 0.0
  %v778 = vadd.f32 %v776, %v777
  %v779 = vrot.slane %v778, 4
  %v780 = vadd.f32 %v778, %v779
  %v781 = vrot.slane %v780, 2
  %v782 = vadd.f32 %v780, %v781
  %v783 = vrot.slane %v782, 1
  %v784 = vadd.f32 %v782, %v783
  %v785 = vrcp.pop 512.0
  %v786 = vmul.f32 %v784, %v785
  %v787 = vsub.f32 %v397, %v786
  %v788 = vsub.f32 %v400, %v786
  %v789 = vsub.f32 %v405, %v786
  %v790 = vsub.f32 %v408, %v786
  %v791 = vsub.f32 %v413, %v786
  %v792 = vsub.f32 %v416, %v786
  %v793 = vsub.f32 %v421, %v786
  %v794 = vsub.f32 %v424, %v786
  %v795 = vsub.f32 %v429, %v786
  %v796 = vsub.f32 %v432, %v786
  %v797 = vsub.f32 %v437, %v786
  %v798 = vsub.f32 %v440, %v786
  %v799 = vsub.f32 %v445, %v786
  %v800 = vsub.f32 %v448, %v786
  %v801 = vsub.f32 %v453, %v786
  %v802 = vsub.f32 %v456, %v786
  %v803 = vsub.f32 %v461, %v786
  %v804 = vsub.f32 %v464, %v786
  %v805 = vsub.f32 %v469, %v786
  %v806 = vsub.f32 %v472, %v786
  %v807 = vsub.f32 %v477, %v786
  %v808 = vsub.f32 %v480, %v786
  %v809 = vsub.f32 %v485, %v786
  %v810 = vsub.f32 %v488, %v786
  %v811 = vsub.f32 %v493, %v786
  %v812 = vsub.f32 %v496, %v786
  %v813 = vsub.f32 %v501, %v786
  %v814 = vsub.f32 %v504, %v786
  %v815 = vsub.f32 %v509, %v786
  %v816 = vsub.f32 %v512, %v786
  %v817 = vsub.f32 %v517, %v786
  %v818 = vsub.f32 %v520, %v786
  %v819 = vsub.f32 %v525, %v786
  %v820 = vsub.f32 %v528, %v786
  %v821 = vsub.f32 %v533, %v786
  %v822 = vsub.f32 %v536, %v786
  %v823 = vsub.f32 %v541, %v786
  %v824 = vsub.f32 %v544, %v786
  %v825 = vsub.f32 %v549, %v786
  %v826 = vsub.f32 %v552, %v786
  %v827 = vsub.f32 %v557, %v786
  %v828 = vsub.f32 %v560, %v786
  %v829 = vsub.f32 %v565, %v786
  %v830 = vsub.f32 %v568, %v786
  %v831 = vsub.f32 %v573, %v786
  %v832 = vsub.f32 %v576, %v786
  %v833 = vsub.f32 %v581, %v786
  %v834 = vsub.f32 %v584, %v786
  %v835 = vsub.f32 %v589, %v786
  %v836 = vsub.f32 %v592, %v786
  %v837 = vsub.f32 %v597, %v786
  %v838 = vsub.f32 %v600, %v786
  %v839 = vsub.f32 %v605, %v786
  %v840 = vsub.f32 %v608, %v786
  %v841 = vsub.f32 %v613, %v786
  %v842 = vsub.f32 %v616, %v786
  %v843 = vsub.f32 %v621, %v786
  %v844 = vsub.f32 %v624, %v786
  %v845 = vsub.f32 %v629, %v786
  %v846 = vsub.f32 %v632, %v786
  %v847 = vsub.f32 %v637, %v786
  %v848 = vsub.f32 %v640, %v786
  %v849 = vsub.f32 %v645, %v786
  %v850 = vsub.f32 %v648, %v786
  %v851 = vmul.f32 %v787, %v787
  %v852 = vmul.f32 %v788, %v788
  %v853 = vmul.f32 %v789, %v789
  %v854 = vmul.f32 %v790, %v790
  %v855 = vmul.f32 %v791, %v791
  %v856 = vmul.f32 %v792, %v792
  %v857 = vmul.f32 %v793, %v793
  %v858 = vmul.f32 %v794, %v794
  %v859 = vmul.f32 %v795, %v795
  %v860 = vmul.f32 %v796, %v796
  %v861 = vmul.f32 %v797, %v797
  %v862 = vmul.f32 %v798, %v798
  %v863 = vmul.f32 %v799, %v799
  %v864 = vmul.f32 %v800, %v800
  %v865 = vmul.f32 %v801, %v801
  %v866 = vmul.f32 %v802, %v802
  %v867 = vmul.f32 %v803, %v803
  %v868 = vmul.f32 %v804, %v804
  %v869 = vmul.f32 %v805, %v805
  %v870 = vmul.f32 %v806, %v806
  %v871 = vmul.f32 %v807, %v807
  %v872 = vmul.f32 %v808, %v808
  %v873 = vmul.f32 %v809, %v809
  %v874 = vmul.f32 %v810, %v810
  %v875 = vmul.f32 %v811, %v811
  %v876 = vmul.f32 %v812, %v812
  %v877 = vmul.f32 %v813, %v813
  %v878 = vmul.f32 %v814, %v814
  %v879 = vmul.f32 %v815, %v815
  %v880 = vmul.f32 %v816, %v816
  %v881 = vmul.f32 %v817, %v817
  %v882 = vmul.f32 %v818, %v818
  %v883 = vmul.f32 %v819, %v819
  %v884 = vmul.f32 %v820, %v820
  %v885 = vmul.f32 %v821, %v821
  %v886 = vmul.f32 %v822, %v822
  %v887 = vmul.f32 %v823, %v823
  %v888 = vmul.f32 %v824, %v824
  %v889 = vmul.f32 %v825, %v825
  %v890 = vmul.f32 %v826, %v826
  %v891 = vmul.f32 %v827, %v827
  %v892 = vmul.f32 %v828, %v828
  %v893 = vmul.f32 %v829, %v829
  %v894 = vmul.f32 %v830, %v830
  %v895 = vmul.f32 %v831, %v831
  %v896 = vmul.f32 %v832, %v832
  %v897 = vmul.f32 %v833, %v833
  %v898 = vmul.f32 %v834, %v834
  %v899 = vmul.f32 %v835, %v835
  %v900 = vmul.f32 %v836, %v836
  %v901 = vmul.f32 %v837, %v837
  %v902 = vmul.f32 %v838, %v838
  %v903 = vmul.f32 %v839, %v839
  %v904 = vmul.f32 %v840, %v840
  %v905 = vmul.f32 %v841, %v841
  %v906 = vmul.f32 %v842, %v842
  %v907 = vmul.f32 %v843, %v843
  %v908 = vmul.f32 %v844, %v844
  %v909 = vmul.f32 %v845, %v845
  %v910 = vmul.f32 %v846, %v846
  %v911 = vmul.f32 %v847, %v847
  %v912 = vmul.f32 %v848, %v848
  %v913 = vmul.f32 %v849, %v849
  %v914 = vmul.f32 %v850, %v850
  %v915 = vsel %vm651, %v851, 0.0
  %v916 = vsel %vm651, %v852, 0.0
  %v917 = vadd.f32 %v915, %v916
  %v918 = vsel %vm651, %v853, 0.0
  %v919 = vadd.f32 %v917, %v918
  %v920 = vsel %vm651, %v854, 0.0
  %v921 = vadd.f32 %v919, %v920
  %v922 = vsel %vm651, %v855, 0.0
  %v923 = vadd.f32 %v921, %v922
  %v924 = vsel %vm651, %v856, 0.0
  %v925 = vadd.f32 %v923, %v924
  %v926 = vsel %vm651, %v857, 0.0
  %v927 = vadd.f32 %v925, %v926
  %v928 = vsel %vm651, %v858, 0.0
  %v929 = vadd.f32 %v927, %v928
  %v930 = vsel %vm651, %v859, 0.0
  %v931 = vadd.f32 %v929, %v930
  %v932 = vsel %vm651, %v860, 0.0
  %v933 = vadd.f32 %v931, %v932
  %v934 = vsel %vm651, %v861, 0.0
  %v935 = vadd.f32 %v933, %v934
  %v936 = vsel %vm651, %v862, 0.0
  %v937 = vadd.f32 %v935, %v936
  %v938 = vsel %vm651, %v863, 0.0
  %v939 = vadd.f32 %v937, %v938
  %v940 = vsel %vm651, %v864, 0.0
  %v941 = vadd.f32 %v939, %v940
  %v942 = vsel %vm651, %v865, 0.0
  %v943 = vadd.f32 %v941, %v942
  %v944 = vsel %vm651, %v866, 0.0
  %v945 = vadd.f32 %v943, %v944
  %v946 = vsel %vm651, %v867, 0.0
  %v947 = vadd.f32 %v945, %v946
  %v948 = vsel %vm651, %v868, 0.0
  %v949 = vadd.f32 %v947, %v948
  %v950 = vsel %vm651, %v869, 0.0
  %v951 = vadd.f32 %v949, %v950
  %v952 = vsel %vm651, %v870, 0.0
  %v953 = vadd.f32 %v951, %v952
  %v954 = vsel %vm651, %v871, 0.0
  %v955 = vadd.f32 %v953, %v954
  %v956 = vsel %vm651, %v872, 0.0
  %v957 = vadd.f32 %v955, %v956
  %v958 = vsel %vm651, %v873, 0.0
  %v959 = vadd.f32 %v957, %v958
  %v960 = vsel %vm651, %v874, 0.0
  %v961 = vadd.f32 %v959, %v960
  %v962 = vsel %vm651, %v875, 0.0
  %v963 = vadd.f32 %v961, %v962
  %v964 = vsel %vm651, %v876, 0.0
  %v965 = vadd.f32 %v963, %v964
  %v966 = vsel %vm651, %v877, 0.0
  %v967 = vadd.f32 %v965, %v966
  %v968 = vsel %vm651, %v878, 0.0
  %v969 = vadd.f32 %v967, %v968
  %v970 = vsel %vm651, %v879, 0.0
  %v971 = vadd.f32 %v969, %v970
  %v972 = vsel %vm651, %v880, 0.0
  %v973 = vadd.f32 %v971, %v972
  %v974 = vsel %vm651, %v881, 0.0
  %v975 = vadd.f32 %v973, %v974
  %v976 = vsel %vm651, %v882, 0.0
  %v977 = vadd.f32 %v975, %v976
  %v978 = vsel %vm651, %v883, 0.0
  %v979 = vadd.f32 %v977, %v978
  %v980 = vsel %vm651, %v884, 0.0
  %v981 = vadd.f32 %v979, %v980
  %v982 = vsel %vm651, %v885, 0.0
  %v983 = vadd.f32 %v981, %v982
  %v984 = vsel %vm651, %v886, 0.0
  %v985 = vadd.f32 %v983, %v984
  %v986 = vsel %vm651, %v887, 0.0
  %v987 = vadd.f32 %v985, %v986
  %v988 = vsel %vm651, %v888, 0.0
  %v989 = vadd.f32 %v987, %v988
  %v990 = vsel %vm651, %v889, 0.0
  %v991 = vadd.f32 %v989, %v990
  %v992 = vsel %vm651, %v890, 0.0
  %v993 = vadd.f32 %v991, %v992
  %v994 = vsel %vm651, %v891, 0.0
  %v995 = vadd.f32 %v993, %v994
  %v996 = vsel %vm651, %v892, 0.0
  %v997 = vadd.f32 %v995, %v996
  %v998 = vsel %vm651, %v893, 0.0
  %v999 = vadd.f32 %v997, %v998
  %v1000 = vsel %vm651, %v894, 0.0
  %v1001 = vadd.f32 %v999, %v1000
  %v1002 = vsel %vm651, %v895, 0.0
  %v1003 = vadd.f32 %v1001, %v1002
  %v1004 = vsel %vm651, %v896, 0.0
  %v1005 = vadd.f32 %v1003, %v1004
  %v1006 = vsel %vm651, %v897, 0.0
  %v1007 = vadd.f32 %v1005, %v1006
  %v1008 = vsel %vm651, %v898, 0.0
  %v1009 = vadd.f32 %v1007, %v1008
  %v1010 = vsel %vm651, %v899, 0.0
  %v1011 = vadd.f32 %v1009, %v1010
  %v1012 = vsel %vm651, %v900, 0.0
  %v1013 = vadd.f32 %v1011, %v1012
  %v1014 = vsel %vm651, %v901, 0.0
  %v1015 = vadd.f32 %v1013, %v1014
  %v1016 = vsel %vm651, %v902, 0.0
  %v1017 = vadd.f32 %v1015, %v1016
  %v1018 = vsel %vm651, %v903, 0.0
  %v1019 = vadd.f32 %v1017, %v1018
  %v1020 = vsel %vm651, %v904, 0.0
  %v1021 = vadd.f32 %v1019, %v1020
  %v1022 = vsel %vm651, %v905, 0.0
  %v1023 = vadd.f32 %v1021, %v1022
  %v1024 = vsel %vm651, %v906, 0.0
  %v1025 = vadd.f32 %v1023, %v1024
  %v1026 = vsel %vm651, %v907, 0.0
  %v1027 = vadd.f32 %v1025, %v1026
  %v1028 = vsel %vm651, %v908, 0.0
  %v1029 = vadd.f32 %v1027, %v1028
  %v1030 = vsel %vm651, %v909, 0.0
  %v1031 = vadd.f32 %v1029, %v1030
  %v1032 = vsel %vm651, %v910, 0.0
  %v1033 = vadd.f32 %v1031, %v1032
  %v1034 = vsel %vm651, %v911, 0.0
  %v1035 = vadd.f32 %v1033, %v1034
  %v1036 = vsel %vm651, %v912, 0.0
  %v1037 = vadd.f32 %v1035, %v1036
  %v1038 = vsel %vm651, %v913, 0.0
  %v1039 = vadd.f32 %v1037, %v1038
  %v1040 = vsel %vm651, %v914, 0.0
  %v1041 = vadd.f32 %v1039, %v1040
  %v1042 = vrot.slane %v1041, 4
  %v1043 = vadd.f32 %v1041, %v1042
  %v1044 = vrot.slane %v1043, 2
  %v1045 = vadd.f32 %v1043, %v1044
  %v1046 = vrot.slane %v1045, 1
  %v1047 = vadd.f32 %v1045, %v1046
  %v1048 = vmul.f32 %v1047, %v785
  %v1049 = vld [vmem:[%s4] sm:$0x1]
  %v1050 = vadd.f32 %v1048, 1e-05
  %v1051 = vrsqrt.pop %v1050
  %v1054 = vunpack.c.l.s4 1966171168
  %v1055 = vunpack.c.0.s8 %v1054
  %v1056 = vlaneseq
  %v1057 = vshrl.u32 %v1056, 7
  %v1058 = vsub.s32 %v1055, %v1057
  %v1059 = vrot.slane %v1051, %v1058
  %v1061 = vunpack.c.l.s4 1966171168
  %v1062 = vunpack.c.0.s8 %v1061
  %v1063 = vlaneseq
  %v1064 = vshrl.u32 %v1063, 7
  %v1065 = vsub.s32 %v1062, %v1064
  %v1066 = vrot.slane %v1059, %v1065
  %1067 = vrot.lane.b32.xlu0 %v1066, 112
  %v1068 = vpop.permute.xlu0 %1067
  %v1070 = vmul.f32 %v1049, %v1068
  %v1072 = vlaneseq
  %v1073 = vshrl.u32 %v1072, 7
  %v1074 = vsub.s32 0, %v1073
  %v1075 = vrot.slane %v1070, %v1074
  %1076 = vrot.lane.b32.xlu0 %v1075, 16
  %v1077 = vpop.permute.xlu0 %1076
  %v1079 = vmul.f32 %v787, %v1077
  %v1080 = vmul.f32 %v788, %v1077
  %v1081 = vmul.f32 %v789, %v1077
  %v1082 = vmul.f32 %v790, %v1077
  %v1083 = vmul.f32 %v791, %v1077
  %v1084 = vmul.f32 %v792, %v1077
  %v1085 = vmul.f32 %v793, %v1077
  %v1086 = vmul.f32 %v794, %v1077
  %v1087 = vmul.f32 %v795, %v1077
  %v1088 = vmul.f32 %v796, %v1077
  %v1089 = vmul.f32 %v797, %v1077
  %v1090 = vmul.f32 %v798, %v1077
  %v1091 = vmul.f32 %v799, %v1077
  %v1092 = vmul.f32 %v800, %v1077
  %v1093 = vmul.f32 %v801, %v1077
  %v1094 = vmul.f32 %v802, %v1077
  %v1095 = vmul.f32 %v803, %v1077
  %v1096 = vmul.f32 %v804, %v1077
  %v1097 = vmul.f32 %v805, %v1077
  %v1098 = vmul.f32 %v806, %v1077
  %v1099 = vmul.f32 %v807, %v1077
  %v1100 = vmul.f32 %v808, %v1077
  %v1101 = vmul.f32 %v809, %v1077
  %v1102 = vmul.f32 %v810, %v1077
  %v1103 = vmul.f32 %v811, %v1077
  %v1104 = vmul.f32 %v812, %v1077
  %v1105 = vmul.f32 %v813, %v1077
  %v1106 = vmul.f32 %v814, %v1077
  %v1107 = vmul.f32 %v815, %v1077
  %v1108 = vmul.f32 %v816, %v1077
  %v1109 = vmul.f32 %v817, %v1077
  %v1110 = vmul.f32 %v818, %v1077
  %v1111 = vmul.f32 %v819, %v1077
  %v1112 = vmul.f32 %v820, %v1077
  %v1113 = vmul.f32 %v821, %v1077
  %v1114 = vmul.f32 %v822, %v1077
  %v1115 = vmul.f32 %v823, %v1077
  %v1116 = vmul.f32 %v824, %v1077
  %v1117 = vmul.f32 %v825, %v1077
  %v1118 = vmul.f32 %v826, %v1077
  %v1119 = vmul.f32 %v827, %v1077
  %v1120 = vmul.f32 %v828, %v1077
  %v1121 = vmul.f32 %v829, %v1077
  %v1122 = vmul.f32 %v830, %v1077
  %v1123 = vmul.f32 %v831, %v1077
  %v1124 = vmul.f32 %v832, %v1077
  %v1125 = vmul.f32 %v833, %v1077
  %v1126 = vmul.f32 %v834, %v1077
  %v1127 = vmul.f32 %v835, %v1077
  %v1128 = vmul.f32 %v836, %v1077
  %v1129 = vmul.f32 %v837, %v1077
  %v1130 = vmul.f32 %v838, %v1077
  %v1131 = vmul.f32 %v839, %v1077
  %v1132 = vmul.f32 %v840, %v1077
  %v1133 = vmul.f32 %v841, %v1077
  %v1134 = vmul.f32 %v842, %v1077
  %v1135 = vmul.f32 %v843, %v1077
  %v1136 = vmul.f32 %v844, %v1077
  %v1137 = vmul.f32 %v845, %v1077
  %v1138 = vmul.f32 %v846, %v1077
  %v1139 = vmul.f32 %v847, %v1077
  %v1140 = vmul.f32 %v848, %v1077
  %v1141 = vmul.f32 %v849, %v1077
  %v1142 = vmul.f32 %v850, %v1077
  %v1143 = vld [vmem:[%s5] sm:$0x1]
  %v1145 = vlaneseq
  %v1146 = vshrl.u32 %v1145, 7
  %v1147 = vsub.s32 0, %v1146
  %v1148 = vrot.slane %v1143, %v1147
  %1149 = vrot.lane.b32.xlu0 %v1148, 16
  %v1150 = vpop.permute.xlu0 %1149
  %v1152 = vadd.f32 %v1079, %v1150
  %v1153 = vadd.f32 %v1080, %v1150
  %v1154 = vadd.f32 %v1081, %v1150
  %v1155 = vadd.f32 %v1082, %v1150
  %v1156 = vadd.f32 %v1083, %v1150
  %v1157 = vadd.f32 %v1084, %v1150
  %v1158 = vadd.f32 %v1085, %v1150
  %v1159 = vadd.f32 %v1086, %v1150
  %v1160 = vadd.f32 %v1087, %v1150
  %v1161 = vadd.f32 %v1088, %v1150
  %v1162 = vadd.f32 %v1089, %v1150
  %v1163 = vadd.f32 %v1090, %v1150
  %v1164 = vadd.f32 %v1091, %v1150
  %v1165 = vadd.f32 %v1092, %v1150
  %v1166 = vadd.f32 %v1093, %v1150
  %v1167 = vadd.f32 %v1094, %v1150
  %v1168 = vadd.f32 %v1095, %v1150
  %v1169 = vadd.f32 %v1096, %v1150
  %v1170 = vadd.f32 %v1097, %v1150
  %v1171 = vadd.f32 %v1098, %v1150
  %v1172 = vadd.f32 %v1099, %v1150
  %v1173 = vadd.f32 %v1100, %v1150
  %v1174 = vadd.f32 %v1101, %v1150
  %v1175 = vadd.f32 %v1102, %v1150
  %v1176 = vadd.f32 %v1103, %v1150
  %v1177 = vadd.f32 %v1104, %v1150
  %v1178 = vadd.f32 %v1105, %v1150
  %v1179 = vadd.f32 %v1106, %v1150
  %v1180 = vadd.f32 %v1107, %v1150
  %v1181 = vadd.f32 %v1108, %v1150
  %v1182 = vadd.f32 %v1109, %v1150
  %v1183 = vadd.f32 %v1110, %v1150
  %v1184 = vadd.f32 %v1111, %v1150
  %v1185 = vadd.f32 %v1112, %v1150
  %v1186 = vadd.f32 %v1113, %v1150
  %v1187 = vadd.f32 %v1114, %v1150
  %v1188 = vadd.f32 %v1115, %v1150
  %v1189 = vadd.f32 %v1116, %v1150
  %v1190 = vadd.f32 %v1117, %v1150
  %v1191 = vadd.f32 %v1118, %v1150
  %v1192 = vadd.f32 %v1119, %v1150
  %v1193 = vadd.f32 %v1120, %v1150
  %v1194 = vadd.f32 %v1121, %v1150
  %v1195 = vadd.f32 %v1122, %v1150
  %v1196 = vadd.f32 %v1123, %v1150
  %v1197 = vadd.f32 %v1124, %v1150
  %v1198 = vadd.f32 %v1125, %v1150
  %v1199 = vadd.f32 %v1126, %v1150
  %v1200 = vadd.f32 %v1127, %v1150
  %v1201 = vadd.f32 %v1128, %v1150
  %v1202 = vadd.f32 %v1129, %v1150
  %v1203 = vadd.f32 %v1130, %v1150
  %v1204 = vadd.f32 %v1131, %v1150
  %v1205 = vadd.f32 %v1132, %v1150
  %v1206 = vadd.f32 %v1133, %v1150
  %v1207 = vadd.f32 %v1134, %v1150
  %v1208 = vadd.f32 %v1135, %v1150
  %v1209 = vadd.f32 %v1136, %v1150
  %v1210 = vadd.f32 %v1137, %v1150
  %v1211 = vadd.f32 %v1138, %v1150
  %v1212 = vadd.f32 %v1139, %v1150
  %v1213 = vadd.f32 %v1140, %v1150
  %v1214 = vadd.f32 %v1141, %v1150
  %v1215 = vadd.f32 %v1142, %v1150
  %v1216 = vmax.f32 %v1152, 0.0
  %v1217 = vmax.f32 %v1153, 0.0
  %v1218 = vmax.f32 %v1154, 0.0
  %v1219 = vmax.f32 %v1155, 0.0
  %v1220 = vmax.f32 %v1156, 0.0
  %v1221 = vmax.f32 %v1157, 0.0
  %v1222 = vmax.f32 %v1158, 0.0
  %v1223 = vmax.f32 %v1159, 0.0
  %v1224 = vmax.f32 %v1160, 0.0
  %v1225 = vmax.f32 %v1161, 0.0
  %v1226 = vmax.f32 %v1162, 0.0
  %v1227 = vmax.f32 %v1163, 0.0
  %v1228 = vmax.f32 %v1164, 0.0
  %v1229 = vmax.f32 %v1165, 0.0
  %v1230 = vmax.f32 %v1166, 0.0
  %v1231 = vmax.f32 %v1167, 0.0
  %v1232 = vmax.f32 %v1168, 0.0
  %v1233 = vmax.f32 %v1169, 0.0
  %v1234 = vmax.f32 %v1170, 0.0
  %v1235 = vmax.f32 %v1171, 0.0
  %v1236 = vmax.f32 %v1172, 0.0
  %v1237 = vmax.f32 %v1173, 0.0
  %v1238 = vmax.f32 %v1174, 0.0
  %v1239 = vmax.f32 %v1175, 0.0
  %v1240 = vmax.f32 %v1176, 0.0
  %v1241 = vmax.f32 %v1177, 0.0
  %v1242 = vmax.f32 %v1178, 0.0
  %v1243 = vmax.f32 %v1179, 0.0
  %v1244 = vmax.f32 %v1180, 0.0
  %v1245 = vmax.f32 %v1181, 0.0
  %v1246 = vmax.f32 %v1182, 0.0
  %v1247 = vmax.f32 %v1183, 0.0
  %v1248 = vmax.f32 %v1184, 0.0
  %v1249 = vmax.f32 %v1185, 0.0
  %v1250 = vmax.f32 %v1186, 0.0
  %v1251 = vmax.f32 %v1187, 0.0
  %v1252 = vmax.f32 %v1188, 0.0
  %v1253 = vmax.f32 %v1189, 0.0
  %v1254 = vmax.f32 %v1190, 0.0
  %v1255 = vmax.f32 %v1191, 0.0
  %v1256 = vmax.f32 %v1192, 0.0
  %v1257 = vmax.f32 %v1193, 0.0
  %v1258 = vmax.f32 %v1194, 0.0
  %v1259 = vmax.f32 %v1195, 0.0
  %v1260 = vmax.f32 %v1196, 0.0
  %v1261 = vmax.f32 %v1197, 0.0
  %v1262 = vmax.f32 %v1198, 0.0
  %v1263 = vmax.f32 %v1199, 0.0
  %v1264 = vmax.f32 %v1200, 0.0
  %v1265 = vmax.f32 %v1201, 0.0
  %v1266 = vmax.f32 %v1202, 0.0
  %v1267 = vmax.f32 %v1203, 0.0
  %v1268 = vmax.f32 %v1204, 0.0
  %v1269 = vmax.f32 %v1205, 0.0
  %v1270 = vmax.f32 %v1206, 0.0
  %v1271 = vmax.f32 %v1207, 0.0
  %v1272 = vmax.f32 %v1208, 0.0
  %v1273 = vmax.f32 %v1209, 0.0
  %v1274 = vmax.f32 %v1210, 0.0
  %v1275 = vmax.f32 %v1211, 0.0
  %v1276 = vmax.f32 %v1212, 0.0
  %v1277 = vmax.f32 %v1213, 0.0
  %v1278 = vmax.f32 %v1214, 0.0
  %v1279 = vmax.f32 %v1215, 0.0
  %v1280 = vlaneseq
  %v1281 = vshrl.u32 %v1280, 7
  %v1282 = vadd.s32 %v1281, 8
  %v1283 = vadd.s32 %v1281, 16
  %v1284 = vadd.s32 %v1281, 24
  %v1285 = vadd.s32 %v1281, 32
  %v1286 = vadd.s32 %v1281, 40
  %v1287 = vadd.s32 %v1281, 48
  %v1288 = vadd.s32 %v1281, 56
  %v1289 = vadd.s32 %v1281, 64
  %v1290 = vadd.s32 %v1281, 72
  %v1291 = vadd.s32 %v1281, 80
  %v1292 = vadd.s32 %v1281, 88
  %v1293 = vadd.s32 %v1281, 96
  %v1294 = vadd.s32 %v1281, 104
  %v1295 = vadd.s32 %v1281, 112
  %v1296 = vadd.s32 %v1281, 120
  %v1297 = vadd.s32 %v1281, 128
  %v1298 = vadd.s32 %v1281, 136
  %v1299 = vadd.s32 %v1281, 144
  %v1300 = vadd.s32 %v1281, 152
  %v1301 = vadd.s32 %v1281, 160
  %v1302 = vadd.s32 %v1281, 168
  %v1303 = vadd.s32 %v1281, 176
  %v1304 = vadd.s32 %v1281, 184
  %v1305 = vadd.s32 %v1281, 192
  %v1306 = vadd.s32 %v1281, 200
  %v1307 = vadd.s32 %v1281, 208
  %v1308 = vadd.s32 %v1281, 216
  %v1309 = vadd.s32 %v1281, 224
  %v1310 = vadd.s32 %v1281, 232
  %v1311 = vadd.s32 %v1281, 240
  %v1312 = vadd.s32 %v1281, 248
  %vm1313 = vcmp.ge.s32.totalorder %v1281, 16
  %vm1314 = vcmp.ge.s32.totalorder %v1282, 16
  %vm1315 = vcmp.ge.s32.totalorder %v1283, 16
  %vm1316 = vcmp.ge.s32.totalorder %v1284, 16
  %vm1317 = vcmp.ge.s32.totalorder %v1285, 16
  %vm1318 = vcmp.ge.s32.totalorder %v1286, 16
  %vm1319 = vcmp.ge.s32.totalorder %v1287, 16
  %vm1320 = vcmp.ge.s32.totalorder %v1288, 16
  %vm1321 = vcmp.ge.s32.totalorder %v1289, 16
  %vm1322 = vcmp.ge.s32.totalorder %v1290, 16
  %vm1323 = vcmp.ge.s32.totalorder %v1291, 16
  %vm1324 = vcmp.ge.s32.totalorder %v1292, 16
  %vm1325 = vcmp.ge.s32.totalorder %v1293, 16
  %vm1326 = vcmp.ge.s32.totalorder %v1294, 16
  %vm1327 = vcmp.ge.s32.totalorder %v1295, 16
  %vm1328 = vcmp.ge.s32.totalorder %v1296, 16
  %vm1329 = vcmp.ge.s32.totalorder %v1297, 16
  %vm1330 = vcmp.ge.s32.totalorder %v1298, 16
  %vm1331 = vcmp.ge.s32.totalorder %v1299, 16
  %vm1332 = vcmp.ge.s32.totalorder %v1300, 16
  %vm1333 = vcmp.ge.s32.totalorder %v1301, 16
  %vm1334 = vcmp.ge.s32.totalorder %v1302, 16
  %vm1335 = vcmp.ge.s32.totalorder %v1303, 16
  %vm1336 = vcmp.ge.s32.totalorder %v1304, 16
  %vm1337 = vcmp.ge.s32.totalorder %v1305, 16
  %vm1338 = vcmp.ge.s32.totalorder %v1306, 16
  %vm1339 = vcmp.ge.s32.totalorder %v1307, 16
  %vm1340 = vcmp.ge.s32.totalorder %v1308, 16
  %vm1341 = vcmp.ge.s32.totalorder %v1309, 16
  %vm1342 = vcmp.ge.s32.totalorder %v1310, 16
  %vm1343 = vcmp.ge.s32.totalorder %v1311, 16
  %vm1344 = vcmp.ge.s32.totalorder %v1312, 16
  %vm1345 = vcmp.lt.s32.totalorder %v1281, 240
  %vm1346 = vcmp.lt.s32.totalorder %v1282, 240
  %vm1347 = vcmp.lt.s32.totalorder %v1283, 240
  %vm1348 = vcmp.lt.s32.totalorder %v1284, 240
  %vm1349 = vcmp.lt.s32.totalorder %v1285, 240
  %vm1350 = vcmp.lt.s32.totalorder %v1286, 240
  %vm1351 = vcmp.lt.s32.totalorder %v1287, 240
  %vm1352 = vcmp.lt.s32.totalorder %v1288, 240
  %vm1353 = vcmp.lt.s32.totalorder %v1289, 240
  %vm1354 = vcmp.lt.s32.totalorder %v1290, 240
  %vm1355 = vcmp.lt.s32.totalorder %v1291, 240
  %vm1356 = vcmp.lt.s32.totalorder %v1292, 240
  %vm1357 = vcmp.lt.s32.totalorder %v1293, 240
  %vm1358 = vcmp.lt.s32.totalorder %v1294, 240
  %vm1359 = vcmp.lt.s32.totalorder %v1295, 240
  %vm1360 = vcmp.lt.s32.totalorder %v1296, 240
  %vm1361 = vcmp.lt.s32.totalorder %v1297, 240
  %vm1362 = vcmp.lt.s32.totalorder %v1298, 240
  %vm1363 = vcmp.lt.s32.totalorder %v1299, 240
  %vm1364 = vcmp.lt.s32.totalorder %v1300, 240
  %vm1365 = vcmp.lt.s32.totalorder %v1301, 240
  %vm1366 = vcmp.lt.s32.totalorder %v1302, 240
  %vm1367 = vcmp.lt.s32.totalorder %v1303, 240
  %vm1368 = vcmp.lt.s32.totalorder %v1304, 240
  %vm1369 = vcmp.lt.s32.totalorder %v1305, 240
  %vm1370 = vcmp.lt.s32.totalorder %v1306, 240
  %vm1371 = vcmp.lt.s32.totalorder %v1307, 240
  %vm1372 = vcmp.lt.s32.totalorder %v1308, 240
  %vm1373 = vcmp.lt.s32.totalorder %v1309, 240
  %vm1374 = vcmp.lt.s32.totalorder %v1310, 240
  %vm1375 = vcmp.lt.s32.totalorder %v1311, 240
  %vm1376 = vcmp.lt.s32.totalorder %v1312, 240
  %vm1377 = vcmp.ge.s32.totalorder %v1281, 1
  %vm1378 = vcmp.ge.s32.totalorder %v1282, 1
  %vm1379 = vcmp.le.s32.totalorder %v1281, 14
  %vm1380 = vcmp.le.s32.totalorder %v1282, 14
  %1445 = vrot.lane.b32.xlu0 %v1216, 112
  %v1446 = vpop.permute.xlu0 %1445
  %1447 = vrot.lane.b32.xlu0 %v1217, 112
  %v1448 = vpop.permute.xlu0 %1447
  %1449 = vrot.lane.b32.xlu0 %v1218, 112
  %v1450 = vpop.permute.xlu0 %1449
  %1451 = vrot.lane.b32.xlu0 %v1219, 112
  %v1452 = vpop.permute.xlu0 %1451
  %1453 = vrot.lane.b32.xlu0 %v1220, 112
  %v1454 = vpop.permute.xlu0 %1453
  %1455 = vrot.lane.b32.xlu0 %v1221, 112
  %v1456 = vpop.permute.xlu0 %1455
  %1457 = vrot.lane.b32.xlu0 %v1222, 112
  %v1458 = vpop.permute.xlu0 %1457
  %1459 = vrot.lane.b32.xlu0 %v1223, 112
  %v1460 = vpop.permute.xlu0 %1459
  %1461 = vrot.lane.b32.xlu0 %v1224, 112
  %v1462 = vpop.permute.xlu0 %1461
  %1463 = vrot.lane.b32.xlu0 %v1225, 112
  %v1464 = vpop.permute.xlu0 %1463
  %1465 = vrot.lane.b32.xlu0 %v1226, 112
  %v1466 = vpop.permute.xlu0 %1465
  %1467 = vrot.lane.b32.xlu0 %v1227, 112
  %v1468 = vpop.permute.xlu0 %1467
  %1469 = vrot.lane.b32.xlu0 %v1228, 112
  %v1470 = vpop.permute.xlu0 %1469
  %1471 = vrot.lane.b32.xlu0 %v1229, 112
  %v1472 = vpop.permute.xlu0 %1471
  %1473 = vrot.lane.b32.xlu0 %v1230, 112
  %v1474 = vpop.permute.xlu0 %1473
  %1475 = vrot.lane.b32.xlu0 %v1231, 112
  %v1476 = vpop.permute.xlu0 %1475
  %1477 = vrot.lane.b32.xlu0 %v1232, 112
  %v1478 = vpop.permute.xlu0 %1477
  %1479 = vrot.lane.b32.xlu0 %v1233, 112
  %v1480 = vpop.permute.xlu0 %1479
  %1481 = vrot.lane.b32.xlu0 %v1234, 112
  %v1482 = vpop.permute.xlu0 %1481
  %1483 = vrot.lane.b32.xlu0 %v1235, 112
  %v1484 = vpop.permute.xlu0 %1483
  %1485 = vrot.lane.b32.xlu0 %v1236, 112
  %v1486 = vpop.permute.xlu0 %1485
  %1487 = vrot.lane.b32.xlu0 %v1237, 112
  %v1488 = vpop.permute.xlu0 %1487
  %1489 = vrot.lane.b32.xlu0 %v1238, 112
  %v1490 = vpop.permute.xlu0 %1489
  %1491 = vrot.lane.b32.xlu0 %v1239, 112
  %v1492 = vpop.permute.xlu0 %1491
  %1493 = vrot.lane.b32.xlu0 %v1240, 112
  %v1494 = vpop.permute.xlu0 %1493
  %1495 = vrot.lane.b32.xlu0 %v1241, 112
  %v1496 = vpop.permute.xlu0 %1495
  %1497 = vrot.lane.b32.xlu0 %v1242, 112
  %v1498 = vpop.permute.xlu0 %1497
  %1499 = vrot.lane.b32.xlu0 %v1243, 112
  %v1500 = vpop.permute.xlu0 %1499
  %1501 = vrot.lane.b32.xlu0 %v1244, 112
  %v1502 = vpop.permute.xlu0 %1501
  %1503 = vrot.lane.b32.xlu0 %v1245, 112
  %v1504 = vpop.permute.xlu0 %1503
  %1505 = vrot.lane.b32.xlu0 %v1246, 112
  %v1506 = vpop.permute.xlu0 %1505
  %1507 = vrot.lane.b32.xlu0 %v1247, 112
  %v1508 = vpop.permute.xlu0 %1507
  %1509 = vrot.lane.b32.xlu0 %v1248, 112
  %v1510 = vpop.permute.xlu0 %1509
  %1511 = vrot.lane.b32.xlu0 %v1249, 112
  %v1512 = vpop.permute.xlu0 %1511
  %1513 = vrot.lane.b32.xlu0 %v1250, 112
  %v1514 = vpop.permute.xlu0 %1513
  %1515 = vrot.lane.b32.xlu0 %v1251, 112
  %v1516 = vpop.permute.xlu0 %1515
  %1517 = vrot.lane.b32.xlu0 %v1252, 112
  %v1518 = vpop.permute.xlu0 %1517
  %1519 = vrot.lane.b32.xlu0 %v1253, 112
  %v1520 = vpop.permute.xlu0 %1519
  %1521 = vrot.lane.b32.xlu0 %v1254, 112
  %v1522 = vpop.permute.xlu0 %1521
  %1523 = vrot.lane.b32.xlu0 %v1255, 112
  %v1524 = vpop.permute.xlu0 %1523
  %1525 = vrot.lane.b32.xlu0 %v1256, 112
  %v1526 = vpop.permute.xlu0 %1525
  %1527 = vrot.lane.b32.xlu0 %v1257, 112
  %v1528 = vpop.permute.xlu0 %1527
  %1529 = vrot.lane.b32.xlu0 %v1258, 112
  %v1530 = vpop.permute.xlu0 %1529
  %1531 = vrot.lane.b32.xlu0 %v1259, 112
  %v1532 = vpop.permute.xlu0 %1531
  %1533 = vrot.lane.b32.xlu0 %v1260, 112
  %v1534 = vpop.permute.xlu0 %1533
  %1535 = vrot.lane.b32.xlu0 %v1261, 112
  %v1536 = vpop.permute.xlu0 %1535
  %1537 = vrot.lane.b32.xlu0 %v1262, 112
  %v1538 = vpop.permute.xlu0 %1537
  %1539 = vrot.lane.b32.xlu0 %v1263, 112
  %v1540 = vpop.permute.xlu0 %1539
  %1541 = vrot.lane.b32.xlu0 %v1264, 112
  %v1542 = vpop.permute.xlu0 %1541
  %1543 = vrot.lane.b32.xlu0 %v1265, 112
  %v1544 = vpop.permute.xlu0 %1543
  %1545 = vrot.lane.b32.xlu0 %v1266, 112
  %v1546 = vpop.permute.xlu0 %1545
  %1547 = vrot.lane.b32.xlu0 %v1267, 112
  %v1548 = vpop.permute.xlu0 %1547
  %1549 = vrot.lane.b32.xlu0 %v1268, 112
  %v1550 = vpop.permute.xlu0 %1549
  %1551 = vrot.lane.b32.xlu0 %v1269, 112
  %v1552 = vpop.permute.xlu0 %1551
  %1553 = vrot.lane.b32.xlu0 %v1270, 112
  %v1554 = vpop.permute.xlu0 %1553
  %1555 = vrot.lane.b32.xlu0 %v1271, 112
  %v1556 = vpop.permute.xlu0 %1555
  %1557 = vrot.lane.b32.xlu0 %v1272, 112
  %v1558 = vpop.permute.xlu0 %1557
  %1559 = vrot.lane.b32.xlu0 %v1273, 112
  %v1560 = vpop.permute.xlu0 %1559
  %1561 = vrot.lane.b32.xlu0 %v1274, 112
  %v1562 = vpop.permute.xlu0 %1561
  %1563 = vrot.lane.b32.xlu0 %v1275, 112
  %v1564 = vpop.permute.xlu0 %1563
  %1565 = vrot.lane.b32.xlu0 %v1276, 112
  %v1566 = vpop.permute.xlu0 %1565
  %1567 = vrot.lane.b32.xlu0 %v1277, 112
  %v1568 = vpop.permute.xlu0 %1567
  %1569 = vrot.lane.b32.xlu0 %v1278, 112
  %v1570 = vpop.permute.xlu0 %1569
  %1571 = vrot.lane.b32.xlu0 %v1279, 112
  %v1572 = vpop.permute.xlu0 %1571
  %v1637 = vrot.slane %v1446, 7
  %v1638 = vrot.slane %v1448, 7
  %v1639 = vrot.slane %v1450, 7
  %v1640 = vrot.slane %v1452, 7
  %v1641 = vrot.slane %v1454, 7
  %v1642 = vrot.slane %v1456, 7
  %v1643 = vrot.slane %v1458, 7
  %v1644 = vrot.slane %v1460, 7
  %v1645 = vrot.slane %v1462, 7
  %v1646 = vrot.slane %v1464, 7
  %v1647 = vrot.slane %v1466, 7
  %v1648 = vrot.slane %v1468, 7
  %v1649 = vrot.slane %v1470, 7
  %v1650 = vrot.slane %v1472, 7
  %v1651 = vrot.slane %v1474, 7
  %v1652 = vrot.slane %v1476, 7
  %v1653 = vrot.slane %v1478, 7
  %v1654 = vrot.slane %v1480, 7
  %v1655 = vrot.slane %v1482, 7
  %v1656 = vrot.slane %v1484, 7
  %v1657 = vrot.slane %v1486, 7
  %v1658 = vrot.slane %v1488, 7
  %v1659 = vrot.slane %v1490, 7
  %v1660 = vrot.slane %v1492, 7
  %v1661 = vrot.slane %v1494, 7
  %v1662 = vrot.slane %v1496, 7
  %v1663 = vrot.slane %v1498, 7
  %v1664 = vrot.slane %v1500, 7
  %v1665 = vrot.slane %v1502, 7
  %v1666 = vrot.slane %v1504, 7
  %v1667 = vrot.slane %v1506, 7
  %v1668 = vrot.slane %v1508, 7
  %v1669 = vrot.slane %v1510, 7
  %v1670 = vrot.slane %v1512, 7
  %v1671 = vrot.slane %v1514, 7
  %v1672 = vrot.slane %v1516, 7
  %v1673 = vrot.slane %v1518, 7
  %v1674 = vrot.slane %v1520, 7
  %v1675 = vrot.slane %v1522, 7
  %v1676 = vrot.slane %v1524, 7
  %v1677 = vrot.slane %v1526, 7
  %v1678 = vrot.slane %v1528, 7
  %v1679 = vrot.slane %v1530, 7
  %v1680 = vrot.slane %v1532, 7
  %v1681 = vrot.slane %v1534, 7
  %v1682 = vrot.slane %v1536, 7
  %v1683 = vrot.slane %v1538, 7
  %v1684 = vrot.slane %v1540, 7
  %v1685 = vrot.slane %v1542, 7
  %v1686 = vrot.slane %v1544, 7
  %v1687 = vrot.slane %v1546, 7
  %v1688 = vrot.slane %v1548, 7
  %v1689 = vrot.slane %v1550, 7
  %v1690 = vrot.slane %v1552, 7
  %v1691 = vrot.slane %v1554, 7
  %v1692 = vrot.slane %v1556, 7
  %v1693 = vrot.slane %v1558, 7
  %v1694 = vrot.slane %v1560, 7
  %v1695 = vrot.slane %v1562, 7
  %v1696 = vrot.slane %v1564, 7
  %v1697 = vrot.slane %v1566, 7
  %v1698 = vrot.slane %v1568, 7
  %v1699 = vrot.slane %v1570, 7
  %v1700 = vrot.slane %v1572, 7
  %vm1701 = vcmp.lt.s32.totalorder %v1281, 1
  %v1702 = vsel %vm1701, %v1699, %v1700
  %v1703 = vsel %vm1701, %v1698, %v1699
  %v1704 = vsel %vm1701, %v1697, %v1698
  %v1705 = vsel %vm1701, %v1696, %v1697
  %v1706 = vsel %vm1701, %v1695, %v1696
  %v1707 = vsel %vm1701, %v1694, %v1695
  %v1708 = vsel %vm1701, %v1693, %v1694
  %v1709 = vsel %vm1701, %v1692, %v1693
  %v1710 = vsel %vm1701, %v1691, %v1692
  %v1711 = vsel %vm1701, %v1690, %v1691
  %v1712 = vsel %vm1701, %v1689, %v1690
  %v1713 = vsel %vm1701, %v1688, %v1689
  %v1714 = vsel %vm1701, %v1687, %v1688
  %v1715 = vsel %vm1701, %v1686, %v1687
  %v1716 = vsel %vm1701, %v1685, %v1686
  %v1717 = vsel %vm1701, %v1684, %v1685
  %v1718 = vsel %vm1701, %v1683, %v1684
  %v1719 = vsel %vm1701, %v1682, %v1683
  %v1720 = vsel %vm1701, %v1681, %v1682
  %v1721 = vsel %vm1701, %v1680, %v1681
  %v1722 = vsel %vm1701, %v1679, %v1680
  %v1723 = vsel %vm1701, %v1678, %v1679
  %v1724 = vsel %vm1701, %v1677, %v1678
  %v1725 = vsel %vm1701, %v1676, %v1677
  %v1726 = vsel %vm1701, %v1675, %v1676
  %v1727 = vsel %vm1701, %v1674, %v1675
  %v1728 = vsel %vm1701, %v1673, %v1674
  %v1729 = vsel %vm1701, %v1672, %v1673
  %v1730 = vsel %vm1701, %v1671, %v1672
  %v1731 = vsel %vm1701, %v1670, %v1671
  %v1732 = vsel %vm1701, %v1669, %v1670
  %v1733 = vsel %vm1701, %v1668, %v1669
  %v1734 = vsel %vm1701, %v1667, %v1668
  %v1735 = vsel %vm1701, %v1666, %v1667
  %v1736 = vsel %vm1701, %v1665, %v1666
  %v1737 = vsel %vm1701, %v1664, %v1665
  %v1738 = vsel %vm1701, %v1663, %v1664
  %v1739 = vsel %vm1701, %v1662, %v1663
  %v1740 = vsel %vm1701, %v1661, %v1662
  %v1741 = vsel %vm1701, %v1660, %v1661
  %v1742 = vsel %vm1701, %v1659, %v1660
  %v1743 = vsel %vm1701, %v1658, %v1659
  %v1744 = vsel %vm1701, %v1657, %v1658
  %v1745 = vsel %vm1701, %v1656, %v1657
  %v1746 = vsel %vm1701, %v1655, %v1656
  %v1747 = vsel %vm1701, %v1654, %v1655
  %v1748 = vsel %vm1701, %v1653, %v1654
  %v1749 = vsel %vm1701, %v1652, %v1653
  %v1750 = vsel %vm1701, %v1651, %v1652
  %v1751 = vsel %vm1701, %v1650, %v1651
  %v1752 = vsel %vm1701, %v1649, %v1650
  %v1753 = vsel %vm1701, %v1648, %v1649
  %v1754 = vsel %vm1701, %v1647, %v1648
  %v1755 = vsel %vm1701, %v1646, %v1647
  %v1756 = vsel %vm1701, %v1645, %v1646
  %v1757 = vsel %vm1701, %v1644, %v1645
  %v1758 = vsel %vm1701, %v1643, %v1644
  %v1759 = vsel %vm1701, %v1642, %v1643
  %v1760 = vsel %vm1701, %v1641, %v1642
  %v1761 = vsel %vm1701, %v1640, %v1641
  %v1762 = vsel %vm1701, %v1639, %v1640
  %v1763 = vsel %vm1701, %v1638, %v1639
  %v1764 = vsel %vm1701, %v1637, %v1638
  %v1765 = vsel %vm1701, %v1700, %v1637
  %vm1766 = vmand %vm1313, %vm1377
  %vm1767 = vmand %vm1314, %vm1378
  %vm1768 = vmand %vm1315, %vm1377
  %vm1769 = vmand %vm1316, %vm1378
  %vm1770 = vmand %vm1317, %vm1377
  %vm1771 = vmand %vm1318, %vm1378
  %vm1772 = vmand %vm1319, %vm1377
  %vm1773 = vmand %vm1320, %vm1378
  %vm1774 = vmand %vm1321, %vm1377
  %vm1775 = vmand %vm1322, %vm1378
  %vm1776 = vmand %vm1323, %vm1377
  %vm1777 = vmand %vm1324, %vm1378
  %vm1778 = vmand %vm1325, %vm1377
  %vm1779 = vmand %vm1326, %vm1378
  %vm1780 = vmand %vm1327, %vm1377
  %vm1781 = vmand %vm1328, %vm1378
  %vm1782 = vmand %vm1329, %vm1377
  %vm1783 = vmand %vm1330, %vm1378
  %vm1784 = vmand %vm1331, %vm1377
  %vm1785 = vmand %vm1332, %vm1378
  %vm1786 = vmand %vm1333, %vm1377
  %vm1787 = vmand %vm1334, %vm1378
  %vm1788 = vmand %vm1335, %vm1377
  %vm1789 = vmand %vm1336, %vm1378
  %vm1790 = vmand %vm1337, %vm1377
  %vm1791 = vmand %vm1338, %vm1378
  %vm1792 = vmand %vm1339, %vm1377
  %vm1793 = vmand %vm1340, %vm1378
  %vm1794 = vmand %vm1341, %vm1377
  %vm1795 = vmand %vm1342, %vm1378
  %vm1796 = vmand %vm1343, %vm1377
  %vm1797 = vmand %vm1344, %vm1378
  %v1798 = vsel %vm1766, %v1703, 0.0
  %v1799 = vsel %vm1767, %v1702, 0.0
  %v1800 = vsel %vm1768, %v1765, 0.0
  %v1801 = vsel %vm1769, %v1764, 0.0
  %v1802 = vsel %vm1770, %v1763, 0.0
  %v1803 = vsel %vm1771, %v1762, 0.0
  %v1804 = vsel %vm1772, %v1761, 0.0
  %v1805 = vsel %vm1773, %v1760, 0.0
  %v1806 = vsel %vm1774, %v1759, 0.0
  %v1807 = vsel %vm1775, %v1758, 0.0
  %v1808 = vsel %vm1776, %v1757, 0.0
  %v1809 = vsel %vm1777, %v1756, 0.0
  %v1810 = vsel %vm1778, %v1755, 0.0
  %v1811 = vsel %vm1779, %v1754, 0.0
  %v1812 = vsel %vm1780, %v1753, 0.0
  %v1813 = vsel %vm1781, %v1752, 0.0
  %v1814 = vsel %vm1782, %v1751, 0.0
  %v1815 = vsel %vm1783, %v1750, 0.0
  %v1816 = vsel %vm1784, %v1749, 0.0
  %v1817 = vsel %vm1785, %v1748, 0.0
  %v1818 = vsel %vm1786, %v1747, 0.0
  %v1819 = vsel %vm1787, %v1746, 0.0
  %v1820 = vsel %vm1788, %v1745, 0.0
  %v1821 = vsel %vm1789, %v1744, 0.0
  %v1822 = vsel %vm1790, %v1743, 0.0
  %v1823 = vsel %vm1791, %v1742, 0.0
  %v1824 = vsel %vm1792, %v1741, 0.0
  %v1825 = vsel %vm1793, %v1740, 0.0
  %v1826 = vsel %vm1794, %v1739, 0.0
  %v1827 = vsel %vm1795, %v1738, 0.0
  %v1828 = vsel %vm1796, %v1737, 0.0
  %v1829 = vsel %vm1797, %v1736, 0.0
  %v1830 = vsel %vm1766, %v1735, 0.0
  %v1831 = vsel %vm1767, %v1734, 0.0
  %v1832 = vsel %vm1768, %v1733, 0.0
  %v1833 = vsel %vm1769, %v1732, 0.0
  %v1834 = vsel %vm1770, %v1731, 0.0
  %v1835 = vsel %vm1771, %v1730, 0.0
  %v1836 = vsel %vm1772, %v1729, 0.0
  %v1837 = vsel %vm1773, %v1728, 0.0
  %v1838 = vsel %vm1774, %v1727, 0.0
  %v1839 = vsel %vm1775, %v1726, 0.0
  %v1840 = vsel %vm1776, %v1725, 0.0
  %v1841 = vsel %vm1777, %v1724, 0.0
  %v1842 = vsel %vm1778, %v1723, 0.0
  %v1843 = vsel %vm1779, %v1722, 0.0
  %v1844 = vsel %vm1780, %v1721, 0.0
  %v1845 = vsel %vm1781, %v1720, 0.0
  %v1846 = vsel %vm1782, %v1719, 0.0
  %v1847 = vsel %vm1783, %v1718, 0.0
  %v1848 = vsel %vm1784, %v1717, 0.0
  %v1849 = vsel %vm1785, %v1716, 0.0
  %v1850 = vsel %vm1786, %v1715, 0.0
  %v1851 = vsel %vm1787, %v1714, 0.0
  %v1852 = vsel %vm1788, %v1713, 0.0
  %v1853 = vsel %vm1789, %v1712, 0.0
  %v1854 = vsel %vm1790, %v1711, 0.0
  %v1855 = vsel %vm1791, %v1710, 0.0
  %v1856 = vsel %vm1792, %v1709, 0.0
  %v1857 = vsel %vm1793, %v1708, 0.0
  %v1858 = vsel %vm1794, %v1707, 0.0
  %v1859 = vsel %vm1795, %v1706, 0.0
  %v1860 = vsel %vm1796, %v1705, 0.0
  %v1861 = vsel %vm1797, %v1704, 0.0
  %v1862 = vpack.c.bf16 %v1799, %v1798
  %v1863 = vpack.c.bf16 %v1801, %v1800
  %v1864 = vpack.c.bf16 %v1803, %v1802
  %v1865 = vpack.c.bf16 %v1805, %v1804
  %v1866 = vpack.c.bf16 %v1807, %v1806
  %v1867 = vpack.c.bf16 %v1809, %v1808
  %v1868 = vpack.c.bf16 %v1811, %v1810
  %v1869 = vpack.c.bf16 %v1813, %v1812
  %v1870 = vpack.c.bf16 %v1815, %v1814
  %v1871 = vpack.c.bf16 %v1817, %v1816
  %v1872 = vpack.c.bf16 %v1819, %v1818
  %v1873 = vpack.c.bf16 %v1821, %v1820
  %v1874 = vpack.c.bf16 %v1823, %v1822
  %v1875 = vpack.c.bf16 %v1825, %v1824
  %v1876 = vpack.c.bf16 %v1827, %v1826
  %v1877 = vpack.c.bf16 %v1829, %v1828
  %v1878 = vpack.c.bf16 %v1831, %v1830
  %v1879 = vpack.c.bf16 %v1833, %v1832
  %v1880 = vpack.c.bf16 %v1835, %v1834
  %v1881 = vpack.c.bf16 %v1837, %v1836
  %v1882 = vpack.c.bf16 %v1839, %v1838
  %v1883 = vpack.c.bf16 %v1841, %v1840
  %v1884 = vpack.c.bf16 %v1843, %v1842
  %v1885 = vpack.c.bf16 %v1845, %v1844
  %v1886 = vpack.c.bf16 %v1847, %v1846
  %v1887 = vpack.c.bf16 %v1849, %v1848
  %v1888 = vpack.c.bf16 %v1851, %v1850
  %v1889 = vpack.c.bf16 %v1853, %v1852
  %v1890 = vpack.c.bf16 %v1855, %v1854
  %v1891 = vpack.c.bf16 %v1857, %v1856
  %v1892 = vpack.c.bf16 %v1859, %v1858
  %v1893 = vpack.c.bf16 %v1861, %v1860
  %vm1894 = vcmask 64512
  %1895 = vst.msk [vmem:[#allocation2] sm:$0xff] %vm1894, %v1862
  %1896 = vst.msk [vmem:[#allocation2 + $0x8] sm:$0xff] %vm1894, %v1863
  %1897 = vst.msk [vmem:[#allocation2 + $0x10] sm:$0xff] %vm1894, %v1864
  %1898 = vst.msk [vmem:[#allocation2 + $0x18] sm:$0xff] %vm1894, %v1865
  %1899 = vst.msk [vmem:[#allocation2 + $0x20] sm:$0xff] %vm1894, %v1866
  %1900 = vst.msk [vmem:[#allocation2 + $0x28] sm:$0xff] %vm1894, %v1867
  %1901 = vst.msk [vmem:[#allocation2 + $0x30] sm:$0xff] %vm1894, %v1868
  %1902 = vst.msk [vmem:[#allocation2 + $0x38] sm:$0xff] %vm1894, %v1869
  %1903 = vst.msk [vmem:[#allocation2 + $0x40] sm:$0xff] %vm1894, %v1870
  %1904 = vst.msk [vmem:[#allocation2 + $0x48] sm:$0xff] %vm1894, %v1871
  %1905 = vst.msk [vmem:[#allocation2 + $0x50] sm:$0xff] %vm1894, %v1872
  %1906 = vst.msk [vmem:[#allocation2 + $0x58] sm:$0xff] %vm1894, %v1873
  %1907 = vst.msk [vmem:[#allocation2 + $0x60] sm:$0xff] %vm1894, %v1874
  %1908 = vst.msk [vmem:[#allocation2 + $0x68] sm:$0xff] %vm1894, %v1875
  %1909 = vst.msk [vmem:[#allocation2 + $0x70] sm:$0xff] %vm1894, %v1876
  %1910 = vst.msk [vmem:[#allocation2 + $0x78] sm:$0xff] %vm1894, %v1877
  %1911 = vst.msk [vmem:[#allocation2 + $0x80] sm:$0xff] %vm1894, %v1878
  %1912 = vst.msk [vmem:[#allocation2 + $0x88] sm:$0xff] %vm1894, %v1879
  %1913 = vst.msk [vmem:[#allocation2 + $0x90] sm:$0xff] %vm1894, %v1880
  %1914 = vst.msk [vmem:[#allocation2 + $0x98] sm:$0xff] %vm1894, %v1881
  %1915 = vst.msk [vmem:[#allocation2 + $0xa0] sm:$0xff] %vm1894, %v1882
  %1916 = vst.msk [vmem:[#allocation2 + $0xa8] sm:$0xff] %vm1894, %v1883
  %1917 = vst.msk [vmem:[#allocation2 + $0xb0] sm:$0xff] %vm1894, %v1884
  %1918 = vst.msk [vmem:[#allocation2 + $0xb8] sm:$0xff] %vm1894, %v1885
  %1919 = vst.msk [vmem:[#allocation2 + $0xc0] sm:$0xff] %vm1894, %v1886
  %1920 = vst.msk [vmem:[#allocation2 + $0xc8] sm:$0xff] %vm1894, %v1887
  %1921 = vst.msk [vmem:[#allocation2 + $0xd0] sm:$0xff] %vm1894, %v1888
  %1922 = vst.msk [vmem:[#allocation2 + $0xd8] sm:$0xff] %vm1894, %v1889
  %1923 = vst.msk [vmem:[#allocation2 + $0xe0] sm:$0xff] %vm1894, %v1890
  %1924 = vst.msk [vmem:[#allocation2 + $0xe8] sm:$0xff] %vm1894, %v1891
  %1925 = vst.msk [vmem:[#allocation2 + $0xf0] sm:$0xff] %vm1894, %v1892
  %1926 = vst.msk [vmem:[#allocation2 + $0xf8] sm:$0xff] %vm1894, %v1893
  %v1927 = vsel %vm1313, %v1570, 0.0
  %v1928 = vsel %vm1314, %v1572, 0.0
  %v1929 = vsel %vm1315, %v1446, 0.0
  %v1930 = vsel %vm1316, %v1448, 0.0
  %v1931 = vsel %vm1317, %v1450, 0.0
  %v1932 = vsel %vm1318, %v1452, 0.0
  %v1933 = vsel %vm1319, %v1454, 0.0
  %v1934 = vsel %vm1320, %v1456, 0.0
  %v1935 = vsel %vm1321, %v1458, 0.0
  %v1936 = vsel %vm1322, %v1460, 0.0
  %v1937 = vsel %vm1323, %v1462, 0.0
  %v1938 = vsel %vm1324, %v1464, 0.0
  %v1939 = vsel %vm1325, %v1466, 0.0
  %v1940 = vsel %vm1326, %v1468, 0.0
  %v1941 = vsel %vm1327, %v1470, 0.0
  %v1942 = vsel %vm1328, %v1472, 0.0
  %v1943 = vsel %vm1329, %v1474, 0.0
  %v1944 = vsel %vm1330, %v1476, 0.0
  %v1945 = vsel %vm1331, %v1478, 0.0
  %v1946 = vsel %vm1332, %v1480, 0.0
  %v1947 = vsel %vm1333, %v1482, 0.0
  %v1948 = vsel %vm1334, %v1484, 0.0
  %v1949 = vsel %vm1335, %v1486, 0.0
  %v1950 = vsel %vm1336, %v1488, 0.0
  %v1951 = vsel %vm1337, %v1490, 0.0
  %v1952 = vsel %vm1338, %v1492, 0.0
  %v1953 = vsel %vm1339, %v1494, 0.0
  %v1954 = vsel %vm1340, %v1496, 0.0
  %v1955 = vsel %vm1341, %v1498, 0.0
  %v1956 = vsel %vm1342, %v1500, 0.0
  %v1957 = vsel %vm1343, %v1502, 0.0
  %v1958 = vsel %vm1344, %v1504, 0.0
  %v1959 = vsel %vm1313, %v1506, 0.0
  %v1960 = vsel %vm1314, %v1508, 0.0
  %v1961 = vsel %vm1315, %v1510, 0.0
  %v1962 = vsel %vm1316, %v1512, 0.0
  %v1963 = vsel %vm1317, %v1514, 0.0
  %v1964 = vsel %vm1318, %v1516, 0.0
  %v1965 = vsel %vm1319, %v1518, 0.0
  %v1966 = vsel %vm1320, %v1520, 0.0
  %v1967 = vsel %vm1321, %v1522, 0.0
  %v1968 = vsel %vm1322, %v1524, 0.0
  %v1969 = vsel %vm1323, %v1526, 0.0
  %v1970 = vsel %vm1324, %v1528, 0.0
  %v1971 = vsel %vm1325, %v1530, 0.0
  %v1972 = vsel %vm1326, %v1532, 0.0
  %v1973 = vsel %vm1327, %v1534, 0.0
  %v1974 = vsel %vm1328, %v1536, 0.0
  %v1975 = vsel %vm1329, %v1538, 0.0
  %v1976 = vsel %vm1330, %v1540, 0.0
  %v1977 = vsel %vm1331, %v1542, 0.0
  %v1978 = vsel %vm1332, %v1544, 0.0
  %v1979 = vsel %vm1333, %v1546, 0.0
  %v1980 = vsel %vm1334, %v1548, 0.0
  %v1981 = vsel %vm1335, %v1550, 0.0
  %v1982 = vsel %vm1336, %v1552, 0.0
  %v1983 = vsel %vm1337, %v1554, 0.0
  %v1984 = vsel %vm1338, %v1556, 0.0
  %v1985 = vsel %vm1339, %v1558, 0.0
  %v1986 = vsel %vm1340, %v1560, 0.0
  %v1987 = vsel %vm1341, %v1562, 0.0
  %v1988 = vsel %vm1342, %v1564, 0.0
  %v1989 = vsel %vm1343, %v1566, 0.0
  %v1990 = vsel %vm1344, %v1568, 0.0
  %v1991 = vpack.c.bf16 %v1928, %v1927
  %v1992 = vpack.c.bf16 %v1930, %v1929
  %v1993 = vpack.c.bf16 %v1932, %v1931
  %v1994 = vpack.c.bf16 %v1934, %v1933
  %v1995 = vpack.c.bf16 %v1936, %v1935
  %v1996 = vpack.c.bf16 %v1938, %v1937
  %v1997 = vpack.c.bf16 %v1940, %v1939
  %v1998 = vpack.c.bf16 %v1942, %v1941
  %v1999 = vpack.c.bf16 %v1944, %v1943
  %v2000 = vpack.c.bf16 %v1946, %v1945
  %v2001 = vpack.c.bf16 %v1948, %v1947
  %v2002 = vpack.c.bf16 %v1950, %v1949
  %v2003 = vpack.c.bf16 %v1952, %v1951
  %v2004 = vpack.c.bf16 %v1954, %v1953
  %v2005 = vpack.c.bf16 %v1956, %v1955
  %v2006 = vpack.c.bf16 %v1958, %v1957
  %v2007 = vpack.c.bf16 %v1960, %v1959
  %v2008 = vpack.c.bf16 %v1962, %v1961
  %v2009 = vpack.c.bf16 %v1964, %v1963
  %v2010 = vpack.c.bf16 %v1966, %v1965
  %v2011 = vpack.c.bf16 %v1968, %v1967
  %v2012 = vpack.c.bf16 %v1970, %v1969
  %v2013 = vpack.c.bf16 %v1972, %v1971
  %v2014 = vpack.c.bf16 %v1974, %v1973
  %v2015 = vpack.c.bf16 %v1976, %v1975
  %v2016 = vpack.c.bf16 %v1978, %v1977
  %v2017 = vpack.c.bf16 %v1980, %v1979
  %v2018 = vpack.c.bf16 %v1982, %v1981
  %v2019 = vpack.c.bf16 %v1984, %v1983
  %v2020 = vpack.c.bf16 %v1986, %v1985
  %v2021 = vpack.c.bf16 %v1988, %v1987
  %v2022 = vpack.c.bf16 %v1990, %v1989
  %2055 = vrot.lane.b32.xlu0 %v1991, 8
  %v2056 = vpop.permute.xlu0 %2055
  %2057 = vrot.lane.b32.xlu0 %v1992, 8
  %v2058 = vpop.permute.xlu0 %2057
  %2059 = vrot.lane.b32.xlu0 %v1993, 8
  %v2060 = vpop.permute.xlu0 %2059
  %2061 = vrot.lane.b32.xlu0 %v1994, 8
  %v2062 = vpop.permute.xlu0 %2061
  %2063 = vrot.lane.b32.xlu0 %v1995, 8
  %v2064 = vpop.permute.xlu0 %2063
  %2065 = vrot.lane.b32.xlu0 %v1996, 8
  %v2066 = vpop.permute.xlu0 %2065
  %2067 = vrot.lane.b32.xlu0 %v1997, 8
  %v2068 = vpop.permute.xlu0 %2067
  %2069 = vrot.lane.b32.xlu0 %v1998, 8
  %v2070 = vpop.permute.xlu0 %2069
  %2071 = vrot.lane.b32.xlu0 %v1999, 8
  %v2072 = vpop.permute.xlu0 %2071
  %2073 = vrot.lane.b32.xlu0 %v2000, 8
  %v2074 = vpop.permute.xlu0 %2073
  %2075 = vrot.lane.b32.xlu0 %v2001, 8
  %v2076 = vpop.permute.xlu0 %2075
  %2077 = vrot.lane.b32.xlu0 %v2002, 8
  %v2078 = vpop.permute.xlu0 %2077
  %2079 = vrot.lane.b32.xlu0 %v2003, 8
  %v2080 = vpop.permute.xlu0 %2079
  %2081 = vrot.lane.b32.xlu0 %v2004, 8
  %v2082 = vpop.permute.xlu0 %2081
  %2083 = vrot.lane.b32.xlu0 %v2005, 8
  %v2084 = vpop.permute.xlu0 %2083
  %2085 = vrot.lane.b32.xlu0 %v2006, 8
  %v2086 = vpop.permute.xlu0 %2085
  %2087 = vrot.lane.b32.xlu0 %v2007, 8
  %v2088 = vpop.permute.xlu0 %2087
  %2089 = vrot.lane.b32.xlu0 %v2008, 8
  %v2090 = vpop.permute.xlu0 %2089
  %2091 = vrot.lane.b32.xlu0 %v2009, 8
  %v2092 = vpop.permute.xlu0 %2091
  %2093 = vrot.lane.b32.xlu0 %v2010, 8
  %v2094 = vpop.permute.xlu0 %2093
  %2095 = vrot.lane.b32.xlu0 %v2011, 8
  %v2096 = vpop.permute.xlu0 %2095
  %2097 = vrot.lane.b32.xlu0 %v2012, 8
  %v2098 = vpop.permute.xlu0 %2097
  %2099 = vrot.lane.b32.xlu0 %v2013, 8
  %v2100 = vpop.permute.xlu0 %2099
  %2101 = vrot.lane.b32.xlu0 %v2014, 8
  %v2102 = vpop.permute.xlu0 %2101
  %2103 = vrot.lane.b32.xlu0 %v2015, 8
  %v2104 = vpop.permute.xlu0 %2103
  %2105 = vrot.lane.b32.xlu0 %v2016, 8
  %v2106 = vpop.permute.xlu0 %2105
  %2107 = vrot.lane.b32.xlu0 %v2017, 8
  %v2108 = vpop.permute.xlu0 %2107
  %2109 = vrot.lane.b32.xlu0 %v2018, 8
  %v2110 = vpop.permute.xlu0 %2109
  %2111 = vrot.lane.b32.xlu0 %v2019, 8
  %v2112 = vpop.permute.xlu0 %2111
  %2113 = vrot.lane.b32.xlu0 %v2020, 8
  %v2114 = vpop.permute.xlu0 %2113
  %2115 = vrot.lane.b32.xlu0 %v2021, 8
  %v2116 = vpop.permute.xlu0 %2115
  %2117 = vrot.lane.b32.xlu0 %v2022, 8
  %v2118 = vpop.permute.xlu0 %2117
  %vm2151 = vcmask 130112
  %2152 = vst.msk [vmem:[#allocation2] sm:$0xff] %vm2151, %v2056
  %2153 = vst.msk [vmem:[#allocation2 + $0x8] sm:$0xff] %vm2151, %v2058
  %2154 = vst.msk [vmem:[#allocation2 + $0x10] sm:$0xff] %vm2151, %v2060
  %2155 = vst.msk [vmem:[#allocation2 + $0x18] sm:$0xff] %vm2151, %v2062
  %2156 = vst.msk [vmem:[#allocation2 + $0x20] sm:$0xff] %vm2151, %v2064
  %2157 = vst.msk [vmem:[#allocation2 + $0x28] sm:$0xff] %vm2151, %v2066
  %2158 = vst.msk [vmem:[#allocation2 + $0x30] sm:$0xff] %vm2151, %v2068
  %2159 = vst.msk [vmem:[#allocation2 + $0x38] sm:$0xff] %vm2151, %v2070
  %2160 = vst.msk [vmem:[#allocation2 + $0x40] sm:$0xff] %vm2151, %v2072
  %2161 = vst.msk [vmem:[#allocation2 + $0x48] sm:$0xff] %vm2151, %v2074
  %2162 = vst.msk [vmem:[#allocation2 + $0x50] sm:$0xff] %vm2151, %v2076
  %2163 = vst.msk [vmem:[#allocation2 + $0x58] sm:$0xff] %vm2151, %v2078
  %2164 = vst.msk [vmem:[#allocation2 + $0x60] sm:$0xff] %vm2151, %v2080
  %2165 = vst.msk [vmem:[#allocation2 + $0x68] sm:$0xff] %vm2151, %v2082
  %2166 = vst.msk [vmem:[#allocation2 + $0x70] sm:$0xff] %vm2151, %v2084
  %2167 = vst.msk [vmem:[#allocation2 + $0x78] sm:$0xff] %vm2151, %v2086
  %2168 = vst.msk [vmem:[#allocation2 + $0x80] sm:$0xff] %vm2151, %v2088
  %2169 = vst.msk [vmem:[#allocation2 + $0x88] sm:$0xff] %vm2151, %v2090
  %2170 = vst.msk [vmem:[#allocation2 + $0x90] sm:$0xff] %vm2151, %v2092
  %2171 = vst.msk [vmem:[#allocation2 + $0x98] sm:$0xff] %vm2151, %v2094
  %2172 = vst.msk [vmem:[#allocation2 + $0xa0] sm:$0xff] %vm2151, %v2096
  %2173 = vst.msk [vmem:[#allocation2 + $0xa8] sm:$0xff] %vm2151, %v2098
  %2174 = vst.msk [vmem:[#allocation2 + $0xb0] sm:$0xff] %vm2151, %v2100
  %2175 = vst.msk [vmem:[#allocation2 + $0xb8] sm:$0xff] %vm2151, %v2102
  %2176 = vst.msk [vmem:[#allocation2 + $0xc0] sm:$0xff] %vm2151, %v2104
  %2177 = vst.msk [vmem:[#allocation2 + $0xc8] sm:$0xff] %vm2151, %v2106
  %2178 = vst.msk [vmem:[#allocation2 + $0xd0] sm:$0xff] %vm2151, %v2108
  %2179 = vst.msk [vmem:[#allocation2 + $0xd8] sm:$0xff] %vm2151, %v2110
  %2180 = vst.msk [vmem:[#allocation2 + $0xe0] sm:$0xff] %vm2151, %v2112
  %2181 = vst.msk [vmem:[#allocation2 + $0xe8] sm:$0xff] %vm2151, %v2114
  %2182 = vst.msk [vmem:[#allocation2 + $0xf0] sm:$0xff] %vm2151, %v2116
  %2183 = vst.msk [vmem:[#allocation2 + $0xf8] sm:$0xff] %vm2151, %v2118
  %v2184 = vrot.slane %v1446, 1
  %v2185 = vrot.slane %v1448, 1
  %v2186 = vrot.slane %v1450, 1
  %v2187 = vrot.slane %v1452, 1
  %v2188 = vrot.slane %v1454, 1
  %v2189 = vrot.slane %v1456, 1
  %v2190 = vrot.slane %v1458, 1
  %v2191 = vrot.slane %v1460, 1
  %v2192 = vrot.slane %v1462, 1
  %v2193 = vrot.slane %v1464, 1
  %v2194 = vrot.slane %v1466, 1
  %v2195 = vrot.slane %v1468, 1
  %v2196 = vrot.slane %v1470, 1
  %v2197 = vrot.slane %v1472, 1
  %v2198 = vrot.slane %v1474, 1
  %v2199 = vrot.slane %v1476, 1
  %v2200 = vrot.slane %v1478, 1
  %v2201 = vrot.slane %v1480, 1
  %v2202 = vrot.slane %v1482, 1
  %v2203 = vrot.slane %v1484, 1
  %v2204 = vrot.slane %v1486, 1
  %v2205 = vrot.slane %v1488, 1
  %v2206 = vrot.slane %v1490, 1
  %v2207 = vrot.slane %v1492, 1
  %v2208 = vrot.slane %v1494, 1
  %v2209 = vrot.slane %v1496, 1
  %v2210 = vrot.slane %v1498, 1
  %v2211 = vrot.slane %v1500, 1
  %v2212 = vrot.slane %v1502, 1
  %v2213 = vrot.slane %v1504, 1
  %v2214 = vrot.slane %v1506, 1
  %v2215 = vrot.slane %v1508, 1
  %v2216 = vrot.slane %v1510, 1
  %v2217 = vrot.slane %v1512, 1
  %v2218 = vrot.slane %v1514, 1
  %v2219 = vrot.slane %v1516, 1
  %v2220 = vrot.slane %v1518, 1
  %v2221 = vrot.slane %v1520, 1
  %v2222 = vrot.slane %v1522, 1
  %v2223 = vrot.slane %v1524, 1
  %v2224 = vrot.slane %v1526, 1
  %v2225 = vrot.slane %v1528, 1
  %v2226 = vrot.slane %v1530, 1
  %v2227 = vrot.slane %v1532, 1
  %v2228 = vrot.slane %v1534, 1
  %v2229 = vrot.slane %v1536, 1
  %v2230 = vrot.slane %v1538, 1
  %v2231 = vrot.slane %v1540, 1
  %v2232 = vrot.slane %v1542, 1
  %v2233 = vrot.slane %v1544, 1
  %v2234 = vrot.slane %v1546, 1
  %v2235 = vrot.slane %v1548, 1
  %v2236 = vrot.slane %v1550, 1
  %v2237 = vrot.slane %v1552, 1
  %v2238 = vrot.slane %v1554, 1
  %v2239 = vrot.slane %v1556, 1
  %v2240 = vrot.slane %v1558, 1
  %v2241 = vrot.slane %v1560, 1
  %v2242 = vrot.slane %v1562, 1
  %v2243 = vrot.slane %v1564, 1
  %v2244 = vrot.slane %v1566, 1
  %v2245 = vrot.slane %v1568, 1
  %v2246 = vrot.slane %v1570, 1
  %v2247 = vrot.slane %v1572, 1
  %vm2248 = vcmp.lt.s32.totalorder %v1281, 7
  %v2249 = vsel %vm2248, %v2246, %v2247
  %v2250 = vsel %vm2248, %v2245, %v2246
  %v2251 = vsel %vm2248, %v2244, %v2245
  %v2252 = vsel %vm2248, %v2243, %v2244
  %v2253 = vsel %vm2248, %v2242, %v2243
  %v2254 = vsel %vm2248, %v2241, %v2242
  %v2255 = vsel %vm2248, %v2240, %v2241
  %v2256 = vsel %vm2248, %v2239, %v2240
  %v2257 = vsel %vm2248, %v2238, %v2239
  %v2258 = vsel %vm2248, %v2237, %v2238
  %v2259 = vsel %vm2248, %v2236, %v2237
  %v2260 = vsel %vm2248, %v2235, %v2236
  %v2261 = vsel %vm2248, %v2234, %v2235
  %v2262 = vsel %vm2248, %v2233, %v2234
  %v2263 = vsel %vm2248, %v2232, %v2233
  %v2264 = vsel %vm2248, %v2231, %v2232
  %v2265 = vsel %vm2248, %v2230, %v2231
  %v2266 = vsel %vm2248, %v2229, %v2230
  %v2267 = vsel %vm2248, %v2228, %v2229
  %v2268 = vsel %vm2248, %v2227, %v2228
  %v2269 = vsel %vm2248, %v2226, %v2227
  %v2270 = vsel %vm2248, %v2225, %v2226
  %v2271 = vsel %vm2248, %v2224, %v2225
  %v2272 = vsel %vm2248, %v2223, %v2224
  %v2273 = vsel %vm2248, %v2222, %v2223
  %v2274 = vsel %vm2248, %v2221, %v2222
  %v2275 = vsel %vm2248, %v2220, %v2221
  %v2276 = vsel %vm2248, %v2219, %v2220
  %v2277 = vsel %vm2248, %v2218, %v2219
  %v2278 = vsel %vm2248, %v2217, %v2218
  %v2279 = vsel %vm2248, %v2216, %v2217
  %v2280 = vsel %vm2248, %v2215, %v2216
  %v2281 = vsel %vm2248, %v2214, %v2215
  %v2282 = vsel %vm2248, %v2213, %v2214
  %v2283 = vsel %vm2248, %v2212, %v2213
  %v2284 = vsel %vm2248, %v2211, %v2212
  %v2285 = vsel %vm2248, %v2210, %v2211
  %v2286 = vsel %vm2248, %v2209, %v2210
  %v2287 = vsel %vm2248, %v2208, %v2209
  %v2288 = vsel %vm2248, %v2207, %v2208
  %v2289 = vsel %vm2248, %v2206, %v2207
  %v2290 = vsel %vm2248, %v2205, %v2206
  %v2291 = vsel %vm2248, %v2204, %v2205
  %v2292 = vsel %vm2248, %v2203, %v2204
  %v2293 = vsel %vm2248, %v2202, %v2203
  %v2294 = vsel %vm2248, %v2201, %v2202
  %v2295 = vsel %vm2248, %v2200, %v2201
  %v2296 = vsel %vm2248, %v2199, %v2200
  %v2297 = vsel %vm2248, %v2198, %v2199
  %v2298 = vsel %vm2248, %v2197, %v2198
  %v2299 = vsel %vm2248, %v2196, %v2197
  %v2300 = vsel %vm2248, %v2195, %v2196
  %v2301 = vsel %vm2248, %v2194, %v2195
  %v2302 = vsel %vm2248, %v2193, %v2194
  %v2303 = vsel %vm2248, %v2192, %v2193
  %v2304 = vsel %vm2248, %v2191, %v2192
  %v2305 = vsel %vm2248, %v2190, %v2191
  %v2306 = vsel %vm2248, %v2189, %v2190
  %v2307 = vsel %vm2248, %v2188, %v2189
  %v2308 = vsel %vm2248, %v2187, %v2188
  %v2309 = vsel %vm2248, %v2186, %v2187
  %v2310 = vsel %vm2248, %v2185, %v2186
  %v2311 = vsel %vm2248, %v2184, %v2185
  %v2312 = vsel %vm2248, %v2247, %v2184
  %vm2313 = vmand %vm1313, %vm1379
  %vm2314 = vmand %vm1314, %vm1380
  %vm2315 = vmand %vm1315, %vm1379
  %vm2316 = vmand %vm1316, %vm1380
  %vm2317 = vmand %vm1317, %vm1379
  %vm2318 = vmand %vm1318, %vm1380
  %vm2319 = vmand %vm1319, %vm1379
  %vm2320 = vmand %vm1320, %vm1380
  %vm2321 = vmand %vm1321, %vm1379
  %vm2322 = vmand %vm1322, %vm1380
  %vm2323 = vmand %vm1323, %vm1379
  %vm2324 = vmand %vm1324, %vm1380
  %vm2325 = vmand %vm1325, %vm1379
  %vm2326 = vmand %vm1326, %vm1380
  %vm2327 = vmand %vm1327, %vm1379
  %vm2328 = vmand %vm1328, %vm1380
  %vm2329 = vmand %vm1329, %vm1379
  %vm2330 = vmand %vm1330, %vm1380
  %vm2331 = vmand %vm1331, %vm1379
  %vm2332 = vmand %vm1332, %vm1380
  %vm2333 = vmand %vm1333, %vm1379
  %vm2334 = vmand %vm1334, %vm1380
  %vm2335 = vmand %vm1335, %vm1379
  %vm2336 = vmand %vm1336, %vm1380
  %vm2337 = vmand %vm1337, %vm1379
  %vm2338 = vmand %vm1338, %vm1380
  %vm2339 = vmand %vm1339, %vm1379
  %vm2340 = vmand %vm1340, %vm1380
  %vm2341 = vmand %vm1341, %vm1379
  %vm2342 = vmand %vm1342, %vm1380
  %vm2343 = vmand %vm1343, %vm1379
  %vm2344 = vmand %vm1344, %vm1380
  %v2345 = vsel %vm2313, %v2249, 0.0
  %v2346 = vsel %vm2314, %v2312, 0.0
  %v2347 = vsel %vm2315, %v2311, 0.0
  %v2348 = vsel %vm2316, %v2310, 0.0
  %v2349 = vsel %vm2317, %v2309, 0.0
  %v2350 = vsel %vm2318, %v2308, 0.0
  %v2351 = vsel %vm2319, %v2307, 0.0
  %v2352 = vsel %vm2320, %v2306, 0.0
  %v2353 = vsel %vm2321, %v2305, 0.0
  %v2354 = vsel %vm2322, %v2304, 0.0
  %v2355 = vsel %vm2323, %v2303, 0.0
  %v2356 = vsel %vm2324, %v2302, 0.0
  %v2357 = vsel %vm2325, %v2301, 0.0
  %v2358 = vsel %vm2326, %v2300, 0.0
  %v2359 = vsel %vm2327, %v2299, 0.0
  %v2360 = vsel %vm2328, %v2298, 0.0
  %v2361 = vsel %vm2329, %v2297, 0.0
  %v2362 = vsel %vm2330, %v2296, 0.0
  %v2363 = vsel %vm2331, %v2295, 0.0
  %v2364 = vsel %vm2332, %v2294, 0.0
  %v2365 = vsel %vm2333, %v2293, 0.0
  %v2366 = vsel %vm2334, %v2292, 0.0
  %v2367 = vsel %vm2335, %v2291, 0.0
  %v2368 = vsel %vm2336, %v2290, 0.0
  %v2369 = vsel %vm2337, %v2289, 0.0
  %v2370 = vsel %vm2338, %v2288, 0.0
  %v2371 = vsel %vm2339, %v2287, 0.0
  %v2372 = vsel %vm2340, %v2286, 0.0
  %v2373 = vsel %vm2341, %v2285, 0.0
  %v2374 = vsel %vm2342, %v2284, 0.0
  %v2375 = vsel %vm2343, %v2283, 0.0
  %v2376 = vsel %vm2344, %v2282, 0.0
  %v2377 = vsel %vm2313, %v2281, 0.0
  %v2378 = vsel %vm2314, %v2280, 0.0
  %v2379 = vsel %vm2315, %v2279, 0.0
  %v2380 = vsel %vm2316, %v2278, 0.0
  %v2381 = vsel %vm2317, %v2277, 0.0
  %v2382 = vsel %vm2318, %v2276, 0.0
  %v2383 = vsel %vm2319, %v2275, 0.0
  %v2384 = vsel %vm2320, %v2274, 0.0
  %v2385 = vsel %vm2321, %v2273, 0.0
  %v2386 = vsel %vm2322, %v2272, 0.0
  %v2387 = vsel %vm2323, %v2271, 0.0
  %v2388 = vsel %vm2324, %v2270, 0.0
  %v2389 = vsel %vm2325, %v2269, 0.0
  %v2390 = vsel %vm2326, %v2268, 0.0
  %v2391 = vsel %vm2327, %v2267, 0.0
  %v2392 = vsel %vm2328, %v2266, 0.0
  %v2393 = vsel %vm2329, %v2265, 0.0
  %v2394 = vsel %vm2330, %v2264, 0.0
  %v2395 = vsel %vm2331, %v2263, 0.0
  %v2396 = vsel %vm2332, %v2262, 0.0
  %v2397 = vsel %vm2333, %v2261, 0.0
  %v2398 = vsel %vm2334, %v2260, 0.0
  %v2399 = vsel %vm2335, %v2259, 0.0
  %v2400 = vsel %vm2336, %v2258, 0.0
  %v2401 = vsel %vm2337, %v2257, 0.0
  %v2402 = vsel %vm2338, %v2256, 0.0
  %v2403 = vsel %vm2339, %v2255, 0.0
  %v2404 = vsel %vm2340, %v2254, 0.0
  %v2405 = vsel %vm2341, %v2253, 0.0
  %v2406 = vsel %vm2342, %v2252, 0.0
  %v2407 = vsel %vm2343, %v2251, 0.0
  %v2408 = vsel %vm2344, %v2250, 0.0
  %v2409 = vpack.c.bf16 %v2346, %v2345
  %v2410 = vpack.c.bf16 %v2348, %v2347
  %v2411 = vpack.c.bf16 %v2350, %v2349
  %v2412 = vpack.c.bf16 %v2352, %v2351
  %v2413 = vpack.c.bf16 %v2354, %v2353
  %v2414 = vpack.c.bf16 %v2356, %v2355
  %v2415 = vpack.c.bf16 %v2358, %v2357
  %v2416 = vpack.c.bf16 %v2360, %v2359
  %v2417 = vpack.c.bf16 %v2362, %v2361
  %v2418 = vpack.c.bf16 %v2364, %v2363
  %v2419 = vpack.c.bf16 %v2366, %v2365
  %v2420 = vpack.c.bf16 %v2368, %v2367
  %v2421 = vpack.c.bf16 %v2370, %v2369
  %v2422 = vpack.c.bf16 %v2372, %v2371
  %v2423 = vpack.c.bf16 %v2374, %v2373
  %v2424 = vpack.c.bf16 %v2376, %v2375
  %v2425 = vpack.c.bf16 %v2378, %v2377
  %v2426 = vpack.c.bf16 %v2380, %v2379
  %v2427 = vpack.c.bf16 %v2382, %v2381
  %v2428 = vpack.c.bf16 %v2384, %v2383
  %v2429 = vpack.c.bf16 %v2386, %v2385
  %v2430 = vpack.c.bf16 %v2388, %v2387
  %v2431 = vpack.c.bf16 %v2390, %v2389
  %v2432 = vpack.c.bf16 %v2392, %v2391
  %v2433 = vpack.c.bf16 %v2394, %v2393
  %v2434 = vpack.c.bf16 %v2396, %v2395
  %v2435 = vpack.c.bf16 %v2398, %v2397
  %v2436 = vpack.c.bf16 %v2400, %v2399
  %v2437 = vpack.c.bf16 %v2402, %v2401
  %v2438 = vpack.c.bf16 %v2404, %v2403
  %v2439 = vpack.c.bf16 %v2406, %v2405
  %v2440 = vpack.c.bf16 %v2408, %v2407
  %2473 = vrot.lane.b32.xlu0 %v2409, 16
  %v2474 = vpop.permute.xlu0 %2473
  %2475 = vrot.lane.b32.xlu0 %v2410, 16
  %v2476 = vpop.permute.xlu0 %2475
  %2477 = vrot.lane.b32.xlu0 %v2411, 16
  %v2478 = vpop.permute.xlu0 %2477
  %2479 = vrot.lane.b32.xlu0 %v2412, 16
  %v2480 = vpop.permute.xlu0 %2479
  %2481 = vrot.lane.b32.xlu0 %v2413, 16
  %v2482 = vpop.permute.xlu0 %2481
  %2483 = vrot.lane.b32.xlu0 %v2414, 16
  %v2484 = vpop.permute.xlu0 %2483
  %2485 = vrot.lane.b32.xlu0 %v2415, 16
  %v2486 = vpop.permute.xlu0 %2485
  %2487 = vrot.lane.b32.xlu0 %v2416, 16
  %v2488 = vpop.permute.xlu0 %2487
  %2489 = vrot.lane.b32.xlu0 %v2417, 16
  %v2490 = vpop.permute.xlu0 %2489
  %2491 = vrot.lane.b32.xlu0 %v2418, 16
  %v2492 = vpop.permute.xlu0 %2491
  %2493 = vrot.lane.b32.xlu0 %v2419, 16
  %v2494 = vpop.permute.xlu0 %2493
  %2495 = vrot.lane.b32.xlu0 %v2420, 16
  %v2496 = vpop.permute.xlu0 %2495
  %2497 = vrot.lane.b32.xlu0 %v2421, 16
  %v2498 = vpop.permute.xlu0 %2497
  %2499 = vrot.lane.b32.xlu0 %v2422, 16
  %v2500 = vpop.permute.xlu0 %2499
  %2501 = vrot.lane.b32.xlu0 %v2423, 16
  %v2502 = vpop.permute.xlu0 %2501
  %2503 = vrot.lane.b32.xlu0 %v2424, 16
  %v2504 = vpop.permute.xlu0 %2503
  %2505 = vrot.lane.b32.xlu0 %v2425, 16
  %v2506 = vpop.permute.xlu0 %2505
  %2507 = vrot.lane.b32.xlu0 %v2426, 16
  %v2508 = vpop.permute.xlu0 %2507
  %2509 = vrot.lane.b32.xlu0 %v2427, 16
  %v2510 = vpop.permute.xlu0 %2509
  %2511 = vrot.lane.b32.xlu0 %v2428, 16
  %v2512 = vpop.permute.xlu0 %2511
  %2513 = vrot.lane.b32.xlu0 %v2429, 16
  %v2514 = vpop.permute.xlu0 %2513
  %2515 = vrot.lane.b32.xlu0 %v2430, 16
  %v2516 = vpop.permute.xlu0 %2515
  %2517 = vrot.lane.b32.xlu0 %v2431, 16
  %v2518 = vpop.permute.xlu0 %2517
  %2519 = vrot.lane.b32.xlu0 %v2432, 16
  %v2520 = vpop.permute.xlu0 %2519
  %2521 = vrot.lane.b32.xlu0 %v2433, 16
  %v2522 = vpop.permute.xlu0 %2521
  %2523 = vrot.lane.b32.xlu0 %v2434, 16
  %v2524 = vpop.permute.xlu0 %2523
  %2525 = vrot.lane.b32.xlu0 %v2435, 16
  %v2526 = vpop.permute.xlu0 %2525
  %2527 = vrot.lane.b32.xlu0 %v2436, 16
  %v2528 = vpop.permute.xlu0 %2527
  %2529 = vrot.lane.b32.xlu0 %v2437, 16
  %v2530 = vpop.permute.xlu0 %2529
  %2531 = vrot.lane.b32.xlu0 %v2438, 16
  %v2532 = vpop.permute.xlu0 %2531
  %2533 = vrot.lane.b32.xlu0 %v2439, 16
  %v2534 = vpop.permute.xlu0 %2533
  %2535 = vrot.lane.b32.xlu0 %v2440, 16
  %v2536 = vpop.permute.xlu0 %2535
  %2569 = vst.msk [vmem:[#allocation2] sm:$0xff] %vm651, %v2474
  %2570 = vst.msk [vmem:[#allocation2 + $0x8] sm:$0xff] %vm651, %v2476
  %2571 = vst.msk [vmem:[#allocation2 + $0x10] sm:$0xff] %vm651, %v2478
  %2572 = vst.msk [vmem:[#allocation2 + $0x18] sm:$0xff] %vm651, %v2480
  %2573 = vst.msk [vmem:[#allocation2 + $0x20] sm:$0xff] %vm651, %v2482
  %2574 = vst.msk [vmem:[#allocation2 + $0x28] sm:$0xff] %vm651, %v2484
  %2575 = vst.msk [vmem:[#allocation2 + $0x30] sm:$0xff] %vm651, %v2486
  %2576 = vst.msk [vmem:[#allocation2 + $0x38] sm:$0xff] %vm651, %v2488
  %2577 = vst.msk [vmem:[#allocation2 + $0x40] sm:$0xff] %vm651, %v2490
  %2578 = vst.msk [vmem:[#allocation2 + $0x48] sm:$0xff] %vm651, %v2492
  %2579 = vst.msk [vmem:[#allocation2 + $0x50] sm:$0xff] %vm651, %v2494
  %2580 = vst.msk [vmem:[#allocation2 + $0x58] sm:$0xff] %vm651, %v2496
  %2581 = vst.msk [vmem:[#allocation2 + $0x60] sm:$0xff] %vm651, %v2498
  %2582 = vst.msk [vmem:[#allocation2 + $0x68] sm:$0xff] %vm651, %v2500
  %2583 = vst.msk [vmem:[#allocation2 + $0x70] sm:$0xff] %vm651, %v2502
  %2584 = vst.msk [vmem:[#allocation2 + $0x78] sm:$0xff] %vm651, %v2504
  %2585 = vst.msk [vmem:[#allocation2 + $0x80] sm:$0xff] %vm651, %v2506
  %2586 = vst.msk [vmem:[#allocation2 + $0x88] sm:$0xff] %vm651, %v2508
  %2587 = vst.msk [vmem:[#allocation2 + $0x90] sm:$0xff] %vm651, %v2510
  %2588 = vst.msk [vmem:[#allocation2 + $0x98] sm:$0xff] %vm651, %v2512
  %2589 = vst.msk [vmem:[#allocation2 + $0xa0] sm:$0xff] %vm651, %v2514
  %2590 = vst.msk [vmem:[#allocation2 + $0xa8] sm:$0xff] %vm651, %v2516
  %2591 = vst.msk [vmem:[#allocation2 + $0xb0] sm:$0xff] %vm651, %v2518
  %2592 = vst.msk [vmem:[#allocation2 + $0xb8] sm:$0xff] %vm651, %v2520
  %2593 = vst.msk [vmem:[#allocation2 + $0xc0] sm:$0xff] %vm651, %v2522
  %2594 = vst.msk [vmem:[#allocation2 + $0xc8] sm:$0xff] %vm651, %v2524
  %2595 = vst.msk [vmem:[#allocation2 + $0xd0] sm:$0xff] %vm651, %v2526
  %2596 = vst.msk [vmem:[#allocation2 + $0xd8] sm:$0xff] %vm651, %v2528
  %2597 = vst.msk [vmem:[#allocation2 + $0xe0] sm:$0xff] %vm651, %v2530
  %2598 = vst.msk [vmem:[#allocation2 + $0xe8] sm:$0xff] %vm651, %v2532
  %2599 = vst.msk [vmem:[#allocation2 + $0xf0] sm:$0xff] %vm651, %v2534
  %2600 = vst.msk [vmem:[#allocation2 + $0xf8] sm:$0xff] %vm651, %v2536
  %v2601 = vsel %vm1377, %v1765, 0.0
  %v2602 = vsel %vm1378, %v1764, 0.0
  %v2603 = vsel %vm1377, %v1763, 0.0
  %v2604 = vsel %vm1378, %v1762, 0.0
  %v2605 = vsel %vm1377, %v1761, 0.0
  %v2606 = vsel %vm1378, %v1760, 0.0
  %v2607 = vsel %vm1377, %v1759, 0.0
  %v2608 = vsel %vm1378, %v1758, 0.0
  %v2609 = vsel %vm1377, %v1757, 0.0
  %v2610 = vsel %vm1378, %v1756, 0.0
  %v2611 = vsel %vm1377, %v1755, 0.0
  %v2612 = vsel %vm1378, %v1754, 0.0
  %v2613 = vsel %vm1377, %v1753, 0.0
  %v2614 = vsel %vm1378, %v1752, 0.0
  %v2615 = vsel %vm1377, %v1751, 0.0
  %v2616 = vsel %vm1378, %v1750, 0.0
  %v2617 = vsel %vm1377, %v1749, 0.0
  %v2618 = vsel %vm1378, %v1748, 0.0
  %v2619 = vsel %vm1377, %v1747, 0.0
  %v2620 = vsel %vm1378, %v1746, 0.0
  %v2621 = vsel %vm1377, %v1745, 0.0
  %v2622 = vsel %vm1378, %v1744, 0.0
  %v2623 = vsel %vm1377, %v1743, 0.0
  %v2624 = vsel %vm1378, %v1742, 0.0
  %v2625 = vsel %vm1377, %v1741, 0.0
  %v2626 = vsel %vm1378, %v1740, 0.0
  %v2627 = vsel %vm1377, %v1739, 0.0
  %v2628 = vsel %vm1378, %v1738, 0.0
  %v2629 = vsel %vm1377, %v1737, 0.0
  %v2630 = vsel %vm1378, %v1736, 0.0
  %v2631 = vsel %vm1377, %v1735, 0.0
  %v2632 = vsel %vm1378, %v1734, 0.0
  %v2633 = vsel %vm1377, %v1733, 0.0
  %v2634 = vsel %vm1378, %v1732, 0.0
  %v2635 = vsel %vm1377, %v1731, 0.0
  %v2636 = vsel %vm1378, %v1730, 0.0
  %v2637 = vsel %vm1377, %v1729, 0.0
  %v2638 = vsel %vm1378, %v1728, 0.0
  %v2639 = vsel %vm1377, %v1727, 0.0
  %v2640 = vsel %vm1378, %v1726, 0.0
  %v2641 = vsel %vm1377, %v1725, 0.0
  %v2642 = vsel %vm1378, %v1724, 0.0
  %v2643 = vsel %vm1377, %v1723, 0.0
  %v2644 = vsel %vm1378, %v1722, 0.0
  %v2645 = vsel %vm1377, %v1721, 0.0
  %v2646 = vsel %vm1378, %v1720, 0.0
  %v2647 = vsel %vm1377, %v1719, 0.0
  %v2648 = vsel %vm1378, %v1718, 0.0
  %v2649 = vsel %vm1377, %v1717, 0.0
  %v2650 = vsel %vm1378, %v1716, 0.0
  %v2651 = vsel %vm1377, %v1715, 0.0
  %v2652 = vsel %vm1378, %v1714, 0.0
  %v2653 = vsel %vm1377, %v1713, 0.0
  %v2654 = vsel %vm1378, %v1712, 0.0
  %v2655 = vsel %vm1377, %v1711, 0.0
  %v2656 = vsel %vm1378, %v1710, 0.0
  %v2657 = vsel %vm1377, %v1709, 0.0
  %v2658 = vsel %vm1378, %v1708, 0.0
  %v2659 = vsel %vm1377, %v1707, 0.0
  %v2660 = vsel %vm1378, %v1706, 0.0
  %v2661 = vsel %vm1377, %v1705, 0.0
  %v2662 = vsel %vm1378, %v1704, 0.0
  %v2663 = vsel %vm1377, %v1703, 0.0
  %v2664 = vsel %vm1378, %v1702, 0.0
  %v2665 = vpack.c.bf16 %v2602, %v2601
  %v2666 = vpack.c.bf16 %v2604, %v2603
  %v2667 = vpack.c.bf16 %v2606, %v2605
  %v2668 = vpack.c.bf16 %v2608, %v2607
  %v2669 = vpack.c.bf16 %v2610, %v2609
  %v2670 = vpack.c.bf16 %v2612, %v2611
  %v2671 = vpack.c.bf16 %v2614, %v2613
  %v2672 = vpack.c.bf16 %v2616, %v2615
  %v2673 = vpack.c.bf16 %v2618, %v2617
  %v2674 = vpack.c.bf16 %v2620, %v2619
  %v2675 = vpack.c.bf16 %v2622, %v2621
  %v2676 = vpack.c.bf16 %v2624, %v2623
  %v2677 = vpack.c.bf16 %v2626, %v2625
  %v2678 = vpack.c.bf16 %v2628, %v2627
  %v2679 = vpack.c.bf16 %v2630, %v2629
  %v2680 = vpack.c.bf16 %v2632, %v2631
  %v2681 = vpack.c.bf16 %v2634, %v2633
  %v2682 = vpack.c.bf16 %v2636, %v2635
  %v2683 = vpack.c.bf16 %v2638, %v2637
  %v2684 = vpack.c.bf16 %v2640, %v2639
  %v2685 = vpack.c.bf16 %v2642, %v2641
  %v2686 = vpack.c.bf16 %v2644, %v2643
  %v2687 = vpack.c.bf16 %v2646, %v2645
  %v2688 = vpack.c.bf16 %v2648, %v2647
  %v2689 = vpack.c.bf16 %v2650, %v2649
  %v2690 = vpack.c.bf16 %v2652, %v2651
  %v2691 = vpack.c.bf16 %v2654, %v2653
  %v2692 = vpack.c.bf16 %v2656, %v2655
  %v2693 = vpack.c.bf16 %v2658, %v2657
  %v2694 = vpack.c.bf16 %v2660, %v2659
  %v2695 = vpack.c.bf16 %v2662, %v2661
  %v2696 = vpack.c.bf16 %v2664, %v2663
  %2729 = vrot.lane.b32.xlu0 %v2665, 24
  %v2730 = vpop.permute.xlu0 %2729
  %2731 = vrot.lane.b32.xlu0 %v2666, 24
  %v2732 = vpop.permute.xlu0 %2731
  %2733 = vrot.lane.b32.xlu0 %v2667, 24
  %v2734 = vpop.permute.xlu0 %2733
  %2735 = vrot.lane.b32.xlu0 %v2668, 24
  %v2736 = vpop.permute.xlu0 %2735
  %2737 = vrot.lane.b32.xlu0 %v2669, 24
  %v2738 = vpop.permute.xlu0 %2737
  %2739 = vrot.lane.b32.xlu0 %v2670, 24
  %v2740 = vpop.permute.xlu0 %2739
  %2741 = vrot.lane.b32.xlu0 %v2671, 24
  %v2742 = vpop.permute.xlu0 %2741
  %2743 = vrot.lane.b32.xlu0 %v2672, 24
  %v2744 = vpop.permute.xlu0 %2743
  %2745 = vrot.lane.b32.xlu0 %v2673, 24
  %v2746 = vpop.permute.xlu0 %2745
  %2747 = vrot.lane.b32.xlu0 %v2674, 24
  %v2748 = vpop.permute.xlu0 %2747
  %2749 = vrot.lane.b32.xlu0 %v2675, 24
  %v2750 = vpop.permute.xlu0 %2749
  %2751 = vrot.lane.b32.xlu0 %v2676, 24
  %v2752 = vpop.permute.xlu0 %2751
  %2753 = vrot.lane.b32.xlu0 %v2677, 24
  %v2754 = vpop.permute.xlu0 %2753
  %2755 = vrot.lane.b32.xlu0 %v2678, 24
  %v2756 = vpop.permute.xlu0 %2755
  %2757 = vrot.lane.b32.xlu0 %v2679, 24
  %v2758 = vpop.permute.xlu0 %2757
  %2759 = vrot.lane.b32.xlu0 %v2680, 24
  %v2760 = vpop.permute.xlu0 %2759
  %2761 = vrot.lane.b32.xlu0 %v2681, 24
  %v2762 = vpop.permute.xlu0 %2761
  %2763 = vrot.lane.b32.xlu0 %v2682, 24
  %v2764 = vpop.permute.xlu0 %2763
  %2765 = vrot.lane.b32.xlu0 %v2683, 24
  %v2766 = vpop.permute.xlu0 %2765
  %2767 = vrot.lane.b32.xlu0 %v2684, 24
  %v2768 = vpop.permute.xlu0 %2767
  %2769 = vrot.lane.b32.xlu0 %v2685, 24
  %v2770 = vpop.permute.xlu0 %2769
  %2771 = vrot.lane.b32.xlu0 %v2686, 24
  %v2772 = vpop.permute.xlu0 %2771
  %2773 = vrot.lane.b32.xlu0 %v2687, 24
  %v2774 = vpop.permute.xlu0 %2773
  %2775 = vrot.lane.b32.xlu0 %v2688, 24
  %v2776 = vpop.permute.xlu0 %2775
  %2777 = vrot.lane.b32.xlu0 %v2689, 24
  %v2778 = vpop.permute.xlu0 %2777
  %2779 = vrot.lane.b32.xlu0 %v2690, 24
  %v2780 = vpop.permute.xlu0 %2779
  %2781 = vrot.lane.b32.xlu0 %v2691, 24
  %v2782 = vpop.permute.xlu0 %2781
  %2783 = vrot.lane.b32.xlu0 %v2692, 24
  %v2784 = vpop.permute.xlu0 %2783
  %2785 = vrot.lane.b32.xlu0 %v2693, 24
  %v2786 = vpop.permute.xlu0 %2785
  %2787 = vrot.lane.b32.xlu0 %v2694, 24
  %v2788 = vpop.permute.xlu0 %2787
  %2789 = vrot.lane.b32.xlu0 %v2695, 24
  %v2790 = vpop.permute.xlu0 %2789
  %2791 = vrot.lane.b32.xlu0 %v2696, 24
  %v2792 = vpop.permute.xlu0 %2791
  %vm2825 = vcmask 261312
  %2826 = vst.msk [vmem:[#allocation2] sm:$0xff] %vm2825, %v2730
  %2827 = vst.msk [vmem:[#allocation2 + $0x8] sm:$0xff] %vm2825, %v2732
  %2828 = vst.msk [vmem:[#allocation2 + $0x10] sm:$0xff] %vm2825, %v2734
  %2829 = vst.msk [vmem:[#allocation2 + $0x18] sm:$0xff] %vm2825, %v2736
  %2830 = vst.msk [vmem:[#allocation2 + $0x20] sm:$0xff] %vm2825, %v2738
  %2831 = vst.msk [vmem:[#allocation2 + $0x28] sm:$0xff] %vm2825, %v2740
  %2832 = vst.msk [vmem:[#allocation2 + $0x30] sm:$0xff] %vm2825, %v2742
  %2833 = vst.msk [vmem:[#allocation2 + $0x38] sm:$0xff] %vm2825, %v2744
  %2834 = vst.msk [vmem:[#allocation2 + $0x40] sm:$0xff] %vm2825, %v2746
  %2835 = vst.msk [vmem:[#allocation2 + $0x48] sm:$0xff] %vm2825, %v2748
  %2836 = vst.msk [vmem:[#allocation2 + $0x50] sm:$0xff] %vm2825, %v2750
  %2837 = vst.msk [vmem:[#allocation2 + $0x58] sm:$0xff] %vm2825, %v2752
  %2838 = vst.msk [vmem:[#allocation2 + $0x60] sm:$0xff] %vm2825, %v2754
  %2839 = vst.msk [vmem:[#allocation2 + $0x68] sm:$0xff] %vm2825, %v2756
  %2840 = vst.msk [vmem:[#allocation2 + $0x70] sm:$0xff] %vm2825, %v2758
  %2841 = vst.msk [vmem:[#allocation2 + $0x78] sm:$0xff] %vm2825, %v2760
  %2842 = vst.msk [vmem:[#allocation2 + $0x80] sm:$0xff] %vm2825, %v2762
  %2843 = vst.msk [vmem:[#allocation2 + $0x88] sm:$0xff] %vm2825, %v2764
  %2844 = vst.msk [vmem:[#allocation2 + $0x90] sm:$0xff] %vm2825, %v2766
  %2845 = vst.msk [vmem:[#allocation2 + $0x98] sm:$0xff] %vm2825, %v2768
  %2846 = vst.msk [vmem:[#allocation2 + $0xa0] sm:$0xff] %vm2825, %v2770
  %2847 = vst.msk [vmem:[#allocation2 + $0xa8] sm:$0xff] %vm2825, %v2772
  %2848 = vst.msk [vmem:[#allocation2 + $0xb0] sm:$0xff] %vm2825, %v2774
  %2849 = vst.msk [vmem:[#allocation2 + $0xb8] sm:$0xff] %vm2825, %v2776
  %2850 = vst.msk [vmem:[#allocation2 + $0xc0] sm:$0xff] %vm2825, %v2778
  %2851 = vst.msk [vmem:[#allocation2 + $0xc8] sm:$0xff] %vm2825, %v2780
  %2852 = vst.msk [vmem:[#allocation2 + $0xd0] sm:$0xff] %vm2825, %v2782
  %2853 = vst.msk [vmem:[#allocation2 + $0xd8] sm:$0xff] %vm2825, %v2784
  %2854 = vst.msk [vmem:[#allocation2 + $0xe0] sm:$0xff] %vm2825, %v2786
  %2855 = vst.msk [vmem:[#allocation2 + $0xe8] sm:$0xff] %vm2825, %v2788
  %2856 = vst.msk [vmem:[#allocation2 + $0xf0] sm:$0xff] %vm2825, %v2790
  %2857 = vst.msk [vmem:[#allocation2 + $0xf8] sm:$0xff] %vm2825, %v2792
  %v2858 = vpack.c.bf16 %v1217, %v1216
  %v2859 = vpack.c.bf16 %v1219, %v1218
  %v2860 = vpack.c.bf16 %v1221, %v1220
  %v2861 = vpack.c.bf16 %v1223, %v1222
  %v2862 = vpack.c.bf16 %v1225, %v1224
  %v2863 = vpack.c.bf16 %v1227, %v1226
  %v2864 = vpack.c.bf16 %v1229, %v1228
  %v2865 = vpack.c.bf16 %v1231, %v1230
  %v2866 = vpack.c.bf16 %v1233, %v1232
  %v2867 = vpack.c.bf16 %v1235, %v1234
  %v2868 = vpack.c.bf16 %v1237, %v1236
  %v2869 = vpack.c.bf16 %v1239, %v1238
  %v2870 = vpack.c.bf16 %v1241, %v1240
  %v2871 = vpack.c.bf16 %v1243, %v1242
  %v2872 = vpack.c.bf16 %v1245, %v1244
  %v2873 = vpack.c.bf16 %v1247, %v1246
  %v2874 = vpack.c.bf16 %v1249, %v1248
  %v2875 = vpack.c.bf16 %v1251, %v1250
  %v2876 = vpack.c.bf16 %v1253, %v1252
  %v2877 = vpack.c.bf16 %v1255, %v1254
  %v2878 = vpack.c.bf16 %v1257, %v1256
  %v2879 = vpack.c.bf16 %v1259, %v1258
  %v2880 = vpack.c.bf16 %v1261, %v1260
  %v2881 = vpack.c.bf16 %v1263, %v1262
  %v2882 = vpack.c.bf16 %v1265, %v1264
  %v2883 = vpack.c.bf16 %v1267, %v1266
  %v2884 = vpack.c.bf16 %v1269, %v1268
  %v2885 = vpack.c.bf16 %v1271, %v1270
  %v2886 = vpack.c.bf16 %v1273, %v1272
  %v2887 = vpack.c.bf16 %v1275, %v1274
  %v2888 = vpack.c.bf16 %v1277, %v1276
  %v2889 = vpack.c.bf16 %v1279, %v1278
  %2922 = vrot.lane.b32.xlu0 %v2858, 16
  %v2923 = vpop.permute.xlu0 %2922
  %2924 = vrot.lane.b32.xlu0 %v2859, 16
  %v2925 = vpop.permute.xlu0 %2924
  %2926 = vrot.lane.b32.xlu0 %v2860, 16
  %v2927 = vpop.permute.xlu0 %2926
  %2928 = vrot.lane.b32.xlu0 %v2861, 16
  %v2929 = vpop.permute.xlu0 %2928
  %2930 = vrot.lane.b32.xlu0 %v2862, 16
  %v2931 = vpop.permute.xlu0 %2930
  %2932 = vrot.lane.b32.xlu0 %v2863, 16
  %v2933 = vpop.permute.xlu0 %2932
  %2934 = vrot.lane.b32.xlu0 %v2864, 16
  %v2935 = vpop.permute.xlu0 %2934
  %2936 = vrot.lane.b32.xlu0 %v2865, 16
  %v2937 = vpop.permute.xlu0 %2936
  %2938 = vrot.lane.b32.xlu0 %v2866, 16
  %v2939 = vpop.permute.xlu0 %2938
  %2940 = vrot.lane.b32.xlu0 %v2867, 16
  %v2941 = vpop.permute.xlu0 %2940
  %2942 = vrot.lane.b32.xlu0 %v2868, 16
  %v2943 = vpop.permute.xlu0 %2942
  %2944 = vrot.lane.b32.xlu0 %v2869, 16
  %v2945 = vpop.permute.xlu0 %2944
  %2946 = vrot.lane.b32.xlu0 %v2870, 16
  %v2947 = vpop.permute.xlu0 %2946
  %2948 = vrot.lane.b32.xlu0 %v2871, 16
  %v2949 = vpop.permute.xlu0 %2948
  %2950 = vrot.lane.b32.xlu0 %v2872, 16
  %v2951 = vpop.permute.xlu0 %2950
  %2952 = vrot.lane.b32.xlu0 %v2873, 16
  %v2953 = vpop.permute.xlu0 %2952
  %2954 = vrot.lane.b32.xlu0 %v2874, 16
  %v2955 = vpop.permute.xlu0 %2954
  %2956 = vrot.lane.b32.xlu0 %v2875, 16
  %v2957 = vpop.permute.xlu0 %2956
  %2958 = vrot.lane.b32.xlu0 %v2876, 16
  %v2959 = vpop.permute.xlu0 %2958
  %2960 = vrot.lane.b32.xlu0 %v2877, 16
  %v2961 = vpop.permute.xlu0 %2960
  %2962 = vrot.lane.b32.xlu0 %v2878, 16
  %v2963 = vpop.permute.xlu0 %2962
  %2964 = vrot.lane.b32.xlu0 %v2879, 16
  %v2965 = vpop.permute.xlu0 %2964
  %2966 = vrot.lane.b32.xlu0 %v2880, 16
  %v2967 = vpop.permute.xlu0 %2966
  %2968 = vrot.lane.b32.xlu0 %v2881, 16
  %v2969 = vpop.permute.xlu0 %2968
  %2970 = vrot.lane.b32.xlu0 %v2882, 16
  %v2971 = vpop.permute.xlu0 %2970
  %2972 = vrot.lane.b32.xlu0 %v2883, 16
  %v2973 = vpop.permute.xlu0 %2972
  %2974 = vrot.lane.b32.xlu0 %v2884, 16
  %v2975 = vpop.permute.xlu0 %2974
  %2976 = vrot.lane.b32.xlu0 %v2885, 16
  %v2977 = vpop.permute.xlu0 %2976
  %2978 = vrot.lane.b32.xlu0 %v2886, 16
  %v2979 = vpop.permute.xlu0 %2978
  %2980 = vrot.lane.b32.xlu0 %v2887, 16
  %v2981 = vpop.permute.xlu0 %2980
  %2982 = vrot.lane.b32.xlu0 %v2888, 16
  %v2983 = vpop.permute.xlu0 %2982
  %2984 = vrot.lane.b32.xlu0 %v2889, 16
  %v2985 = vpop.permute.xlu0 %2984
  %vm3018 = vcmask 326912
  %3019 = vst.msk [vmem:[#allocation2] sm:$0xff] %vm3018, %v2923
  %3020 = vst.msk [vmem:[#allocation2 + $0x8] sm:$0xff] %vm3018, %v2925
  %3021 = vst.msk [vmem:[#allocation2 + $0x10] sm:$0xff] %vm3018, %v2927
  %3022 = vst.msk [vmem:[#allocation2 + $0x18] sm:$0xff] %vm3018, %v2929
  %3023 = vst.msk [vmem:[#allocation2 + $0x20] sm:$0xff] %vm3018, %v2931
  %3024 = vst.msk [vmem:[#allocation2 + $0x28] sm:$0xff] %vm3018, %v2933
  %3025 = vst.msk [vmem:[#allocation2 + $0x30] sm:$0xff] %vm3018, %v2935
  %3026 = vst.msk [vmem:[#allocation2 + $0x38] sm:$0xff] %vm3018, %v2937
  %3027 = vst.msk [vmem:[#allocation2 + $0x40] sm:$0xff] %vm3018, %v2939
  %3028 = vst.msk [vmem:[#allocation2 + $0x48] sm:$0xff] %vm3018, %v2941
  %3029 = vst.msk [vmem:[#allocation2 + $0x50] sm:$0xff] %vm3018, %v2943
  %3030 = vst.msk [vmem:[#allocation2 + $0x58] sm:$0xff] %vm3018, %v2945
  %3031 = vst.msk [vmem:[#allocation2 + $0x60] sm:$0xff] %vm3018, %v2947
  %3032 = vst.msk [vmem:[#allocation2 + $0x68] sm:$0xff] %vm3018, %v2949
  %3033 = vst.msk [vmem:[#allocation2 + $0x70] sm:$0xff] %vm3018, %v2951
  %3034 = vst.msk [vmem:[#allocation2 + $0x78] sm:$0xff] %vm3018, %v2953
  %3035 = vst.msk [vmem:[#allocation2 + $0x80] sm:$0xff] %vm3018, %v2955
  %3036 = vst.msk [vmem:[#allocation2 + $0x88] sm:$0xff] %vm3018, %v2957
  %3037 = vst.msk [vmem:[#allocation2 + $0x90] sm:$0xff] %vm3018, %v2959
  %3038 = vst.msk [vmem:[#allocation2 + $0x98] sm:$0xff] %vm3018, %v2961
  %3039 = vst.msk [vmem:[#allocation2 + $0xa0] sm:$0xff] %vm3018, %v2963
  %3040 = vst.msk [vmem:[#allocation2 + $0xa8] sm:$0xff] %vm3018, %v2965
  %3041 = vst.msk [vmem:[#allocation2 + $0xb0] sm:$0xff] %vm3018, %v2967
  %3042 = vst.msk [vmem:[#allocation2 + $0xb8] sm:$0xff] %vm3018, %v2969
  %3043 = vst.msk [vmem:[#allocation2 + $0xc0] sm:$0xff] %vm3018, %v2971
  %3044 = vst.msk [vmem:[#allocation2 + $0xc8] sm:$0xff] %vm3018, %v2973
  %3045 = vst.msk [vmem:[#allocation2 + $0xd0] sm:$0xff] %vm3018, %v2975
  %3046 = vst.msk [vmem:[#allocation2 + $0xd8] sm:$0xff] %vm3018, %v2977
  %3047 = vst.msk [vmem:[#allocation2 + $0xe0] sm:$0xff] %vm3018, %v2979
  %3048 = vst.msk [vmem:[#allocation2 + $0xe8] sm:$0xff] %vm3018, %v2981
  %3049 = vst.msk [vmem:[#allocation2 + $0xf0] sm:$0xff] %vm3018, %v2983
  %3050 = vst.msk [vmem:[#allocation2 + $0xf8] sm:$0xff] %vm3018, %v2985
  %v3051 = vsel %vm1379, %v2311, 0.0
  %v3052 = vsel %vm1380, %v2310, 0.0
  %v3053 = vsel %vm1379, %v2309, 0.0
  %v3054 = vsel %vm1380, %v2308, 0.0
  %v3055 = vsel %vm1379, %v2307, 0.0
  %v3056 = vsel %vm1380, %v2306, 0.0
  %v3057 = vsel %vm1379, %v2305, 0.0
  %v3058 = vsel %vm1380, %v2304, 0.0
  %v3059 = vsel %vm1379, %v2303, 0.0
  %v3060 = vsel %vm1380, %v2302, 0.0
  %v3061 = vsel %vm1379, %v2301, 0.0
  %v3062 = vsel %vm1380, %v2300, 0.0
  %v3063 = vsel %vm1379, %v2299, 0.0
  %v3064 = vsel %vm1380, %v2298, 0.0
  %v3065 = vsel %vm1379, %v2297, 0.0
  %v3066 = vsel %vm1380, %v2296, 0.0
  %v3067 = vsel %vm1379, %v2295, 0.0
  %v3068 = vsel %vm1380, %v2294, 0.0
  %v3069 = vsel %vm1379, %v2293, 0.0
  %v3070 = vsel %vm1380, %v2292, 0.0
  %v3071 = vsel %vm1379, %v2291, 0.0
  %v3072 = vsel %vm1380, %v2290, 0.0
  %v3073 = vsel %vm1379, %v2289, 0.0
  %v3074 = vsel %vm1380, %v2288, 0.0
  %v3075 = vsel %vm1379, %v2287, 0.0
  %v3076 = vsel %vm1380, %v2286, 0.0
  %v3077 = vsel %vm1379, %v2285, 0.0
  %v3078 = vsel %vm1380, %v2284, 0.0
  %v3079 = vsel %vm1379, %v2283, 0.0
  %v3080 = vsel %vm1380, %v2282, 0.0
  %v3081 = vsel %vm1379, %v2281, 0.0
  %v3082 = vsel %vm1380, %v2280, 0.0
  %v3083 = vsel %vm1379, %v2279, 0.0
  %v3084 = vsel %vm1380, %v2278, 0.0
  %v3085 = vsel %vm1379, %v2277, 0.0
  %v3086 = vsel %vm1380, %v2276, 0.0
  %v3087 = vsel %vm1379, %v2275, 0.0
  %v3088 = vsel %vm1380, %v2274, 0.0
  %v3089 = vsel %vm1379, %v2273, 0.0
  %v3090 = vsel %vm1380, %v2272, 0.0
  %v3091 = vsel %vm1379, %v2271, 0.0
  %v3092 = vsel %vm1380, %v2270, 0.0
  %v3093 = vsel %vm1379, %v2269, 0.0
  %v3094 = vsel %vm1380, %v2268, 0.0
  %v3095 = vsel %vm1379, %v2267, 0.0
  %v3096 = vsel %vm1380, %v2266, 0.0
  %v3097 = vsel %vm1379, %v2265, 0.0
  %v3098 = vsel %vm1380, %v2264, 0.0
  %v3099 = vsel %vm1379, %v2263, 0.0
  %v3100 = vsel %vm1380, %v2262, 0.0
  %v3101 = vsel %vm1379, %v2261, 0.0
  %v3102 = vsel %vm1380, %v2260, 0.0
  %v3103 = vsel %vm1379, %v2259, 0.0
  %v3104 = vsel %vm1380, %v2258, 0.0
  %v3105 = vsel %vm1379, %v2257, 0.0
  %v3106 = vsel %vm1380, %v2256, 0.0
  %v3107 = vsel %vm1379, %v2255, 0.0
  %v3108 = vsel %vm1380, %v2254, 0.0
  %v3109 = vsel %vm1379, %v2253, 0.0
  %v3110 = vsel %vm1380, %v2252, 0.0
  %v3111 = vsel %vm1379, %v2251, 0.0
  %v3112 = vsel %vm1380, %v2250, 0.0
  %v3113 = vsel %vm1379, %v2249, 0.0
  %v3114 = vsel %vm1380, %v2312, 0.0
  %v3115 = vpack.c.bf16 %v3052, %v3051
  %v3116 = vpack.c.bf16 %v3054, %v3053
  %v3117 = vpack.c.bf16 %v3056, %v3055
  %v3118 = vpack.c.bf16 %v3058, %v3057
  %v3119 = vpack.c.bf16 %v3060, %v3059
  %v3120 = vpack.c.bf16 %v3062, %v3061
  %v3121 = vpack.c.bf16 %v3064, %v3063
  %v3122 = vpack.c.bf16 %v3066, %v3065
  %v3123 = vpack.c.bf16 %v3068, %v3067
  %v3124 = vpack.c.bf16 %v3070, %v3069
  %v3125 = vpack.c.bf16 %v3072, %v3071
  %v3126 = vpack.c.bf16 %v3074, %v3073
  %v3127 = vpack.c.bf16 %v3076, %v3075
  %v3128 = vpack.c.bf16 %v3078, %v3077
  %v3129 = vpack.c.bf16 %v3080, %v3079
  %v3130 = vpack.c.bf16 %v3082, %v3081
  %v3131 = vpack.c.bf16 %v3084, %v3083
  %v3132 = vpack.c.bf16 %v3086, %v3085
  %v3133 = vpack.c.bf16 %v3088, %v3087
  %v3134 = vpack.c.bf16 %v3090, %v3089
  %v3135 = vpack.c.bf16 %v3092, %v3091
  %v3136 = vpack.c.bf16 %v3094, %v3093
  %v3137 = vpack.c.bf16 %v3096, %v3095
  %v3138 = vpack.c.bf16 %v3098, %v3097
  %v3139 = vpack.c.bf16 %v3100, %v3099
  %v3140 = vpack.c.bf16 %v3102, %v3101
  %v3141 = vpack.c.bf16 %v3104, %v3103
  %v3142 = vpack.c.bf16 %v3106, %v3105
  %v3143 = vpack.c.bf16 %v3108, %v3107
  %v3144 = vpack.c.bf16 %v3110, %v3109
  %v3145 = vpack.c.bf16 %v3112, %v3111
  %v3146 = vpack.c.bf16 %v3114, %v3113
  %3179 = vrot.lane.b32.xlu0 %v3115, 40
  %v3180 = vpop.permute.xlu0 %3179
  %3181 = vrot.lane.b32.xlu0 %v3116, 40
  %v3182 = vpop.permute.xlu0 %3181
  %3183 = vrot.lane.b32.xlu0 %v3117, 40
  %v3184 = vpop.permute.xlu0 %3183
  %3185 = vrot.lane.b32.xlu0 %v3118, 40
  %v3186 = vpop.permute.xlu0 %3185
  %3187 = vrot.lane.b32.xlu0 %v3119, 40
  %v3188 = vpop.permute.xlu0 %3187
  %3189 = vrot.lane.b32.xlu0 %v3120, 40
  %v3190 = vpop.permute.xlu0 %3189
  %3191 = vrot.lane.b32.xlu0 %v3121, 40
  %v3192 = vpop.permute.xlu0 %3191
  %3193 = vrot.lane.b32.xlu0 %v3122, 40
  %v3194 = vpop.permute.xlu0 %3193
  %3195 = vrot.lane.b32.xlu0 %v3123, 40
  %v3196 = vpop.permute.xlu0 %3195
  %3197 = vrot.lane.b32.xlu0 %v3124, 40
  %v3198 = vpop.permute.xlu0 %3197
  %3199 = vrot.lane.b32.xlu0 %v3125, 40
  %v3200 = vpop.permute.xlu0 %3199
  %3201 = vrot.lane.b32.xlu0 %v3126, 40
  %v3202 = vpop.permute.xlu0 %3201
  %3203 = vrot.lane.b32.xlu0 %v3127, 40
  %v3204 = vpop.permute.xlu0 %3203
  %3205 = vrot.lane.b32.xlu0 %v3128, 40
  %v3206 = vpop.permute.xlu0 %3205
  %3207 = vrot.lane.b32.xlu0 %v3129, 40
  %v3208 = vpop.permute.xlu0 %3207
  %3209 = vrot.lane.b32.xlu0 %v3130, 40
  %v3210 = vpop.permute.xlu0 %3209
  %3211 = vrot.lane.b32.xlu0 %v3131, 40
  %v3212 = vpop.permute.xlu0 %3211
  %3213 = vrot.lane.b32.xlu0 %v3132, 40
  %v3214 = vpop.permute.xlu0 %3213
  %3215 = vrot.lane.b32.xlu0 %v3133, 40
  %v3216 = vpop.permute.xlu0 %3215
  %3217 = vrot.lane.b32.xlu0 %v3134, 40
  %v3218 = vpop.permute.xlu0 %3217
  %3219 = vrot.lane.b32.xlu0 %v3135, 40
  %v3220 = vpop.permute.xlu0 %3219
  %3221 = vrot.lane.b32.xlu0 %v3136, 40
  %v3222 = vpop.permute.xlu0 %3221
  %3223 = vrot.lane.b32.xlu0 %v3137, 40
  %v3224 = vpop.permute.xlu0 %3223
  %3225 = vrot.lane.b32.xlu0 %v3138, 40
  %v3226 = vpop.permute.xlu0 %3225
  %3227 = vrot.lane.b32.xlu0 %v3139, 40
  %v3228 = vpop.permute.xlu0 %3227
  %3229 = vrot.lane.b32.xlu0 %v3140, 40
  %v3230 = vpop.permute.xlu0 %3229
  %3231 = vrot.lane.b32.xlu0 %v3141, 40
  %v3232 = vpop.permute.xlu0 %3231
  %3233 = vrot.lane.b32.xlu0 %v3142, 40
  %v3234 = vpop.permute.xlu0 %3233
  %3235 = vrot.lane.b32.xlu0 %v3143, 40
  %v3236 = vpop.permute.xlu0 %3235
  %3237 = vrot.lane.b32.xlu0 %v3144, 40
  %v3238 = vpop.permute.xlu0 %3237
  %3239 = vrot.lane.b32.xlu0 %v3145, 40
  %v3240 = vpop.permute.xlu0 %3239
  %3241 = vrot.lane.b32.xlu0 %v3146, 40
  %v3242 = vpop.permute.xlu0 %3241
  %vm3275 = vcmask 392512
  %3276 = vst.msk [vmem:[#allocation2] sm:$0xff] %vm3275, %v3180
  %3277 = vst.msk [vmem:[#allocation2 + $0x8] sm:$0xff] %vm3275, %v3182
  %3278 = vst.msk [vmem:[#allocation2 + $0x10] sm:$0xff] %vm3275, %v3184
  %3279 = vst.msk [vmem:[#allocation2 + $0x18] sm:$0xff] %vm3275, %v3186
  %3280 = vst.msk [vmem:[#allocation2 + $0x20] sm:$0xff] %vm3275, %v3188
  %3281 = vst.msk [vmem:[#allocation2 + $0x28] sm:$0xff] %vm3275, %v3190
  %3282 = vst.msk [vmem:[#allocation2 + $0x30] sm:$0xff] %vm3275, %v3192
  %3283 = vst.msk [vmem:[#allocation2 + $0x38] sm:$0xff] %vm3275, %v3194
  %3284 = vst.msk [vmem:[#allocation2 + $0x40] sm:$0xff] %vm3275, %v3196
  %3285 = vst.msk [vmem:[#allocation2 + $0x48] sm:$0xff] %vm3275, %v3198
  %3286 = vst.msk [vmem:[#allocation2 + $0x50] sm:$0xff] %vm3275, %v3200
  %3287 = vst.msk [vmem:[#allocation2 + $0x58] sm:$0xff] %vm3275, %v3202
  %3288 = vst.msk [vmem:[#allocation2 + $0x60] sm:$0xff] %vm3275, %v3204
  %3289 = vst.msk [vmem:[#allocation2 + $0x68] sm:$0xff] %vm3275, %v3206
  %3290 = vst.msk [vmem:[#allocation2 + $0x70] sm:$0xff] %vm3275, %v3208
  %3291 = vst.msk [vmem:[#allocation2 + $0x78] sm:$0xff] %vm3275, %v3210
  %3292 = vst.msk [vmem:[#allocation2 + $0x80] sm:$0xff] %vm3275, %v3212
  %3293 = vst.msk [vmem:[#allocation2 + $0x88] sm:$0xff] %vm3275, %v3214
  %3294 = vst.msk [vmem:[#allocation2 + $0x90] sm:$0xff] %vm3275, %v3216
  %3295 = vst.msk [vmem:[#allocation2 + $0x98] sm:$0xff] %vm3275, %v3218
  %3296 = vst.msk [vmem:[#allocation2 + $0xa0] sm:$0xff] %vm3275, %v3220
  %3297 = vst.msk [vmem:[#allocation2 + $0xa8] sm:$0xff] %vm3275, %v3222
  %3298 = vst.msk [vmem:[#allocation2 + $0xb0] sm:$0xff] %vm3275, %v3224
  %3299 = vst.msk [vmem:[#allocation2 + $0xb8] sm:$0xff] %vm3275, %v3226
  %3300 = vst.msk [vmem:[#allocation2 + $0xc0] sm:$0xff] %vm3275, %v3228
  %3301 = vst.msk [vmem:[#allocation2 + $0xc8] sm:$0xff] %vm3275, %v3230
  %3302 = vst.msk [vmem:[#allocation2 + $0xd0] sm:$0xff] %vm3275, %v3232
  %3303 = vst.msk [vmem:[#allocation2 + $0xd8] sm:$0xff] %vm3275, %v3234
  %3304 = vst.msk [vmem:[#allocation2 + $0xe0] sm:$0xff] %vm3275, %v3236
  %3305 = vst.msk [vmem:[#allocation2 + $0xe8] sm:$0xff] %vm3275, %v3238
  %3306 = vst.msk [vmem:[#allocation2 + $0xf0] sm:$0xff] %vm3275, %v3240
  %3307 = vst.msk [vmem:[#allocation2 + $0xf8] sm:$0xff] %vm3275, %v3242
  %vm3308 = vmand %vm1345, %vm1377
  %vm3309 = vmand %vm1346, %vm1378
  %vm3310 = vmand %vm1347, %vm1377
  %vm3311 = vmand %vm1348, %vm1378
  %vm3312 = vmand %vm1349, %vm1377
  %vm3313 = vmand %vm1350, %vm1378
  %vm3314 = vmand %vm1351, %vm1377
  %vm3315 = vmand %vm1352, %vm1378
  %vm3316 = vmand %vm1353, %vm1377
  %vm3317 = vmand %vm1354, %vm1378
  %vm3318 = vmand %vm1355, %vm1377
  %vm3319 = vmand %vm1356, %vm1378
  %vm3320 = vmand %vm1357, %vm1377
  %vm3321 = vmand %vm1358, %vm1378
  %vm3322 = vmand %vm1359, %vm1377
  %vm3323 = vmand %vm1360, %vm1378
  %vm3324 = vmand %vm1361, %vm1377
  %vm3325 = vmand %vm1362, %vm1378
  %vm3326 = vmand %vm1363, %vm1377
  %vm3327 = vmand %vm1364, %vm1378
  %vm3328 = vmand %vm1365, %vm1377
  %vm3329 = vmand %vm1366, %vm1378
  %vm3330 = vmand %vm1367, %vm1377
  %vm3331 = vmand %vm1368, %vm1378
  %vm3332 = vmand %vm1369, %vm1377
  %vm3333 = vmand %vm1370, %vm1378
  %vm3334 = vmand %vm1371, %vm1377
  %vm3335 = vmand %vm1372, %vm1378
  %vm3336 = vmand %vm1373, %vm1377
  %vm3337 = vmand %vm1374, %vm1378
  %vm3338 = vmand %vm1375, %vm1377
  %vm3339 = vmand %vm1376, %vm1378
  %v3340 = vsel %vm3308, %v1763, 0.0
  %v3341 = vsel %vm3309, %v1762, 0.0
  %v3342 = vsel %vm3310, %v1761, 0.0
  %v3343 = vsel %vm3311, %v1760, 0.0
  %v3344 = vsel %vm3312, %v1759, 0.0
  %v3345 = vsel %vm3313, %v1758, 0.0
  %v3346 = vsel %vm3314, %v1757, 0.0
  %v3347 = vsel %vm3315, %v1756, 0.0
  %v3348 = vsel %vm3316, %v1755, 0.0
  %v3349 = vsel %vm3317, %v1754, 0.0
  %v3350 = vsel %vm3318, %v1753, 0.0
  %v3351 = vsel %vm3319, %v1752, 0.0
  %v3352 = vsel %vm3320, %v1751, 0.0
  %v3353 = vsel %vm3321, %v1750, 0.0
  %v3354 = vsel %vm3322, %v1749, 0.0
  %v3355 = vsel %vm3323, %v1748, 0.0
  %v3356 = vsel %vm3324, %v1747, 0.0
  %v3357 = vsel %vm3325, %v1746, 0.0
  %v3358 = vsel %vm3326, %v1745, 0.0
  %v3359 = vsel %vm3327, %v1744, 0.0
  %v3360 = vsel %vm3328, %v1743, 0.0
  %v3361 = vsel %vm3329, %v1742, 0.0
  %v3362 = vsel %vm3330, %v1741, 0.0
  %v3363 = vsel %vm3331, %v1740, 0.0
  %v3364 = vsel %vm3332, %v1739, 0.0
  %v3365 = vsel %vm3333, %v1738, 0.0
  %v3366 = vsel %vm3334, %v1737, 0.0
  %v3367 = vsel %vm3335, %v1736, 0.0
  %v3368 = vsel %vm3336, %v1735, 0.0
  %v3369 = vsel %vm3337, %v1734, 0.0
  %v3370 = vsel %vm3338, %v1733, 0.0
  %v3371 = vsel %vm3339, %v1732, 0.0
  %v3372 = vsel %vm3308, %v1731, 0.0
  %v3373 = vsel %vm3309, %v1730, 0.0
  %v3374 = vsel %vm3310, %v1729, 0.0
  %v3375 = vsel %vm3311, %v1728, 0.0
  %v3376 = vsel %vm3312, %v1727, 0.0
  %v3377 = vsel %vm3313, %v1726, 0.0
  %v3378 = vsel %vm3314, %v1725, 0.0
  %v3379 = vsel %vm3315, %v1724, 0.0
  %v3380 = vsel %vm3316, %v1723, 0.0
  %v3381 = vsel %vm3317, %v1722, 0.0
  %v3382 = vsel %vm3318, %v1721, 0.0
  %v3383 = vsel %vm3319, %v1720, 0.0
  %v3384 = vsel %vm3320, %v1719, 0.0
  %v3385 = vsel %vm3321, %v1718, 0.0
  %v3386 = vsel %vm3322, %v1717, 0.0
  %v3387 = vsel %vm3323, %v1716, 0.0
  %v3388 = vsel %vm3324, %v1715, 0.0
  %v3389 = vsel %vm3325, %v1714, 0.0
  %v3390 = vsel %vm3326, %v1713, 0.0
  %v3391 = vsel %vm3327, %v1712, 0.0
  %v3392 = vsel %vm3328, %v1711, 0.0
  %v3393 = vsel %vm3329, %v1710, 0.0
  %v3394 = vsel %vm3330, %v1709, 0.0
  %v3395 = vsel %vm3331, %v1708, 0.0
  %v3396 = vsel %vm3332, %v1707, 0.0
  %v3397 = vsel %vm3333, %v1706, 0.0
  %v3398 = vsel %vm3334, %v1705, 0.0
  %v3399 = vsel %vm3335, %v1704, 0.0
  %v3400 = vsel %vm3336, %v1703, 0.0
  %v3401 = vsel %vm3337, %v1702, 0.0
  %v3402 = vsel %vm3338, %v1765, 0.0
  %v3403 = vsel %vm3339, %v1764, 0.0
  %v3404 = vpack.c.bf16 %v3341, %v3340
  %v3405 = vpack.c.bf16 %v3343, %v3342
  %v3406 = vpack.c.bf16 %v3345, %v3344
  %v3407 = vpack.c.bf16 %v3347, %v3346
  %v3408 = vpack.c.bf16 %v3349, %v3348
  %v3409 = vpack.c.bf16 %v3351, %v3350
  %v3410 = vpack.c.bf16 %v3353, %v3352
  %v3411 = vpack.c.bf16 %v3355, %v3354
  %v3412 = vpack.c.bf16 %v3357, %v3356
  %v3413 = vpack.c.bf16 %v3359, %v3358
  %v3414 = vpack.c.bf16 %v3361, %v3360
  %v3415 = vpack.c.bf16 %v3363, %v3362
  %v3416 = vpack.c.bf16 %v3365, %v3364
  %v3417 = vpack.c.bf16 %v3367, %v3366
  %v3418 = vpack.c.bf16 %v3369, %v3368
  %v3419 = vpack.c.bf16 %v3371, %v3370
  %v3420 = vpack.c.bf16 %v3373, %v3372
  %v3421 = vpack.c.bf16 %v3375, %v3374
  %v3422 = vpack.c.bf16 %v3377, %v3376
  %v3423 = vpack.c.bf16 %v3379, %v3378
  %v3424 = vpack.c.bf16 %v3381, %v3380
  %v3425 = vpack.c.bf16 %v3383, %v3382
  %v3426 = vpack.c.bf16 %v3385, %v3384
  %v3427 = vpack.c.bf16 %v3387, %v3386
  %v3428 = vpack.c.bf16 %v3389, %v3388
  %v3429 = vpack.c.bf16 %v3391, %v3390
  %v3430 = vpack.c.bf16 %v3393, %v3392
  %v3431 = vpack.c.bf16 %v3395, %v3394
  %v3432 = vpack.c.bf16 %v3397, %v3396
  %v3433 = vpack.c.bf16 %v3399, %v3398
  %v3434 = vpack.c.bf16 %v3401, %v3400
  %v3435 = vpack.c.bf16 %v3403, %v3402
  %3468 = vrot.lane.b32.xlu0 %v3404, 48
  %v3469 = vpop.permute.xlu0 %3468
  %3470 = vrot.lane.b32.xlu0 %v3405, 48
  %v3471 = vpop.permute.xlu0 %3470
  %3472 = vrot.lane.b32.xlu0 %v3406, 48
  %v3473 = vpop.permute.xlu0 %3472
  %3474 = vrot.lane.b32.xlu0 %v3407, 48
  %v3475 = vpop.permute.xlu0 %3474
  %3476 = vrot.lane.b32.xlu0 %v3408, 48
  %v3477 = vpop.permute.xlu0 %3476
  %3478 = vrot.lane.b32.xlu0 %v3409, 48
  %v3479 = vpop.permute.xlu0 %3478
  %3480 = vrot.lane.b32.xlu0 %v3410, 48
  %v3481 = vpop.permute.xlu0 %3480
  %3482 = vrot.lane.b32.xlu0 %v3411, 48
  %v3483 = vpop.permute.xlu0 %3482
  %3484 = vrot.lane.b32.xlu0 %v3412, 48
  %v3485 = vpop.permute.xlu0 %3484
  %3486 = vrot.lane.b32.xlu0 %v3413, 48
  %v3487 = vpop.permute.xlu0 %3486
  %3488 = vrot.lane.b32.xlu0 %v3414, 48
  %v3489 = vpop.permute.xlu0 %3488
  %3490 = vrot.lane.b32.xlu0 %v3415, 48
  %v3491 = vpop.permute.xlu0 %3490
  %3492 = vrot.lane.b32.xlu0 %v3416, 48
  %v3493 = vpop.permute.xlu0 %3492
  %3494 = vrot.lane.b32.xlu0 %v3417, 48
  %v3495 = vpop.permute.xlu0 %3494
  %3496 = vrot.lane.b32.xlu0 %v3418, 48
  %v3497 = vpop.permute.xlu0 %3496
  %3498 = vrot.lane.b32.xlu0 %v3419, 48
  %v3499 = vpop.permute.xlu0 %3498
  %3500 = vrot.lane.b32.xlu0 %v3420, 48
  %v3501 = vpop.permute.xlu0 %3500
  %3502 = vrot.lane.b32.xlu0 %v3421, 48
  %v3503 = vpop.permute.xlu0 %3502
  %3504 = vrot.lane.b32.xlu0 %v3422, 48
  %v3505 = vpop.permute.xlu0 %3504
  %3506 = vrot.lane.b32.xlu0 %v3423, 48
  %v3507 = vpop.permute.xlu0 %3506
  %3508 = vrot.lane.b32.xlu0 %v3424, 48
  %v3509 = vpop.permute.xlu0 %3508
  %3510 = vrot.lane.b32.xlu0 %v3425, 48
  %v3511 = vpop.permute.xlu0 %3510
  %3512 = vrot.lane.b32.xlu0 %v3426, 48
  %v3513 = vpop.permute.xlu0 %3512
  %3514 = vrot.lane.b32.xlu0 %v3427, 48
  %v3515 = vpop.permute.xlu0 %3514
  %3516 = vrot.lane.b32.xlu0 %v3428, 48
  %v3517 = vpop.permute.xlu0 %3516
  %3518 = vrot.lane.b32.xlu0 %v3429, 48
  %v3519 = vpop.permute.xlu0 %3518
  %3520 = vrot.lane.b32.xlu0 %v3430, 48
  %v3521 = vpop.permute.xlu0 %3520
  %3522 = vrot.lane.b32.xlu0 %v3431, 48
  %v3523 = vpop.permute.xlu0 %3522
  %3524 = vrot.lane.b32.xlu0 %v3432, 48
  %v3525 = vpop.permute.xlu0 %3524
  %3526 = vrot.lane.b32.xlu0 %v3433, 48
  %v3527 = vpop.permute.xlu0 %3526
  %3528 = vrot.lane.b32.xlu0 %v3434, 48
  %v3529 = vpop.permute.xlu0 %3528
  %3530 = vrot.lane.b32.xlu0 %v3435, 48
  %v3531 = vpop.permute.xlu0 %3530
  %vm3564 = vcmask 458112
  %3565 = vst.msk [vmem:[#allocation2] sm:$0xff] %vm3564, %v3469
  %3566 = vst.msk [vmem:[#allocation2 + $0x8] sm:$0xff] %vm3564, %v3471
  %3567 = vst.msk [vmem:[#allocation2 + $0x10] sm:$0xff] %vm3564, %v3473
  %3568 = vst.msk [vmem:[#allocation2 + $0x18] sm:$0xff] %vm3564, %v3475
  %3569 = vst.msk [vmem:[#allocation2 + $0x20] sm:$0xff] %vm3564, %v3477
  %3570 = vst.msk [vmem:[#allocation2 + $0x28] sm:$0xff] %vm3564, %v3479
  %3571 = vst.msk [vmem:[#allocation2 + $0x30] sm:$0xff] %vm3564, %v3481
  %3572 = vst.msk [vmem:[#allocation2 + $0x38] sm:$0xff] %vm3564, %v3483
  %3573 = vst.msk [vmem:[#allocation2 + $0x40] sm:$0xff] %vm3564, %v3485
  %3574 = vst.msk [vmem:[#allocation2 + $0x48] sm:$0xff] %vm3564, %v3487
  %3575 = vst.msk [vmem:[#allocation2 + $0x50] sm:$0xff] %vm3564, %v3489
  %3576 = vst.msk [vmem:[#allocation2 + $0x58] sm:$0xff] %vm3564, %v3491
  %3577 = vst.msk [vmem:[#allocation2 + $0x60] sm:$0xff] %vm3564, %v3493
  %3578 = vst.msk [vmem:[#allocation2 + $0x68] sm:$0xff] %vm3564, %v3495
  %3579 = vst.msk [vmem:[#allocation2 + $0x70] sm:$0xff] %vm3564, %v3497
  %3580 = vst.msk [vmem:[#allocation2 + $0x78] sm:$0xff] %vm3564, %v3499
  %3581 = vst.msk [vmem:[#allocation2 + $0x80] sm:$0xff] %vm3564, %v3501
  %3582 = vst.msk [vmem:[#allocation2 + $0x88] sm:$0xff] %vm3564, %v3503
  %3583 = vst.msk [vmem:[#allocation2 + $0x90] sm:$0xff] %vm3564, %v3505
  %3584 = vst.msk [vmem:[#allocation2 + $0x98] sm:$0xff] %vm3564, %v3507
  %3585 = vst.msk [vmem:[#allocation2 + $0xa0] sm:$0xff] %vm3564, %v3509
  %3586 = vst.msk [vmem:[#allocation2 + $0xa8] sm:$0xff] %vm3564, %v3511
  %3587 = vst.msk [vmem:[#allocation2 + $0xb0] sm:$0xff] %vm3564, %v3513
  %3588 = vst.msk [vmem:[#allocation2 + $0xb8] sm:$0xff] %vm3564, %v3515
  %3589 = vst.msk [vmem:[#allocation2 + $0xc0] sm:$0xff] %vm3564, %v3517
  %3590 = vst.msk [vmem:[#allocation2 + $0xc8] sm:$0xff] %vm3564, %v3519
  %3591 = vst.msk [vmem:[#allocation2 + $0xd0] sm:$0xff] %vm3564, %v3521
  %3592 = vst.msk [vmem:[#allocation2 + $0xd8] sm:$0xff] %vm3564, %v3523
  %3593 = vst.msk [vmem:[#allocation2 + $0xe0] sm:$0xff] %vm3564, %v3525
  %3594 = vst.msk [vmem:[#allocation2 + $0xe8] sm:$0xff] %vm3564, %v3527
  %3595 = vst.msk [vmem:[#allocation2 + $0xf0] sm:$0xff] %vm3564, %v3529
  %3596 = vst.msk [vmem:[#allocation2 + $0xf8] sm:$0xff] %vm3564, %v3531
  %v3597 = vsel %vm1345, %v1450, 0.0
  %v3598 = vsel %vm1346, %v1452, 0.0
  %v3599 = vsel %vm1347, %v1454, 0.0
  %v3600 = vsel %vm1348, %v1456, 0.0
  %v3601 = vsel %vm1349, %v1458, 0.0
  %v3602 = vsel %vm1350, %v1460, 0.0
  %v3603 = vsel %vm1351, %v1462, 0.0
  %v3604 = vsel %vm1352, %v1464, 0.0
  %v3605 = vsel %vm1353, %v1466, 0.0
  %v3606 = vsel %vm1354, %v1468, 0.0
  %v3607 = vsel %vm1355, %v1470, 0.0
  %v3608 = vsel %vm1356, %v1472, 0.0
  %v3609 = vsel %vm1357, %v1474, 0.0
  %v3610 = vsel %vm1358, %v1476, 0.0
  %v3611 = vsel %vm1359, %v1478, 0.0
  %v3612 = vsel %vm1360, %v1480, 0.0
  %v3613 = vsel %vm1361, %v1482, 0.0
  %v3614 = vsel %vm1362, %v1484, 0.0
  %v3615 = vsel %vm1363, %v1486, 0.0
  %v3616 = vsel %vm1364, %v1488, 0.0
  %v3617 = vsel %vm1365, %v1490, 0.0
  %v3618 = vsel %vm1366, %v1492, 0.0
  %v3619 = vsel %vm1367, %v1494, 0.0
  %v3620 = vsel %vm1368, %v1496, 0.0
  %v3621 = vsel %vm1369, %v1498, 0.0
  %v3622 = vsel %vm1370, %v1500, 0.0
  %v3623 = vsel %vm1371, %v1502, 0.0
  %v3624 = vsel %vm1372, %v1504, 0.0
  %v3625 = vsel %vm1373, %v1506, 0.0
  %v3626 = vsel %vm1374, %v1508, 0.0
  %v3627 = vsel %vm1375, %v1510, 0.0
  %v3628 = vsel %vm1376, %v1512, 0.0
  %v3629 = vsel %vm1345, %v1514, 0.0
  %v3630 = vsel %vm1346, %v1516, 0.0
  %v3631 = vsel %vm1347, %v1518, 0.0
  %v3632 = vsel %vm1348, %v1520, 0.0
  %v3633 = vsel %vm1349, %v1522, 0.0
  %v3634 = vsel %vm1350, %v1524, 0.0
  %v3635 = vsel %vm1351, %v1526, 0.0
  %v3636 = vsel %vm1352, %v1528, 0.0
  %v3637 = vsel %vm1353, %v1530, 0.0
  %v3638 = vsel %vm1354, %v1532, 0.0
  %v3639 = vsel %vm1355, %v1534, 0.0
  %v3640 = vsel %vm1356, %v1536, 0.0
  %v3641 = vsel %vm1357, %v1538, 0.0
  %v3642 = vsel %vm1358, %v1540, 0.0
  %v3643 = vsel %vm1359, %v1542, 0.0
  %v3644 = vsel %vm1360, %v1544, 0.0
  %v3645 = vsel %vm1361, %v1546, 0.0
  %v3646 = vsel %vm1362, %v1548, 0.0
  %v3647 = vsel %vm1363, %v1550, 0.0
  %v3648 = vsel %vm1364, %v1552, 0.0
  %v3649 = vsel %vm1365, %v1554, 0.0
  %v3650 = vsel %vm1366, %v1556, 0.0
  %v3651 = vsel %vm1367, %v1558, 0.0
  %v3652 = vsel %vm1368, %v1560, 0.0
  %v3653 = vsel %vm1369, %v1562, 0.0
  %v3654 = vsel %vm1370, %v1564, 0.0
  %v3655 = vsel %vm1371, %v1566, 0.0
  %v3656 = vsel %vm1372, %v1568, 0.0
  %v3657 = vsel %vm1373, %v1570, 0.0
  %v3658 = vsel %vm1374, %v1572, 0.0
  %v3659 = vsel %vm1375, %v1446, 0.0
  %v3660 = vsel %vm1376, %v1448, 0.0
  %v3661 = vpack.c.bf16 %v3598, %v3597
  %v3662 = vpack.c.bf16 %v3600, %v3599
  %v3663 = vpack.c.bf16 %v3602, %v3601
  %v3664 = vpack.c.bf16 %v3604, %v3603
  %v3665 = vpack.c.bf16 %v3606, %v3605
  %v3666 = vpack.c.bf16 %v3608, %v3607
  %v3667 = vpack.c.bf16 %v3610, %v3609
  %v3668 = vpack.c.bf16 %v3612, %v3611
  %v3669 = vpack.c.bf16 %v3614, %v3613
  %v3670 = vpack.c.bf16 %v3616, %v3615
  %v3671 = vpack.c.bf16 %v3618, %v3617
  %v3672 = vpack.c.bf16 %v3620, %v3619
  %v3673 = vpack.c.bf16 %v3622, %v3621
  %v3674 = vpack.c.bf16 %v3624, %v3623
  %v3675 = vpack.c.bf16 %v3626, %v3625
  %v3676 = vpack.c.bf16 %v3628, %v3627
  %v3677 = vpack.c.bf16 %v3630, %v3629
  %v3678 = vpack.c.bf16 %v3632, %v3631
  %v3679 = vpack.c.bf16 %v3634, %v3633
  %v3680 = vpack.c.bf16 %v3636, %v3635
  %v3681 = vpack.c.bf16 %v3638, %v3637
  %v3682 = vpack.c.bf16 %v3640, %v3639
  %v3683 = vpack.c.bf16 %v3642, %v3641
  %v3684 = vpack.c.bf16 %v3644, %v3643
  %v3685 = vpack.c.bf16 %v3646, %v3645
  %v3686 = vpack.c.bf16 %v3648, %v3647
  %v3687 = vpack.c.bf16 %v3650, %v3649
  %v3688 = vpack.c.bf16 %v3652, %v3651
  %v3689 = vpack.c.bf16 %v3654, %v3653
  %v3690 = vpack.c.bf16 %v3656, %v3655
  %v3691 = vpack.c.bf16 %v3658, %v3657
  %v3692 = vpack.c.bf16 %v3660, %v3659
  %3725 = vrot.lane.b32.xlu0 %v3661, 56
  %v3726 = vpop.permute.xlu0 %3725
  %3727 = vrot.lane.b32.xlu0 %v3662, 56
  %v3728 = vpop.permute.xlu0 %3727
  %3729 = vrot.lane.b32.xlu0 %v3663, 56
  %v3730 = vpop.permute.xlu0 %3729
  %3731 = vrot.lane.b32.xlu0 %v3664, 56
  %v3732 = vpop.permute.xlu0 %3731
  %3733 = vrot.lane.b32.xlu0 %v3665, 56
  %v3734 = vpop.permute.xlu0 %3733
  %3735 = vrot.lane.b32.xlu0 %v3666, 56
  %v3736 = vpop.permute.xlu0 %3735
  %3737 = vrot.lane.b32.xlu0 %v3667, 56
  %v3738 = vpop.permute.xlu0 %3737
  %3739 = vrot.lane.b32.xlu0 %v3668, 56
  %v3740 = vpop.permute.xlu0 %3739
  %3741 = vrot.lane.b32.xlu0 %v3669, 56
  %v3742 = vpop.permute.xlu0 %3741
  %3743 = vrot.lane.b32.xlu0 %v3670, 56
  %v3744 = vpop.permute.xlu0 %3743
  %3745 = vrot.lane.b32.xlu0 %v3671, 56
  %v3746 = vpop.permute.xlu0 %3745
  %3747 = vrot.lane.b32.xlu0 %v3672, 56
  %v3748 = vpop.permute.xlu0 %3747
  %3749 = vrot.lane.b32.xlu0 %v3673, 56
  %v3750 = vpop.permute.xlu0 %3749
  %3751 = vrot.lane.b32.xlu0 %v3674, 56
  %v3752 = vpop.permute.xlu0 %3751
  %3753 = vrot.lane.b32.xlu0 %v3675, 56
  %v3754 = vpop.permute.xlu0 %3753
  %3755 = vrot.lane.b32.xlu0 %v3676, 56
  %v3756 = vpop.permute.xlu0 %3755
  %3757 = vrot.lane.b32.xlu0 %v3677, 56
  %v3758 = vpop.permute.xlu0 %3757
  %3759 = vrot.lane.b32.xlu0 %v3678, 56
  %v3760 = vpop.permute.xlu0 %3759
  %3761 = vrot.lane.b32.xlu0 %v3679, 56
  %v3762 = vpop.permute.xlu0 %3761
  %3763 = vrot.lane.b32.xlu0 %v3680, 56
  %v3764 = vpop.permute.xlu0 %3763
  %3765 = vrot.lane.b32.xlu0 %v3681, 56
  %v3766 = vpop.permute.xlu0 %3765
  %3767 = vrot.lane.b32.xlu0 %v3682, 56
  %v3768 = vpop.permute.xlu0 %3767
  %3769 = vrot.lane.b32.xlu0 %v3683, 56
  %v3770 = vpop.permute.xlu0 %3769
  %3771 = vrot.lane.b32.xlu0 %v3684, 56
  %v3772 = vpop.permute.xlu0 %3771
  %3773 = vrot.lane.b32.xlu0 %v3685, 56
  %v3774 = vpop.permute.xlu0 %3773
  %3775 = vrot.lane.b32.xlu0 %v3686, 56
  %v3776 = vpop.permute.xlu0 %3775
  %3777 = vrot.lane.b32.xlu0 %v3687, 56
  %v3778 = vpop.permute.xlu0 %3777
  %3779 = vrot.lane.b32.xlu0 %v3688, 56
  %v3780 = vpop.permute.xlu0 %3779
  %3781 = vrot.lane.b32.xlu0 %v3689, 56
  %v3782 = vpop.permute.xlu0 %3781
  %3783 = vrot.lane.b32.xlu0 %v3690, 56
  %v3784 = vpop.permute.xlu0 %3783
  %3785 = vrot.lane.b32.xlu0 %v3691, 56
  %v3786 = vpop.permute.xlu0 %3785
  %3787 = vrot.lane.b32.xlu0 %v3692, 56
  %v3788 = vpop.permute.xlu0 %3787
  %vm3821 = vcmask 523712
  %3822 = vst.msk [vmem:[#allocation2] sm:$0xff] %vm3821, %v3726
  %3823 = vst.msk [vmem:[#allocation2 + $0x8] sm:$0xff] %vm3821, %v3728
  %3824 = vst.msk [vmem:[#allocation2 + $0x10] sm:$0xff] %vm3821, %v3730
  %3825 = vst.msk [vmem:[#allocation2 + $0x18] sm:$0xff] %vm3821, %v3732
  %3826 = vst.msk [vmem:[#allocation2 + $0x20] sm:$0xff] %vm3821, %v3734
  %3827 = vst.msk [vmem:[#allocation2 + $0x28] sm:$0xff] %vm3821, %v3736
  %3828 = vst.msk [vmem:[#allocation2 + $0x30] sm:$0xff] %vm3821, %v3738
  %3829 = vst.msk [vmem:[#allocation2 + $0x38] sm:$0xff] %vm3821, %v3740
  %3830 = vst.msk [vmem:[#allocation2 + $0x40] sm:$0xff] %vm3821, %v3742
  %3831 = vst.msk [vmem:[#allocation2 + $0x48] sm:$0xff] %vm3821, %v3744
  %3832 = vst.msk [vmem:[#allocation2 + $0x50] sm:$0xff] %vm3821, %v3746
  %3833 = vst.msk [vmem:[#allocation2 + $0x58] sm:$0xff] %vm3821, %v3748
  %3834 = vst.msk [vmem:[#allocation2 + $0x60] sm:$0xff] %vm3821, %v3750
  %3835 = vst.msk [vmem:[#allocation2 + $0x68] sm:$0xff] %vm3821, %v3752
  %3836 = vst.msk [vmem:[#allocation2 + $0x70] sm:$0xff] %vm3821, %v3754
  %3837 = vst.msk [vmem:[#allocation2 + $0x78] sm:$0xff] %vm3821, %v3756
  %3838 = vst.msk [vmem:[#allocation2 + $0x80] sm:$0xff] %vm3821, %v3758
  %3839 = vst.msk [vmem:[#allocation2 + $0x88] sm:$0xff] %vm3821, %v3760
  %3840 = vst.msk [vmem:[#allocation2 + $0x90] sm:$0xff] %vm3821, %v3762
  %3841 = vst.msk [vmem:[#allocation2 + $0x98] sm:$0xff] %vm3821, %v3764
  %3842 = vst.msk [vmem:[#allocation2 + $0xa0] sm:$0xff] %vm3821, %v3766
  %3843 = vst.msk [vmem:[#allocation2 + $0xa8] sm:$0xff] %vm3821, %v3768
  %3844 = vst.msk [vmem:[#allocation2 + $0xb0] sm:$0xff] %vm3821, %v3770
  %3845 = vst.msk [vmem:[#allocation2 + $0xb8] sm:$0xff] %vm3821, %v3772
  %3846 = vst.msk [vmem:[#allocation2 + $0xc0] sm:$0xff] %vm3821, %v3774
  %3847 = vst.msk [vmem:[#allocation2 + $0xc8] sm:$0xff] %vm3821, %v3776
  %3848 = vst.msk [vmem:[#allocation2 + $0xd0] sm:$0xff] %vm3821, %v3778
  %3849 = vst.msk [vmem:[#allocation2 + $0xd8] sm:$0xff] %vm3821, %v3780
  %3850 = vst.msk [vmem:[#allocation2 + $0xe0] sm:$0xff] %vm3821, %v3782
  %3851 = vst.msk [vmem:[#allocation2 + $0xe8] sm:$0xff] %vm3821, %v3784
  %3852 = vst.msk [vmem:[#allocation2 + $0xf0] sm:$0xff] %vm3821, %v3786
  %3853 = vst.msk [vmem:[#allocation2 + $0xf8] sm:$0xff] %vm3821, %v3788
  %vm3854 = vmand %vm1345, %vm1379
  %vm3855 = vmand %vm1346, %vm1380
  %vm3856 = vmand %vm1347, %vm1379
  %vm3857 = vmand %vm1348, %vm1380
  %vm3858 = vmand %vm1349, %vm1379
  %vm3859 = vmand %vm1350, %vm1380
  %vm3860 = vmand %vm1351, %vm1379
  %vm3861 = vmand %vm1352, %vm1380
  %vm3862 = vmand %vm1353, %vm1379
  %vm3863 = vmand %vm1354, %vm1380
  %vm3864 = vmand %vm1355, %vm1379
  %vm3865 = vmand %vm1356, %vm1380
  %vm3866 = vmand %vm1357, %vm1379
  %vm3867 = vmand %vm1358, %vm1380
  %vm3868 = vmand %vm1359, %vm1379
  %vm3869 = vmand %vm1360, %vm1380
  %vm3870 = vmand %vm1361, %vm1379
  %vm3871 = vmand %vm1362, %vm1380
  %vm3872 = vmand %vm1363, %vm1379
  %vm3873 = vmand %vm1364, %vm1380
  %vm3874 = vmand %vm1365, %vm1379
  %vm3875 = vmand %vm1366, %vm1380
  %vm3876 = vmand %vm1367, %vm1379
  %vm3877 = vmand %vm1368, %vm1380
  %vm3878 = vmand %vm1369, %vm1379
  %vm3879 = vmand %vm1370, %vm1380
  %vm3880 = vmand %vm1371, %vm1379
  %vm3881 = vmand %vm1372, %vm1380
  %vm3882 = vmand %vm1373, %vm1379
  %vm3883 = vmand %vm1374, %vm1380
  %vm3884 = vmand %vm1375, %vm1379
  %vm3885 = vmand %vm1376, %vm1380
  %v3886 = vsel %vm3854, %v2309, 0.0
  %v3887 = vsel %vm3855, %v2308, 0.0
  %v3888 = vsel %vm3856, %v2307, 0.0
  %v3889 = vsel %vm3857, %v2306, 0.0
  %v3890 = vsel %vm3858, %v2305, 0.0
  %v3891 = vsel %vm3859, %v2304, 0.0
  %v3892 = vsel %vm3860, %v2303, 0.0
  %v3893 = vsel %vm3861, %v2302, 0.0
  %v3894 = vsel %vm3862, %v2301, 0.0
  %v3895 = vsel %vm3863, %v2300, 0.0
  %v3896 = vsel %vm3864, %v2299, 0.0
  %v3897 = vsel %vm3865, %v2298, 0.0
  %v3898 = vsel %vm3866, %v2297, 0.0
  %v3899 = vsel %vm3867, %v2296, 0.0
  %v3900 = vsel %vm3868, %v2295, 0.0
  %v3901 = vsel %vm3869, %v2294, 0.0
  %v3902 = vsel %vm3870, %v2293, 0.0
  %v3903 = vsel %vm3871, %v2292, 0.0
  %v3904 = vsel %vm3872, %v2291, 0.0
  %v3905 = vsel %vm3873, %v2290, 0.0
  %v3906 = vsel %vm3874, %v2289, 0.0
  %v3907 = vsel %vm3875, %v2288, 0.0
  %v3908 = vsel %vm3876, %v2287, 0.0
  %v3909 = vsel %vm3877, %v2286, 0.0
  %v3910 = vsel %vm3878, %v2285, 0.0
  %v3911 = vsel %vm3879, %v2284, 0.0
  %v3912 = vsel %vm3880, %v2283, 0.0
  %v3913 = vsel %vm3881, %v2282, 0.0
  %v3914 = vsel %vm3882, %v2281, 0.0
  %v3915 = vsel %vm3883, %v2280, 0.0
  %v3916 = vsel %vm3884, %v2279, 0.0
  %v3917 = vsel %vm3885, %v2278, 0.0
  %v3918 = vsel %vm3854, %v2277, 0.0
  %v3919 = vsel %vm3855, %v2276, 0.0
  %v3920 = vsel %vm3856, %v2275, 0.0
  %v3921 = vsel %vm3857, %v2274, 0.0
  %v3922 = vsel %vm3858, %v2273, 0.0
  %v3923 = vsel %vm3859, %v2272, 0.0
  %v3924 = vsel %vm3860, %v2271, 0.0
  %v3925 = vsel %vm3861, %v2270, 0.0
  %v3926 = vsel %vm3862, %v2269, 0.0
  %v3927 = vsel %vm3863, %v2268, 0.0
  %v3928 = vsel %vm3864, %v2267, 0.0
  %v3929 = vsel %vm3865, %v2266, 0.0
  %v3930 = vsel %vm3866, %v2265, 0.0
  %v3931 = vsel %vm3867, %v2264, 0.0
  %v3932 = vsel %vm3868, %v2263, 0.0
  %v3933 = vsel %vm3869, %v2262, 0.0
  %v3934 = vsel %vm3870, %v2261, 0.0
  %v3935 = vsel %vm3871, %v2260, 0.0
  %v3936 = vsel %vm3872, %v2259, 0.0
  %v3937 = vsel %vm3873, %v2258, 0.0
  %v3938 = vsel %vm3874, %v2257, 0.0
  %v3939 = vsel %vm3875, %v2256, 0.0
  %v3940 = vsel %vm3876, %v2255, 0.0
  %v3941 = vsel %vm3877, %v2254, 0.0
  %v3942 = vsel %vm3878, %v2253, 0.0
  %v3943 = vsel %vm3879, %v2252, 0.0
  %v3944 = vsel %vm3880, %v2251, 0.0
  %v3945 = vsel %vm3881, %v2250, 0.0
  %v3946 = vsel %vm3882, %v2249, 0.0
  %v3947 = vsel %vm3883, %v2312, 0.0
  %v3948 = vsel %vm3884, %v2311, 0.0
  %v3949 = vsel %vm3885, %v2310, 0.0
  %v3950 = vpack.c.bf16 %v3887, %v3886
  %v3951 = vpack.c.bf16 %v3889, %v3888
  %v3952 = vpack.c.bf16 %v3891, %v3890
  %v3953 = vpack.c.bf16 %v3893, %v3892
  %v3954 = vpack.c.bf16 %v3895, %v3894
  %v3955 = vpack.c.bf16 %v3897, %v3896
  %v3956 = vpack.c.bf16 %v3899, %v3898
  %v3957 = vpack.c.bf16 %v3901, %v3900
  %v3958 = vpack.c.bf16 %v3903, %v3902
  %v3959 = vpack.c.bf16 %v3905, %v3904
  %v3960 = vpack.c.bf16 %v3907, %v3906
  %v3961 = vpack.c.bf16 %v3909, %v3908
  %v3962 = vpack.c.bf16 %v3911, %v3910
  %v3963 = vpack.c.bf16 %v3913, %v3912
  %v3964 = vpack.c.bf16 %v3915, %v3914
  %v3965 = vpack.c.bf16 %v3917, %v3916
  %v3966 = vpack.c.bf16 %v3919, %v3918
  %v3967 = vpack.c.bf16 %v3921, %v3920
  %v3968 = vpack.c.bf16 %v3923, %v3922
  %v3969 = vpack.c.bf16 %v3925, %v3924
  %v3970 = vpack.c.bf16 %v3927, %v3926
  %v3971 = vpack.c.bf16 %v3929, %v3928
  %v3972 = vpack.c.bf16 %v3931, %v3930
  %v3973 = vpack.c.bf16 %v3933, %v3932
  %v3974 = vpack.c.bf16 %v3935, %v3934
  %v3975 = vpack.c.bf16 %v3937, %v3936
  %v3976 = vpack.c.bf16 %v3939, %v3938
  %v3977 = vpack.c.bf16 %v3941, %v3940
  %v3978 = vpack.c.bf16 %v3943, %v3942
  %v3979 = vpack.c.bf16 %v3945, %v3944
  %v3980 = vpack.c.bf16 %v3947, %v3946
  %v3981 = vpack.c.bf16 %v3949, %v3948
  %4014 = vrot.lane.b32.xlu0 %v3950, 64
  %v4015 = vpop.permute.xlu0 %4014
  %4016 = vrot.lane.b32.xlu0 %v3951, 64
  %v4017 = vpop.permute.xlu0 %4016
  %4018 = vrot.lane.b32.xlu0 %v3952, 64
  %v4019 = vpop.permute.xlu0 %4018
  %4020 = vrot.lane.b32.xlu0 %v3953, 64
  %v4021 = vpop.permute.xlu0 %4020
  %4022 = vrot.lane.b32.xlu0 %v3954, 64
  %v4023 = vpop.permute.xlu0 %4022
  %4024 = vrot.lane.b32.xlu0 %v3955, 64
  %v4025 = vpop.permute.xlu0 %4024
  %4026 = vrot.lane.b32.xlu0 %v3956, 64
  %v4027 = vpop.permute.xlu0 %4026
  %4028 = vrot.lane.b32.xlu0 %v3957, 64
  %v4029 = vpop.permute.xlu0 %4028
  %4030 = vrot.lane.b32.xlu0 %v3958, 64
  %v4031 = vpop.permute.xlu0 %4030
  %4032 = vrot.lane.b32.xlu0 %v3959, 64
  %v4033 = vpop.permute.xlu0 %4032
  %4034 = vrot.lane.b32.xlu0 %v3960, 64
  %v4035 = vpop.permute.xlu0 %4034
  %4036 = vrot.lane.b32.xlu0 %v3961, 64
  %v4037 = vpop.permute.xlu0 %4036
  %4038 = vrot.lane.b32.xlu0 %v3962, 64
  %v4039 = vpop.permute.xlu0 %4038
  %4040 = vrot.lane.b32.xlu0 %v3963, 64
  %v4041 = vpop.permute.xlu0 %4040
  %4042 = vrot.lane.b32.xlu0 %v3964, 64
  %v4043 = vpop.permute.xlu0 %4042
  %4044 = vrot.lane.b32.xlu0 %v3965, 64
  %v4045 = vpop.permute.xlu0 %4044
  %4046 = vrot.lane.b32.xlu0 %v3966, 64
  %v4047 = vpop.permute.xlu0 %4046
  %4048 = vrot.lane.b32.xlu0 %v3967, 64
  %v4049 = vpop.permute.xlu0 %4048
  %4050 = vrot.lane.b32.xlu0 %v3968, 64
  %v4051 = vpop.permute.xlu0 %4050
  %4052 = vrot.lane.b32.xlu0 %v3969, 64
  %v4053 = vpop.permute.xlu0 %4052
  %4054 = vrot.lane.b32.xlu0 %v3970, 64
  %v4055 = vpop.permute.xlu0 %4054
  %4056 = vrot.lane.b32.xlu0 %v3971, 64
  %v4057 = vpop.permute.xlu0 %4056
  %4058 = vrot.lane.b32.xlu0 %v3972, 64
  %v4059 = vpop.permute.xlu0 %4058
  %4060 = vrot.lane.b32.xlu0 %v3973, 64
  %v4061 = vpop.permute.xlu0 %4060
  %4062 = vrot.lane.b32.xlu0 %v3974, 64
  %v4063 = vpop.permute.xlu0 %4062
  %4064 = vrot.lane.b32.xlu0 %v3975, 64
  %v4065 = vpop.permute.xlu0 %4064
  %4066 = vrot.lane.b32.xlu0 %v3976, 64
  %v4067 = vpop.permute.xlu0 %4066
  %4068 = vrot.lane.b32.xlu0 %v3977, 64
  %v4069 = vpop.permute.xlu0 %4068
  %4070 = vrot.lane.b32.xlu0 %v3978, 64
  %v4071 = vpop.permute.xlu0 %4070
  %4072 = vrot.lane.b32.xlu0 %v3979, 64
  %v4073 = vpop.permute.xlu0 %4072
  %4074 = vrot.lane.b32.xlu0 %v3980, 64
  %v4075 = vpop.permute.xlu0 %4074
  %4076 = vrot.lane.b32.xlu0 %v3981, 64
  %v4077 = vpop.permute.xlu0 %4076
  %vm4110 = vcmask 589312
  %4111 = vst.msk [vmem:[#allocation2] sm:$0xff] %vm4110, %v4015
  %4112 = vst.msk [vmem:[#allocation2 + $0x8] sm:$0xff] %vm4110, %v4017
  %4113 = vst.msk [vmem:[#allocation2 + $0x10] sm:$0xff] %vm4110, %v4019
  %4114 = vst.msk [vmem:[#allocation2 + $0x18] sm:$0xff] %vm4110, %v4021
  %4115 = vst.msk [vmem:[#allocation2 + $0x20] sm:$0xff] %vm4110, %v4023
  %4116 = vst.msk [vmem:[#allocation2 + $0x28] sm:$0xff] %vm4110, %v4025
  %4117 = vst.msk [vmem:[#allocation2 + $0x30] sm:$0xff] %vm4110, %v4027
  %4118 = vst.msk [vmem:[#allocation2 + $0x38] sm:$0xff] %vm4110, %v4029
  %4119 = vst.msk [vmem:[#allocation2 + $0x40] sm:$0xff] %vm4110, %v4031
  %4120 = vst.msk [vmem:[#allocation2 + $0x48] sm:$0xff] %vm4110, %v4033
  %4121 = vst.msk [vmem:[#allocation2 + $0x50] sm:$0xff] %vm4110, %v4035
  %4122 = vst.msk [vmem:[#allocation2 + $0x58] sm:$0xff] %vm4110, %v4037
  %4123 = vst.msk [vmem:[#allocation2 + $0x60] sm:$0xff] %vm4110, %v4039
  %4124 = vst.msk [vmem:[#allocation2 + $0x68] sm:$0xff] %vm4110, %v4041
  %4125 = vst.msk [vmem:[#allocation2 + $0x70] sm:$0xff] %vm4110, %v4043
  %4126 = vst.msk [vmem:[#allocation2 + $0x78] sm:$0xff] %vm4110, %v4045
  %4127 = vst.msk [vmem:[#allocation2 + $0x80] sm:$0xff] %vm4110, %v4047
  %4128 = vst.msk [vmem:[#allocation2 + $0x88] sm:$0xff] %vm4110, %v4049
  %4129 = vst.msk [vmem:[#allocation2 + $0x90] sm:$0xff] %vm4110, %v4051
  %4130 = vst.msk [vmem:[#allocation2 + $0x98] sm:$0xff] %vm4110, %v4053
  %4131 = vst.msk [vmem:[#allocation2 + $0xa0] sm:$0xff] %vm4110, %v4055
  %4132 = vst.msk [vmem:[#allocation2 + $0xa8] sm:$0xff] %vm4110, %v4057
  %4133 = vst.msk [vmem:[#allocation2 + $0xb0] sm:$0xff] %vm4110, %v4059
  %4134 = vst.msk [vmem:[#allocation2 + $0xb8] sm:$0xff] %vm4110, %v4061
  %4135 = vst.msk [vmem:[#allocation2 + $0xc0] sm:$0xff] %vm4110, %v4063
  %4136 = vst.msk [vmem:[#allocation2 + $0xc8] sm:$0xff] %vm4110, %v4065
  %4137 = vst.msk [vmem:[#allocation2 + $0xd0] sm:$0xff] %vm4110, %v4067
  %4138 = vst.msk [vmem:[#allocation2 + $0xd8] sm:$0xff] %vm4110, %v4069
  %4139 = vst.msk [vmem:[#allocation2 + $0xe0] sm:$0xff] %vm4110, %v4071
  %4140 = vst.msk [vmem:[#allocation2 + $0xe8] sm:$0xff] %vm4110, %v4073
  %4141 = vst.msk [vmem:[#allocation2 + $0xf0] sm:$0xff] %vm4110, %v4075
  %4142 = vst.msk [vmem:[#allocation2 + $0xf8] sm:$0xff] %vm4110, %v4077
  %v4143 = vld [vmem:[#allocation2] sm:$0xff]
  %v4144 = vld [vmem:[#allocation2 + $0x8] sm:$0xff]
  %v4145 = vld [vmem:[#allocation2 + $0x10] sm:$0xff]
  %v4146 = vld [vmem:[#allocation2 + $0x18] sm:$0xff]
  %v4147 = vld [vmem:[#allocation2 + $0x20] sm:$0xff]
  %v4148 = vld [vmem:[#allocation2 + $0x28] sm:$0xff]
  %v4149 = vld [vmem:[#allocation2 + $0x30] sm:$0xff]
  %v4150 = vld [vmem:[#allocation2 + $0x38] sm:$0xff]
  %v4151 = vld [vmem:[#allocation2 + $0x40] sm:$0xff]
  %v4152 = vld [vmem:[#allocation2 + $0x48] sm:$0xff]
  %v4153 = vld [vmem:[#allocation2 + $0x50] sm:$0xff]
  %v4154 = vld [vmem:[#allocation2 + $0x58] sm:$0xff]
  %v4155 = vld [vmem:[#allocation2 + $0x60] sm:$0xff]
  %v4156 = vld [vmem:[#allocation2 + $0x68] sm:$0xff]
  %v4157 = vld [vmem:[#allocation2 + $0x70] sm:$0xff]
  %v4158 = vld [vmem:[#allocation2 + $0x78] sm:$0xff]
  %v4159 = vld [vmem:[#allocation2 + $0x80] sm:$0xff]
  %v4160 = vld [vmem:[#allocation2 + $0x88] sm:$0xff]
  %v4161 = vld [vmem:[#allocation2 + $0x90] sm:$0xff]
  %v4162 = vld [vmem:[#allocation2 + $0x98] sm:$0xff]
  %v4163 = vld [vmem:[#allocation2 + $0xa0] sm:$0xff]
  %v4164 = vld [vmem:[#allocation2 + $0xa8] sm:$0xff]
  %v4165 = vld [vmem:[#allocation2 + $0xb0] sm:$0xff]
  %v4166 = vld [vmem:[#allocation2 + $0xb8] sm:$0xff]
  %v4167 = vld [vmem:[#allocation2 + $0xc0] sm:$0xff]
  %v4168 = vld [vmem:[#allocation2 + $0xc8] sm:$0xff]
  %v4169 = vld [vmem:[#allocation2 + $0xd0] sm:$0xff]
  %v4170 = vld [vmem:[#allocation2 + $0xd8] sm:$0xff]
  %v4171 = vld [vmem:[#allocation2 + $0xe0] sm:$0xff]
  %v4172 = vld [vmem:[#allocation2 + $0xe8] sm:$0xff]
  %v4173 = vld [vmem:[#allocation2 + $0xf0] sm:$0xff]
  %v4174 = vld [vmem:[#allocation2 + $0xf8] sm:$0xff]
  %v4175 = vld [vmem:[%s2] sm:$0xf]
  %v4176 = vld [vmem:[%s2 + $0x4] sm:$0xf]
  %v4177 = vld [vmem:[%s2 + $0x8] sm:$0xf]
  %v4178 = vld [vmem:[%s2 + $0xc] sm:$0xf]
  %v4179 = vld [vmem:[%s2 + $0x10] sm:$0xf]
  %v4180 = vld [vmem:[%s2 + $0x14] sm:$0xf]
  %v4181 = vld [vmem:[%s2 + $0x18] sm:$0xf]
  %v4182 = vld [vmem:[%s2 + $0x1c] sm:$0xf]
  %v4183 = vld [vmem:[%s2 + $0x20] sm:$0xf]
  %v4193 = vunpack.c.l.b16 %v4175
  %v4194 = vunpack.c.l.b16 %v4176
  %v4195 = vunpack.c.l.b16 %v4177
  %v4196 = vunpack.c.l.b16 %v4178
  %v4197 = vunpack.c.l.b16 %v4179
  %v4198 = vunpack.c.l.b16 %v4180
  %v4199 = vunpack.c.l.b16 %v4181
  %v4200 = vunpack.c.l.b16 %v4182
  %v4201 = vunpack.c.l.b16 %v4183
  %v4202 = vpack.c.b16 %v4194, %v4193
  %v4203 = vpack.c.b16 %v4196, %v4195
  %v4204 = vpack.c.b16 %v4198, %v4197
  %v4205 = vpack.c.b16 %v4200, %v4199
  %v4206 = vpack.c.b16 %v4201, %v4201
  %vm4211 = vcmask 588800
  %v4213 = vsel %vm4211, %v4143, 0
  %v4216 = vsel %vm4211, %v4144, 0
  %v4219 = vsel %vm4211, %v4145, 0
  %v4222 = vsel %vm4211, %v4146, 0
  %v4225 = vsel %vm4211, %v4147, 0
  %v4228 = vsel %vm4211, %v4148, 0
  %v4231 = vsel %vm4211, %v4149, 0
  %v4234 = vsel %vm4211, %v4150, 0
  %v4237 = vsel %vm4211, %v4151, 0
  %v4240 = vsel %vm4211, %v4152, 0
  %v4243 = vsel %vm4211, %v4153, 0
  %v4246 = vsel %vm4211, %v4154, 0
  %v4249 = vsel %vm4211, %v4155, 0
  %v4252 = vsel %vm4211, %v4156, 0
  %v4255 = vsel %vm4211, %v4157, 0
  %v4258 = vsel %vm4211, %v4158, 0
  %v4261 = vsel %vm4211, %v4159, 0
  %v4264 = vsel %vm4211, %v4160, 0
  %v4267 = vsel %vm4211, %v4161, 0
  %v4270 = vsel %vm4211, %v4162, 0
  %v4273 = vsel %vm4211, %v4163, 0
  %v4276 = vsel %vm4211, %v4164, 0
  %v4279 = vsel %vm4211, %v4165, 0
  %v4282 = vsel %vm4211, %v4166, 0
  %v4285 = vsel %vm4211, %v4167, 0
  %v4288 = vsel %vm4211, %v4168, 0
  %v4291 = vsel %vm4211, %v4169, 0
  %v4294 = vsel %vm4211, %v4170, 0
  %v4297 = vsel %vm4211, %v4171, 0
  %v4300 = vsel %vm4211, %v4172, 0
  %v4303 = vsel %vm4211, %v4173, 0
  %v4306 = vsel %vm4211, %v4174, 0
  %vm4308 = vcmask 1043456
  %v4310 = vsel %vm4308, %v4206, 0
  %4312 = vmatprep.subr.bf16.mxu0 0
  %4313 = vmatpush1.bf16.msra.mxu0 %v4202
  %4314 = vmatprep.subr.bf16.mxu0 0
  %4315 = vmatpush1.bf16.msra.mxu0 %v4203
  %4316 = vmatprep.subr.bf16.mxu0 0
  %4317 = vmatpush1.bf16.msra.mxu0 %v4204
  %4318 = vmatprep.subr.bf16.mxu0 0
  %4319 = vmatpush1.bf16.msra.mxu0 %v4205
  %4320 = vmatprep.subr.bf16.mxu0 0
  %4321 = vmatpush1.bf16.msra.mxu0 %v4310
  %4322 = vmatprep.subr.bf16.mxu0 0
  %4323 = vmatpush1.bf16.msra.mxu0 0
  %4324 = vmatprep.subr.bf16.mxu0 0
  %4325 = vmatpush1.bf16.msra.mxu0 0
  %4326 = vmatprep.subr.bf16.mxu0 0
  %4327 = vmatpush1.bf16.msra.mxu0 0
  %4328 = vmatprep.subr.bf16.mxu0 0
  %4329 = vmatpush1.bf16.msra.mxu0 0
  %4330 = vmatprep.subr.bf16.mxu0 0
  %4331 = vmatpush1.bf16.msra.mxu0 0
  %4332 = vmatprep.subr.bf16.mxu0 0
  %4333 = vmatpush1.bf16.msra.mxu0 0
  %4334 = vmatprep.subr.bf16.mxu0 0
  %4335 = vmatpush1.bf16.msra.mxu0 0
  %4336 = vmatprep.subr.bf16.mxu0 0
  %4337 = vmatpush1.bf16.msra.mxu0 0
  %4338 = vmatprep.subr.bf16.mxu0 0
  %4339 = vmatpush1.bf16.msra.mxu0 0
  %4340 = vmatprep.subr.bf16.mxu0 0
  %4341 = vmatpush1.bf16.msra.mxu0 0
  %4342 = vmatprep.subr.bf16.mxu0 0
  %4343 = vmatpush1.bf16.msra.mxu0 0
  %4344 = vmatprep.mubr.bf16.mxu0 0
  %4345 = vmatmul.mubr.bf16.gmra.mrb[0].mxu0 %v4213
  %v4346 = vpop.f32.mrb[0].mxu0
  %v4347 = vadd.f32 0.0, %v4346
  %v4348 = vpop.f32.mrb[0].mxu0
  %v4349 = vpop.f32.mrb[0].mxu0
  %v4350 = vadd.f32 0.0, %v4349
  %v4351 = vpop.f32.mrb[0].mxu0
  %4352 = vmatprep.mubr.bf16.mxu0 0
  %4353 = vmatmul.mubr.bf16.gmra.mrb[0].mxu0 %v4216
  %v4354 = vpop.f32.mrb[0].mxu0
  %v4355 = vadd.f32 0.0, %v4354
  %v4356 = vpop.f32.mrb[0].mxu0
  %v4357 = vpop.f32.mrb[0].mxu0
  %v4358 = vadd.f32 0.0, %v4357
  %v4359 = vpop.f32.mrb[0].mxu0
  %4360 = vmatprep.mubr.bf16.mxu0 0
  %4361 = vmatmul.mubr.bf16.gmra.mrb[0].mxu0 %v4219
  %v4362 = vpop.f32.mrb[0].mxu0
  %v4363 = vadd.f32 0.0, %v4362
  %v4364 = vpop.f32.mrb[0].mxu0
  %v4365 = vpop.f32.mrb[0].mxu0
  %v4366 = vadd.f32 0.0, %v4365
  %v4367 = vpop.f32.mrb[0].mxu0
  %4368 = vmatprep.mubr.bf16.mxu0 0
  %4369 = vmatmul.mubr.bf16.gmra.mrb[0].mxu0 %v4222
  %v4370 = vpop.f32.mrb[0].mxu0
  %v4371 = vadd.f32 0.0, %v4370
  %v4372 = vpop.f32.mrb[0].mxu0
  %v4373 = vpop.f32.mrb[0].mxu0
  %v4374 = vadd.f32 0.0, %v4373
  %v4375 = vpop.f32.mrb[0].mxu0
  %4376 = vmatprep.mubr.bf16.mxu0 0
  %4377 = vmatmul.mubr.bf16.gmra.mrb[0].mxu0 %v4225
  %v4378 = vpop.f32.mrb[0].mxu0
  %v4379 = vadd.f32 0.0, %v4378
  %v4380 = vpop.f32.mrb[0].mxu0
  %v4381 = vpop.f32.mrb[0].mxu0
  %v4382 = vadd.f32 0.0, %v4381
  %v4383 = vpop.f32.mrb[0].mxu0
  %4384 = vmatprep.mubr.bf16.mxu0 0
  %4385 = vmatmul.mubr.bf16.gmra.mrb[0].mxu0 %v4228
  %v4386 = vpop.f32.mrb[0].mxu0
  %v4387 = vadd.f32 0.0, %v4386
  %v4388 = vpop.f32.mrb[0].mxu0
  %v4389 = vpop.f32.mrb[0].mxu0
  %v4390 = vadd.f32 0.0, %v4389
  %v4391 = vpop.f32.mrb[0].mxu0
  %4392 = vmatprep.mubr.bf16.mxu0 0
  %4393 = vmatmul.mubr.bf16.gmra.mrb[0].mxu0 %v4231
  %v4394 = vpop.f32.mrb[0].mxu0
  %v4395 = vadd.f32 0.0, %v4394
  %v4396 = vpop.f32.mrb[0].mxu0
  %v4397 = vpop.f32.mrb[0].mxu0
  %v4398 = vadd.f32 0.0, %v4397
  %v4399 = vpop.f32.mrb[0].mxu0
  %4400 = vmatprep.mubr.bf16.mxu0 0
  %4401 = vmatmul.mubr.bf16.gmra.mrb[0].mxu0 %v4234
  %v4402 = vpop.f32.mrb[0].mxu0
  %v4403 = vadd.f32 0.0, %v4402
  %v4404 = vpop.f32.mrb[0].mxu0
  %v4405 = vpop.f32.mrb[0].mxu0
  %v4406 = vadd.f32 0.0, %v4405
  %v4407 = vpop.f32.mrb[0].mxu0
  %4408 = vmatprep.mubr.bf16.mxu0 0
  %4409 = vmatmul.mubr.bf16.gmra.mrb[0].mxu0 %v4237
  %v4410 = vpop.f32.mrb[0].mxu0
  %v4411 = vadd.f32 0.0, %v4410
  %v4412 = vpop.f32.mrb[0].mxu0
  %v4413 = vpop.f32.mrb[0].mxu0
  %v4414 = vadd.f32 0.0, %v4413
  %v4415 = vpop.f32.mrb[0].mxu0
  %4416 = vmatprep.mubr.bf16.mxu0 0
  %4417 = vmatmul.mubr.bf16.gmra.mrb[0].mxu0 %v4240
  %v4418 = vpop.f32.mrb[0].mxu0
  %v4419 = vadd.f32 0.0, %v4418
  %v4420 = vpop.f32.mrb[0].mxu0
  %v4421 = vpop.f32.mrb[0].mxu0
  %v4422 = vadd.f32 0.0, %v4421
  %v4423 = vpop.f32.mrb[0].mxu0
  %4424 = vmatprep.mubr.bf16.mxu0 0
  %4425 = vmatmul.mubr.bf16.gmra.mrb[0].mxu0 %v4243
  %v4426 = vpop.f32.mrb[0].mxu0
  %v4427 = vadd.f32 0.0, %v4426
  %v4428 = vpop.f32.mrb[0].mxu0
  %v4429 = vpop.f32.mrb[0].mxu0
  %v4430 = vadd.f32 0.0, %v4429
  %v4431 = vpop.f32.mrb[0].mxu0
  %4432 = vmatprep.mubr.bf16.mxu0 0
  %4433 = vmatmul.mubr.bf16.gmra.mrb[0].mxu0 %v4246
  %v4434 = vpop.f32.mrb[0].mxu0
  %v4435 = vadd.f32 0.0, %v4434
  %v4436 = vpop.f32.mrb[0].mxu0
  %v4437 = vpop.f32.mrb[0].mxu0
  %v4438 = vadd.f32 0.0, %v4437
  %v4439 = vpop.f32.mrb[0].mxu0
  %4440 = vmatprep.mubr.bf16.mxu0 0
  %4441 = vmatmul.mubr.bf16.gmra.mrb[0].mxu0 %v4249
  %v4442 = vpop.f32.mrb[0].mxu0
  %v4443 = vadd.f32 0.0, %v4442
  %v4444 = vpop.f32.mrb[0].mxu0
  %v4445 = vpop.f32.mrb[0].mxu0
  %v4446 = vadd.f32 0.0, %v4445
  %v4447 = vpop.f32.mrb[0].mxu0
  %4448 = vmatprep.mubr.bf16.mxu0 0
  %4449 = vmatmul.mubr.bf16.gmra.mrb[0].mxu0 %v4252
  %v4450 = vpop.f32.mrb[0].mxu0
  %v4451 = vadd.f32 0.0, %v4450
  %v4452 = vpop.f32.mrb[0].mxu0
  %v4453 = vpop.f32.mrb[0].mxu0
  %v4454 = vadd.f32 0.0, %v4453
  %v4455 = vpop.f32.mrb[0].mxu0
  %4456 = vmatprep.mubr.bf16.mxu0 0
  %4457 = vmatmul.mubr.bf16.gmra.mrb[0].mxu0 %v4255
  %v4458 = vpop.f32.mrb[0].mxu0
  %v4459 = vadd.f32 0.0, %v4458
  %v4460 = vpop.f32.mrb[0].mxu0
  %v4461 = vpop.f32.mrb[0].mxu0
  %v4462 = vadd.f32 0.0, %v4461
  %v4463 = vpop.f32.mrb[0].mxu0
  %4464 = vmatprep.mubr.bf16.mxu0 0
  %4465 = vmatmul.mubr.bf16.gmra.mrb[0].mxu0 %v4258
  %v4466 = vpop.f32.mrb[0].mxu0
  %v4467 = vadd.f32 0.0, %v4466
  %v4468 = vpop.f32.mrb[0].mxu0
  %v4469 = vpop.f32.mrb[0].mxu0
  %v4470 = vadd.f32 0.0, %v4469
  %v4471 = vpop.f32.mrb[0].mxu0
  %4472 = vmatprep.mubr.bf16.mxu0 0
  %4473 = vmatmul.mubr.bf16.gmra.mrb[0].mxu0 %v4261
  %v4474 = vpop.f32.mrb[0].mxu0
  %v4475 = vadd.f32 0.0, %v4474
  %v4476 = vpop.f32.mrb[0].mxu0
  %v4477 = vpop.f32.mrb[0].mxu0
  %v4478 = vadd.f32 0.0, %v4477
  %v4479 = vpop.f32.mrb[0].mxu0
  %4480 = vmatprep.mubr.bf16.mxu0 0
  %4481 = vmatmul.mubr.bf16.gmra.mrb[0].mxu0 %v4264
  %v4482 = vpop.f32.mrb[0].mxu0
  %v4483 = vadd.f32 0.0, %v4482
  %v4484 = vpop.f32.mrb[0].mxu0
  %v4485 = vpop.f32.mrb[0].mxu0
  %v4486 = vadd.f32 0.0, %v4485
  %v4487 = vpop.f32.mrb[0].mxu0
  %4488 = vmatprep.mubr.bf16.mxu0 0
  %4489 = vmatmul.mubr.bf16.gmra.mrb[0].mxu0 %v4267
  %v4490 = vpop.f32.mrb[0].mxu0
  %v4491 = vadd.f32 0.0, %v4490
  %v4492 = vpop.f32.mrb[0].mxu0
  %v4493 = vpop.f32.mrb[0].mxu0
  %v4494 = vadd.f32 0.0, %v4493
  %v4495 = vpop.f32.mrb[0].mxu0
  %4496 = vmatprep.mubr.bf16.mxu0 0
  %4497 = vmatmul.mubr.bf16.gmra.mrb[0].mxu0 %v4270
  %v4498 = vpop.f32.mrb[0].mxu0
  %v4499 = vadd.f32 0.0, %v4498
  %v4500 = vpop.f32.mrb[0].mxu0
  %v4501 = vpop.f32.mrb[0].mxu0
  %v4502 = vadd.f32 0.0, %v4501
  %v4503 = vpop.f32.mrb[0].mxu0
  %4504 = vmatprep.mubr.bf16.mxu0 0
  %4505 = vmatmul.mubr.bf16.gmra.mrb[0].mxu0 %v4273
  %v4506 = vpop.f32.mrb[0].mxu0
  %v4507 = vadd.f32 0.0, %v4506
  %v4508 = vpop.f32.mrb[0].mxu0
  %v4509 = vpop.f32.mrb[0].mxu0
  %v4510 = vadd.f32 0.0, %v4509
  %v4511 = vpop.f32.mrb[0].mxu0
  %4512 = vmatprep.mubr.bf16.mxu0 0
  %4513 = vmatmul.mubr.bf16.gmra.mrb[0].mxu0 %v4276
  %v4514 = vpop.f32.mrb[0].mxu0
  %v4515 = vadd.f32 0.0, %v4514
  %v4516 = vpop.f32.mrb[0].mxu0
  %v4517 = vpop.f32.mrb[0].mxu0
  %v4518 = vadd.f32 0.0, %v4517
  %v4519 = vpop.f32.mrb[0].mxu0
  %4520 = vmatprep.mubr.bf16.mxu0 0
  %4521 = vmatmul.mubr.bf16.gmra.mrb[0].mxu0 %v4279
  %v4522 = vpop.f32.mrb[0].mxu0
  %v4523 = vadd.f32 0.0, %v4522
  %v4524 = vpop.f32.mrb[0].mxu0
  %v4525 = vpop.f32.mrb[0].mxu0
  %v4526 = vadd.f32 0.0, %v4525
  %v4527 = vpop.f32.mrb[0].mxu0
  %4528 = vmatprep.mubr.bf16.mxu0 0
  %4529 = vmatmul.mubr.bf16.gmra.mrb[0].mxu0 %v4282
  %v4530 = vpop.f32.mrb[0].mxu0
  %v4531 = vadd.f32 0.0, %v4530
  %v4532 = vpop.f32.mrb[0].mxu0
  %v4533 = vpop.f32.mrb[0].mxu0
  %v4534 = vadd.f32 0.0, %v4533
  %v4535 = vpop.f32.mrb[0].mxu0
  %4536 = vmatprep.mubr.bf16.mxu0 0
  %4537 = vmatmul.mubr.bf16.gmra.mrb[0].mxu0 %v4285
  %v4538 = vpop.f32.mrb[0].mxu0
  %v4539 = vadd.f32 0.0, %v4538
  %v4540 = vpop.f32.mrb[0].mxu0
  %v4541 = vpop.f32.mrb[0].mxu0
  %v4542 = vadd.f32 0.0, %v4541
  %v4543 = vpop.f32.mrb[0].mxu0
  %4544 = vmatprep.mubr.bf16.mxu0 0
  %4545 = vmatmul.mubr.bf16.gmra.mrb[0].mxu0 %v4288
  %v4546 = vpop.f32.mrb[0].mxu0
  %v4547 = vadd.f32 0.0, %v4546
  %v4548 = vpop.f32.mrb[0].mxu0
  %v4549 = vpop.f32.mrb[0].mxu0
  %v4550 = vadd.f32 0.0, %v4549
  %v4551 = vpop.f32.mrb[0].mxu0
  %4552 = vmatprep.mubr.bf16.mxu0 0
  %4553 = vmatmul.mubr.bf16.gmra.mrb[0].mxu0 %v4291
  %v4554 = vpop.f32.mrb[0].mxu0
  %v4555 = vadd.f32 0.0, %v4554
  %v4556 = vpop.f32.mrb[0].mxu0
  %v4557 = vpop.f32.mrb[0].mxu0
  %v4558 = vadd.f32 0.0, %v4557
  %v4559 = vpop.f32.mrb[0].mxu0
  %4560 = vmatprep.mubr.bf16.mxu0 0
  %4561 = vmatmul.mubr.bf16.gmra.mrb[0].mxu0 %v4294
  %v4562 = vpop.f32.mrb[0].mxu0
  %v4563 = vadd.f32 0.0, %v4562
  %v4564 = vpop.f32.mrb[0].mxu0
  %v4565 = vpop.f32.mrb[0].mxu0
  %v4566 = vadd.f32 0.0, %v4565
  %v4567 = vpop.f32.mrb[0].mxu0
  %4568 = vmatprep.mubr.bf16.mxu0 0
  %4569 = vmatmul.mubr.bf16.gmra.mrb[0].mxu0 %v4297
  %v4570 = vpop.f32.mrb[0].mxu0
  %v4571 = vadd.f32 0.0, %v4570
  %v4572 = vpop.f32.mrb[0].mxu0
  %v4573 = vpop.f32.mrb[0].mxu0
  %v4574 = vadd.f32 0.0, %v4573
  %v4575 = vpop.f32.mrb[0].mxu0
  %4576 = vmatprep.mubr.bf16.mxu0 0
  %4577 = vmatmul.mubr.bf16.gmra.mrb[0].mxu0 %v4300
  %v4578 = vpop.f32.mrb[0].mxu0
  %v4579 = vadd.f32 0.0, %v4578
  %v4580 = vpop.f32.mrb[0].mxu0
  %v4581 = vpop.f32.mrb[0].mxu0
  %v4582 = vadd.f32 0.0, %v4581
  %v4583 = vpop.f32.mrb[0].mxu0
  %4584 = vmatprep.mubr.bf16.mxu0 0
  %4585 = vmatmul.mubr.bf16.gmra.mrb[0].mxu0 %v4303
  %v4586 = vpop.f32.mrb[0].mxu0
  %v4587 = vadd.f32 0.0, %v4586
  %v4588 = vpop.f32.mrb[0].mxu0
  %v4589 = vpop.f32.mrb[0].mxu0
  %v4590 = vadd.f32 0.0, %v4589
  %v4591 = vpop.f32.mrb[0].mxu0
  %4592 = vmatprep.mubr.bf16.mxu0 0
  %4593 = vmatmul.mubr.bf16.gmra.mrb[0].mxu0 %v4306
  %v4594 = vpop.f32.mrb[0].mxu0
  %v4595 = vadd.f32 0.0, %v4594
  %v4596 = vpop.f32.mrb[0].mxu0
  %v4597 = vpop.f32.mrb[0].mxu0
  %v4598 = vadd.f32 0.0, %v4597
  %v4599 = vpop.f32.mrb[0].mxu0
  %4600 = vdwg.mxu0
  %v4601 = vsel %vm1894, %v4347, 0.0
  %v4602 = vsel %vm1894, %v4350, 0.0
  %v4603 = vadd.f32 %v4601, %v4602
  %v4604 = vsel %vm1894, %v4355, 0.0
  %v4605 = vadd.f32 %v4603, %v4604
  %v4606 = vsel %vm1894, %v4358, 0.0
  %v4607 = vadd.f32 %v4605, %v4606
  %v4608 = vsel %vm1894, %v4363, 0.0
  %v4609 = vadd.f32 %v4607, %v4608
  %v4610 = vsel %vm1894, %v4366, 0.0
  %v4611 = vadd.f32 %v4609, %v4610
  %v4612 = vsel %vm1894, %v4371, 0.0
  %v4613 = vadd.f32 %v4611, %v4612
  %v4614 = vsel %vm1894, %v4374, 0.0
  %v4615 = vadd.f32 %v4613, %v4614
  %v4616 = vsel %vm1894, %v4379, 0.0
  %v4617 = vadd.f32 %v4615, %v4616
  %v4618 = vsel %vm1894, %v4382, 0.0
  %v4619 = vadd.f32 %v4617, %v4618
  %v4620 = vsel %vm1894, %v4387, 0.0
  %v4621 = vadd.f32 %v4619, %v4620
  %v4622 = vsel %vm1894, %v4390, 0.0
  %v4623 = vadd.f32 %v4621, %v4622
  %v4624 = vsel %vm1894, %v4395, 0.0
  %v4625 = vadd.f32 %v4623, %v4624
  %v4626 = vsel %vm1894, %v4398, 0.0
  %v4627 = vadd.f32 %v4625, %v4626
  %v4628 = vsel %vm1894, %v4403, 0.0
  %v4629 = vadd.f32 %v4627, %v4628
  %v4630 = vsel %vm1894, %v4406, 0.0
  %v4631 = vadd.f32 %v4629, %v4630
  %v4632 = vsel %vm1894, %v4411, 0.0
  %v4633 = vadd.f32 %v4631, %v4632
  %v4634 = vsel %vm1894, %v4414, 0.0
  %v4635 = vadd.f32 %v4633, %v4634
  %v4636 = vsel %vm1894, %v4419, 0.0
  %v4637 = vadd.f32 %v4635, %v4636
  %v4638 = vsel %vm1894, %v4422, 0.0
  %v4639 = vadd.f32 %v4637, %v4638
  %v4640 = vsel %vm1894, %v4427, 0.0
  %v4641 = vadd.f32 %v4639, %v4640
  %v4642 = vsel %vm1894, %v4430, 0.0
  %v4643 = vadd.f32 %v4641, %v4642
  %v4644 = vsel %vm1894, %v4435, 0.0
  %v4645 = vadd.f32 %v4643, %v4644
  %v4646 = vsel %vm1894, %v4438, 0.0
  %v4647 = vadd.f32 %v4645, %v4646
  %v4648 = vsel %vm1894, %v4443, 0.0
  %v4649 = vadd.f32 %v4647, %v4648
  %v4650 = vsel %vm1894, %v4446, 0.0
  %v4651 = vadd.f32 %v4649, %v4650
  %v4652 = vsel %vm1894, %v4451, 0.0
  %v4653 = vadd.f32 %v4651, %v4652
  %v4654 = vsel %vm1894, %v4454, 0.0
  %v4655 = vadd.f32 %v4653, %v4654
  %v4656 = vsel %vm1894, %v4459, 0.0
  %v4657 = vadd.f32 %v4655, %v4656
  %v4658 = vsel %vm1894, %v4462, 0.0
  %v4659 = vadd.f32 %v4657, %v4658
  %v4660 = vsel %vm1894, %v4467, 0.0
  %v4661 = vadd.f32 %v4659, %v4660
  %v4662 = vsel %vm1894, %v4470, 0.0
  %v4663 = vadd.f32 %v4661, %v4662
  %v4664 = vsel %vm1894, %v4475, 0.0
  %v4665 = vadd.f32 %v4663, %v4664
  %v4666 = vsel %vm1894, %v4478, 0.0
  %v4667 = vadd.f32 %v4665, %v4666
  %v4668 = vsel %vm1894, %v4483, 0.0
  %v4669 = vadd.f32 %v4667, %v4668
  %v4670 = vsel %vm1894, %v4486, 0.0
  %v4671 = vadd.f32 %v4669, %v4670
  %v4672 = vsel %vm1894, %v4491, 0.0
  %v4673 = vadd.f32 %v4671, %v4672
  %v4674 = vsel %vm1894, %v4494, 0.0
  %v4675 = vadd.f32 %v4673, %v4674
  %v4676 = vsel %vm1894, %v4499, 0.0
  %v4677 = vadd.f32 %v4675, %v4676
  %v4678 = vsel %vm1894, %v4502, 0.0
  %v4679 = vadd.f32 %v4677, %v4678
  %v4680 = vsel %vm1894, %v4507, 0.0
  %v4681 = vadd.f32 %v4679, %v4680
  %v4682 = vsel %vm1894, %v4510, 0.0
  %v4683 = vadd.f32 %v4681, %v4682
  %v4684 = vsel %vm1894, %v4515, 0.0
  %v4685 = vadd.f32 %v4683, %v4684
  %v4686 = vsel %vm1894, %v4518, 0.0
  %v4687 = vadd.f32 %v4685, %v4686
  %v4688 = vsel %vm1894, %v4523, 0.0
  %v4689 = vadd.f32 %v4687, %v4688
  %v4690 = vsel %vm1894, %v4526, 0.0
  %v4691 = vadd.f32 %v4689, %v4690
  %v4692 = vsel %vm1894, %v4531, 0.0
  %v4693 = vadd.f32 %v4691, %v4692
  %v4694 = vsel %vm1894, %v4534, 0.0
  %v4695 = vadd.f32 %v4693, %v4694
  %v4696 = vsel %vm1894, %v4539, 0.0
  %v4697 = vadd.f32 %v4695, %v4696
  %v4698 = vsel %vm1894, %v4542, 0.0
  %v4699 = vadd.f32 %v4697, %v4698
  %v4700 = vsel %vm1894, %v4547, 0.0
  %v4701 = vadd.f32 %v4699, %v4700
  %v4702 = vsel %vm1894, %v4550, 0.0
  %v4703 = vadd.f32 %v4701, %v4702
  %v4704 = vsel %vm1894, %v4555, 0.0
  %v4705 = vadd.f32 %v4703, %v4704
  %v4706 = vsel %vm1894, %v4558, 0.0
  %v4707 = vadd.f32 %v4705, %v4706
  %v4708 = vsel %vm1894, %v4563, 0.0
  %v4709 = vadd.f32 %v4707, %v4708
  %v4710 = vsel %vm1894, %v4566, 0.0
  %v4711 = vadd.f32 %v4709, %v4710
  %v4712 = vsel %vm1894, %v4571, 0.0
  %v4713 = vadd.f32 %v4711, %v4712
  %v4714 = vsel %vm1894, %v4574, 0.0
  %v4715 = vadd.f32 %v4713, %v4714
  %v4716 = vsel %vm1894, %v4579, 0.0
  %v4717 = vadd.f32 %v4715, %v4716
  %v4718 = vsel %vm1894, %v4582, 0.0
  %v4719 = vadd.f32 %v4717, %v4718
  %v4720 = vsel %vm1894, %v4587, 0.0
  %v4721 = vadd.f32 %v4719, %v4720
  %v4722 = vsel %vm1894, %v4590, 0.0
  %v4723 = vadd.f32 %v4721, %v4722
  %v4724 = vsel %vm1894, %v4595, 0.0
  %v4725 = vadd.f32 %v4723, %v4724
  %v4726 = vsel %vm1894, %v4598, 0.0
  %v4727 = vadd.f32 %v4725, %v4726
  %v4728 = vrot.slane %v4727, 4
  %v4729 = vadd.f32 %v4727, %v4728
  %v4730 = vrot.slane %v4729, 2
  %v4731 = vadd.f32 %v4729, %v4730
  %v4732 = vrot.slane %v4731, 1
  %v4733 = vadd.f32 %v4731, %v4732
  %v4734 = vmul.f32 %v4733, %v785
  %v4735 = vsub.f32 %v4347, %v4734
  %v4736 = vsub.f32 %v4350, %v4734
  %v4737 = vsub.f32 %v4355, %v4734
  %v4738 = vsub.f32 %v4358, %v4734
  %v4739 = vsub.f32 %v4363, %v4734
  %v4740 = vsub.f32 %v4366, %v4734
  %v4741 = vsub.f32 %v4371, %v4734
  %v4742 = vsub.f32 %v4374, %v4734
  %v4743 = vsub.f32 %v4379, %v4734
  %v4744 = vsub.f32 %v4382, %v4734
  %v4745 = vsub.f32 %v4387, %v4734
  %v4746 = vsub.f32 %v4390, %v4734
  %v4747 = vsub.f32 %v4395, %v4734
  %v4748 = vsub.f32 %v4398, %v4734
  %v4749 = vsub.f32 %v4403, %v4734
  %v4750 = vsub.f32 %v4406, %v4734
  %v4751 = vsub.f32 %v4411, %v4734
  %v4752 = vsub.f32 %v4414, %v4734
  %v4753 = vsub.f32 %v4419, %v4734
  %v4754 = vsub.f32 %v4422, %v4734
  %v4755 = vsub.f32 %v4427, %v4734
  %v4756 = vsub.f32 %v4430, %v4734
  %v4757 = vsub.f32 %v4435, %v4734
  %v4758 = vsub.f32 %v4438, %v4734
  %v4759 = vsub.f32 %v4443, %v4734
  %v4760 = vsub.f32 %v4446, %v4734
  %v4761 = vsub.f32 %v4451, %v4734
  %v4762 = vsub.f32 %v4454, %v4734
  %v4763 = vsub.f32 %v4459, %v4734
  %v4764 = vsub.f32 %v4462, %v4734
  %v4765 = vsub.f32 %v4467, %v4734
  %v4766 = vsub.f32 %v4470, %v4734
  %v4767 = vsub.f32 %v4475, %v4734
  %v4768 = vsub.f32 %v4478, %v4734
  %v4769 = vsub.f32 %v4483, %v4734
  %v4770 = vsub.f32 %v4486, %v4734
  %v4771 = vsub.f32 %v4491, %v4734
  %v4772 = vsub.f32 %v4494, %v4734
  %v4773 = vsub.f32 %v4499, %v4734
  %v4774 = vsub.f32 %v4502, %v4734
  %v4775 = vsub.f32 %v4507, %v4734
  %v4776 = vsub.f32 %v4510, %v4734
  %v4777 = vsub.f32 %v4515, %v4734
  %v4778 = vsub.f32 %v4518, %v4734
  %v4779 = vsub.f32 %v4523, %v4734
  %v4780 = vsub.f32 %v4526, %v4734
  %v4781 = vsub.f32 %v4531, %v4734
  %v4782 = vsub.f32 %v4534, %v4734
  %v4783 = vsub.f32 %v4539, %v4734
  %v4784 = vsub.f32 %v4542, %v4734
  %v4785 = vsub.f32 %v4547, %v4734
  %v4786 = vsub.f32 %v4550, %v4734
  %v4787 = vsub.f32 %v4555, %v4734
  %v4788 = vsub.f32 %v4558, %v4734
  %v4789 = vsub.f32 %v4563, %v4734
  %v4790 = vsub.f32 %v4566, %v4734
  %v4791 = vsub.f32 %v4571, %v4734
  %v4792 = vsub.f32 %v4574, %v4734
  %v4793 = vsub.f32 %v4579, %v4734
  %v4794 = vsub.f32 %v4582, %v4734
  %v4795 = vsub.f32 %v4587, %v4734
  %v4796 = vsub.f32 %v4590, %v4734
  %v4797 = vsub.f32 %v4595, %v4734
  %v4798 = vsub.f32 %v4598, %v4734
  %v4799 = vmul.f32 %v4735, %v4735
  %v4800 = vmul.f32 %v4736, %v4736
  %v4801 = vmul.f32 %v4737, %v4737
  %v4802 = vmul.f32 %v4738, %v4738
  %v4803 = vmul.f32 %v4739, %v4739
  %v4804 = vmul.f32 %v4740, %v4740
  %v4805 = vmul.f32 %v4741, %v4741
  %v4806 = vmul.f32 %v4742, %v4742
  %v4807 = vmul.f32 %v4743, %v4743
  %v4808 = vmul.f32 %v4744, %v4744
  %v4809 = vmul.f32 %v4745, %v4745
  %v4810 = vmul.f32 %v4746, %v4746
  %v4811 = vmul.f32 %v4747, %v4747
  %v4812 = vmul.f32 %v4748, %v4748
  %v4813 = vmul.f32 %v4749, %v4749
  %v4814 = vmul.f32 %v4750, %v4750
  %v4815 = vmul.f32 %v4751, %v4751
  %v4816 = vmul.f32 %v4752, %v4752
  %v4817 = vmul.f32 %v4753, %v4753
  %v4818 = vmul.f32 %v4754, %v4754
  %v4819 = vmul.f32 %v4755, %v4755
  %v4820 = vmul.f32 %v4756, %v4756
  %v4821 = vmul.f32 %v4757, %v4757
  %v4822 = vmul.f32 %v4758, %v4758
  %v4823 = vmul.f32 %v4759, %v4759
  %v4824 = vmul.f32 %v4760, %v4760
  %v4825 = vmul.f32 %v4761, %v4761
  %v4826 = vmul.f32 %v4762, %v4762
  %v4827 = vmul.f32 %v4763, %v4763
  %v4828 = vmul.f32 %v4764, %v4764
  %v4829 = vmul.f32 %v4765, %v4765
  %v4830 = vmul.f32 %v4766, %v4766
  %v4831 = vmul.f32 %v4767, %v4767
  %v4832 = vmul.f32 %v4768, %v4768
  %v4833 = vmul.f32 %v4769, %v4769
  %v4834 = vmul.f32 %v4770, %v4770
  %v4835 = vmul.f32 %v4771, %v4771
  %v4836 = vmul.f32 %v4772, %v4772
  %v4837 = vmul.f32 %v4773, %v4773
  %v4838 = vmul.f32 %v4774, %v4774
  %v4839 = vmul.f32 %v4775, %v4775
  %v4840 = vmul.f32 %v4776, %v4776
  %v4841 = vmul.f32 %v4777, %v4777
  %v4842 = vmul.f32 %v4778, %v4778
  %v4843 = vmul.f32 %v4779, %v4779
  %v4844 = vmul.f32 %v4780, %v4780
  %v4845 = vmul.f32 %v4781, %v4781
  %v4846 = vmul.f32 %v4782, %v4782
  %v4847 = vmul.f32 %v4783, %v4783
  %v4848 = vmul.f32 %v4784, %v4784
  %v4849 = vmul.f32 %v4785, %v4785
  %v4850 = vmul.f32 %v4786, %v4786
  %v4851 = vmul.f32 %v4787, %v4787
  %v4852 = vmul.f32 %v4788, %v4788
  %v4853 = vmul.f32 %v4789, %v4789
  %v4854 = vmul.f32 %v4790, %v4790
  %v4855 = vmul.f32 %v4791, %v4791
  %v4856 = vmul.f32 %v4792, %v4792
  %v4857 = vmul.f32 %v4793, %v4793
  %v4858 = vmul.f32 %v4794, %v4794
  %v4859 = vmul.f32 %v4795, %v4795
  %v4860 = vmul.f32 %v4796, %v4796
  %v4861 = vmul.f32 %v4797, %v4797
  %v4862 = vmul.f32 %v4798, %v4798
  %v4863 = vsel %vm1894, %v4799, 0.0
  %v4864 = vsel %vm1894, %v4800, 0.0
  %v4865 = vadd.f32 %v4863, %v4864
  %v4866 = vsel %vm1894, %v4801, 0.0
  %v4867 = vadd.f32 %v4865, %v4866
  %v4868 = vsel %vm1894, %v4802, 0.0
  %v4869 = vadd.f32 %v4867, %v4868
  %v4870 = vsel %vm1894, %v4803, 0.0
  %v4871 = vadd.f32 %v4869, %v4870
  %v4872 = vsel %vm1894, %v4804, 0.0
  %v4873 = vadd.f32 %v4871, %v4872
  %v4874 = vsel %vm1894, %v4805, 0.0
  %v4875 = vadd.f32 %v4873, %v4874
  %v4876 = vsel %vm1894, %v4806, 0.0
  %v4877 = vadd.f32 %v4875, %v4876
  %v4878 = vsel %vm1894, %v4807, 0.0
  %v4879 = vadd.f32 %v4877, %v4878
  %v4880 = vsel %vm1894, %v4808, 0.0
  %v4881 = vadd.f32 %v4879, %v4880
  %v4882 = vsel %vm1894, %v4809, 0.0
  %v4883 = vadd.f32 %v4881, %v4882
  %v4884 = vsel %vm1894, %v4810, 0.0
  %v4885 = vadd.f32 %v4883, %v4884
  %v4886 = vsel %vm1894, %v4811, 0.0
  %v4887 = vadd.f32 %v4885, %v4886
  %v4888 = vsel %vm1894, %v4812, 0.0
  %v4889 = vadd.f32 %v4887, %v4888
  %v4890 = vsel %vm1894, %v4813, 0.0
  %v4891 = vadd.f32 %v4889, %v4890
  %v4892 = vsel %vm1894, %v4814, 0.0
  %v4893 = vadd.f32 %v4891, %v4892
  %v4894 = vsel %vm1894, %v4815, 0.0
  %v4895 = vadd.f32 %v4893, %v4894
  %v4896 = vsel %vm1894, %v4816, 0.0
  %v4897 = vadd.f32 %v4895, %v4896
  %v4898 = vsel %vm1894, %v4817, 0.0
  %v4899 = vadd.f32 %v4897, %v4898
  %v4900 = vsel %vm1894, %v4818, 0.0
  %v4901 = vadd.f32 %v4899, %v4900
  %v4902 = vsel %vm1894, %v4819, 0.0
  %v4903 = vadd.f32 %v4901, %v4902
  %v4904 = vsel %vm1894, %v4820, 0.0
  %v4905 = vadd.f32 %v4903, %v4904
  %v4906 = vsel %vm1894, %v4821, 0.0
  %v4907 = vadd.f32 %v4905, %v4906
  %v4908 = vsel %vm1894, %v4822, 0.0
  %v4909 = vadd.f32 %v4907, %v4908
  %v4910 = vsel %vm1894, %v4823, 0.0
  %v4911 = vadd.f32 %v4909, %v4910
  %v4912 = vsel %vm1894, %v4824, 0.0
  %v4913 = vadd.f32 %v4911, %v4912
  %v4914 = vsel %vm1894, %v4825, 0.0
  %v4915 = vadd.f32 %v4913, %v4914
  %v4916 = vsel %vm1894, %v4826, 0.0
  %v4917 = vadd.f32 %v4915, %v4916
  %v4918 = vsel %vm1894, %v4827, 0.0
  %v4919 = vadd.f32 %v4917, %v4918
  %v4920 = vsel %vm1894, %v4828, 0.0
  %v4921 = vadd.f32 %v4919, %v4920
  %v4922 = vsel %vm1894, %v4829, 0.0
  %v4923 = vadd.f32 %v4921, %v4922
  %v4924 = vsel %vm1894, %v4830, 0.0
  %v4925 = vadd.f32 %v4923, %v4924
  %v4926 = vsel %vm1894, %v4831, 0.0
  %v4927 = vadd.f32 %v4925, %v4926
  %v4928 = vsel %vm1894, %v4832, 0.0
  %v4929 = vadd.f32 %v4927, %v4928
  %v4930 = vsel %vm1894, %v4833, 0.0
  %v4931 = vadd.f32 %v4929, %v4930
  %v4932 = vsel %vm1894, %v4834, 0.0
  %v4933 = vadd.f32 %v4931, %v4932
  %v4934 = vsel %vm1894, %v4835, 0.0
  %v4935 = vadd.f32 %v4933, %v4934
  %v4936 = vsel %vm1894, %v4836, 0.0
  %v4937 = vadd.f32 %v4935, %v4936
  %v4938 = vsel %vm1894, %v4837, 0.0
  %v4939 = vadd.f32 %v4937, %v4938
  %v4940 = vsel %vm1894, %v4838, 0.0
  %v4941 = vadd.f32 %v4939, %v4940
  %v4942 = vsel %vm1894, %v4839, 0.0
  %v4943 = vadd.f32 %v4941, %v4942
  %v4944 = vsel %vm1894, %v4840, 0.0
  %v4945 = vadd.f32 %v4943, %v4944
  %v4946 = vsel %vm1894, %v4841, 0.0
  %v4947 = vadd.f32 %v4945, %v4946
  %v4948 = vsel %vm1894, %v4842, 0.0
  %v4949 = vadd.f32 %v4947, %v4948
  %v4950 = vsel %vm1894, %v4843, 0.0
  %v4951 = vadd.f32 %v4949, %v4950
  %v4952 = vsel %vm1894, %v4844, 0.0
  %v4953 = vadd.f32 %v4951, %v4952
  %v4954 = vsel %vm1894, %v4845, 0.0
  %v4955 = vadd.f32 %v4953, %v4954
  %v4956 = vsel %vm1894, %v4846, 0.0
  %v4957 = vadd.f32 %v4955, %v4956
  %v4958 = vsel %vm1894, %v4847, 0.0
  %v4959 = vadd.f32 %v4957, %v4958
  %v4960 = vsel %vm1894, %v4848, 0.0
  %v4961 = vadd.f32 %v4959, %v4960
  %v4962 = vsel %vm1894, %v4849, 0.0
  %v4963 = vadd.f32 %v4961, %v4962
  %v4964 = vsel %vm1894, %v4850, 0.0
  %v4965 = vadd.f32 %v4963, %v4964
  %v4966 = vsel %vm1894, %v4851, 0.0
  %v4967 = vadd.f32 %v4965, %v4966
  %v4968 = vsel %vm1894, %v4852, 0.0
  %v4969 = vadd.f32 %v4967, %v4968
  %v4970 = vsel %vm1894, %v4853, 0.0
  %v4971 = vadd.f32 %v4969, %v4970
  %v4972 = vsel %vm1894, %v4854, 0.0
  %v4973 = vadd.f32 %v4971, %v4972
  %v4974 = vsel %vm1894, %v4855, 0.0
  %v4975 = vadd.f32 %v4973, %v4974
  %v4976 = vsel %vm1894, %v4856, 0.0
  %v4977 = vadd.f32 %v4975, %v4976
  %v4978 = vsel %vm1894, %v4857, 0.0
  %v4979 = vadd.f32 %v4977, %v4978
  %v4980 = vsel %vm1894, %v4858, 0.0
  %v4981 = vadd.f32 %v4979, %v4980
  %v4982 = vsel %vm1894, %v4859, 0.0
  %v4983 = vadd.f32 %v4981, %v4982
  %v4984 = vsel %vm1894, %v4860, 0.0
  %v4985 = vadd.f32 %v4983, %v4984
  %v4986 = vsel %vm1894, %v4861, 0.0
  %v4987 = vadd.f32 %v4985, %v4986
  %v4988 = vsel %vm1894, %v4862, 0.0
  %v4989 = vadd.f32 %v4987, %v4988
  %v4990 = vrot.slane %v4989, 4
  %v4991 = vadd.f32 %v4989, %v4990
  %v4992 = vrot.slane %v4991, 2
  %v4993 = vadd.f32 %v4991, %v4992
  %v4994 = vrot.slane %v4993, 1
  %v4995 = vadd.f32 %v4993, %v4994
  %v4996 = vmul.f32 %v4995, %v785
  %v4997 = vld [vmem:[%s6] sm:$0x1]
  %v4998 = vadd.f32 %v4996, 1e-05
  %v4999 = vrsqrt.pop %v4998
  %v5000 = vmul.f32 %v4997, %v4999
  %v5002 = vlaneseq
  %v5003 = vshrl.u32 %v5002, 7
  %v5004 = vsub.s32 0, %v5003
  %v5005 = vrot.slane %v5000, %v5004
  %v5007 = vmul.f32 %v4735, %v5005
  %v5008 = vmul.f32 %v4736, %v5005
  %v5009 = vmul.f32 %v4737, %v5005
  %v5010 = vmul.f32 %v4738, %v5005
  %v5011 = vmul.f32 %v4739, %v5005
  %v5012 = vmul.f32 %v4740, %v5005
  %v5013 = vmul.f32 %v4741, %v5005
  %v5014 = vmul.f32 %v4742, %v5005
  %v5015 = vmul.f32 %v4743, %v5005
  %v5016 = vmul.f32 %v4744, %v5005
  %v5017 = vmul.f32 %v4745, %v5005
  %v5018 = vmul.f32 %v4746, %v5005
  %v5019 = vmul.f32 %v4747, %v5005
  %v5020 = vmul.f32 %v4748, %v5005
  %v5021 = vmul.f32 %v4749, %v5005
  %v5022 = vmul.f32 %v4750, %v5005
  %v5023 = vmul.f32 %v4751, %v5005
  %v5024 = vmul.f32 %v4752, %v5005
  %v5025 = vmul.f32 %v4753, %v5005
  %v5026 = vmul.f32 %v4754, %v5005
  %v5027 = vmul.f32 %v4755, %v5005
  %v5028 = vmul.f32 %v4756, %v5005
  %v5029 = vmul.f32 %v4757, %v5005
  %v5030 = vmul.f32 %v4758, %v5005
  %v5031 = vmul.f32 %v4759, %v5005
  %v5032 = vmul.f32 %v4760, %v5005
  %v5033 = vmul.f32 %v4761, %v5005
  %v5034 = vmul.f32 %v4762, %v5005
  %v5035 = vmul.f32 %v4763, %v5005
  %v5036 = vmul.f32 %v4764, %v5005
  %v5037 = vmul.f32 %v4765, %v5005
  %v5038 = vmul.f32 %v4766, %v5005
  %v5039 = vmul.f32 %v4767, %v5005
  %v5040 = vmul.f32 %v4768, %v5005
  %v5041 = vmul.f32 %v4769, %v5005
  %v5042 = vmul.f32 %v4770, %v5005
  %v5043 = vmul.f32 %v4771, %v5005
  %v5044 = vmul.f32 %v4772, %v5005
  %v5045 = vmul.f32 %v4773, %v5005
  %v5046 = vmul.f32 %v4774, %v5005
  %v5047 = vmul.f32 %v4775, %v5005
  %v5048 = vmul.f32 %v4776, %v5005
  %v5049 = vmul.f32 %v4777, %v5005
  %v5050 = vmul.f32 %v4778, %v5005
  %v5051 = vmul.f32 %v4779, %v5005
  %v5052 = vmul.f32 %v4780, %v5005
  %v5053 = vmul.f32 %v4781, %v5005
  %v5054 = vmul.f32 %v4782, %v5005
  %v5055 = vmul.f32 %v4783, %v5005
  %v5056 = vmul.f32 %v4784, %v5005
  %v5057 = vmul.f32 %v4785, %v5005
  %v5058 = vmul.f32 %v4786, %v5005
  %v5059 = vmul.f32 %v4787, %v5005
  %v5060 = vmul.f32 %v4788, %v5005
  %v5061 = vmul.f32 %v4789, %v5005
  %v5062 = vmul.f32 %v4790, %v5005
  %v5063 = vmul.f32 %v4791, %v5005
  %v5064 = vmul.f32 %v4792, %v5005
  %v5065 = vmul.f32 %v4793, %v5005
  %v5066 = vmul.f32 %v4794, %v5005
  %v5067 = vmul.f32 %v4795, %v5005
  %v5068 = vmul.f32 %v4796, %v5005
  %v5069 = vmul.f32 %v4797, %v5005
  %v5070 = vmul.f32 %v4798, %v5005
  %v5071 = vld [vmem:[%s7] sm:$0x1]
  %v5073 = vlaneseq
  %v5074 = vshrl.u32 %v5073, 7
  %v5075 = vsub.s32 0, %v5074
  %v5076 = vrot.slane %v5071, %v5075
  %v5078 = vadd.f32 %v5007, %v5076
  %v5079 = vadd.f32 %v5008, %v5076
  %v5080 = vadd.f32 %v5009, %v5076
  %v5081 = vadd.f32 %v5010, %v5076
  %v5082 = vadd.f32 %v5011, %v5076
  %v5083 = vadd.f32 %v5012, %v5076
  %v5084 = vadd.f32 %v5013, %v5076
  %v5085 = vadd.f32 %v5014, %v5076
  %v5086 = vadd.f32 %v5015, %v5076
  %v5087 = vadd.f32 %v5016, %v5076
  %v5088 = vadd.f32 %v5017, %v5076
  %v5089 = vadd.f32 %v5018, %v5076
  %v5090 = vadd.f32 %v5019, %v5076
  %v5091 = vadd.f32 %v5020, %v5076
  %v5092 = vadd.f32 %v5021, %v5076
  %v5093 = vadd.f32 %v5022, %v5076
  %v5094 = vadd.f32 %v5023, %v5076
  %v5095 = vadd.f32 %v5024, %v5076
  %v5096 = vadd.f32 %v5025, %v5076
  %v5097 = vadd.f32 %v5026, %v5076
  %v5098 = vadd.f32 %v5027, %v5076
  %v5099 = vadd.f32 %v5028, %v5076
  %v5100 = vadd.f32 %v5029, %v5076
  %v5101 = vadd.f32 %v5030, %v5076
  %v5102 = vadd.f32 %v5031, %v5076
  %v5103 = vadd.f32 %v5032, %v5076
  %v5104 = vadd.f32 %v5033, %v5076
  %v5105 = vadd.f32 %v5034, %v5076
  %v5106 = vadd.f32 %v5035, %v5076
  %v5107 = vadd.f32 %v5036, %v5076
  %v5108 = vadd.f32 %v5037, %v5076
  %v5109 = vadd.f32 %v5038, %v5076
  %v5110 = vadd.f32 %v5039, %v5076
  %v5111 = vadd.f32 %v5040, %v5076
  %v5112 = vadd.f32 %v5041, %v5076
  %v5113 = vadd.f32 %v5042, %v5076
  %v5114 = vadd.f32 %v5043, %v5076
  %v5115 = vadd.f32 %v5044, %v5076
  %v5116 = vadd.f32 %v5045, %v5076
  %v5117 = vadd.f32 %v5046, %v5076
  %v5118 = vadd.f32 %v5047, %v5076
  %v5119 = vadd.f32 %v5048, %v5076
  %v5120 = vadd.f32 %v5049, %v5076
  %v5121 = vadd.f32 %v5050, %v5076
  %v5122 = vadd.f32 %v5051, %v5076
  %v5123 = vadd.f32 %v5052, %v5076
  %v5124 = vadd.f32 %v5053, %v5076
  %v5125 = vadd.f32 %v5054, %v5076
  %v5126 = vadd.f32 %v5055, %v5076
  %v5127 = vadd.f32 %v5056, %v5076
  %v5128 = vadd.f32 %v5057, %v5076
  %v5129 = vadd.f32 %v5058, %v5076
  %v5130 = vadd.f32 %v5059, %v5076
  %v5131 = vadd.f32 %v5060, %v5076
  %v5132 = vadd.f32 %v5061, %v5076
  %v5133 = vadd.f32 %v5062, %v5076
  %v5134 = vadd.f32 %v5063, %v5076
  %v5135 = vadd.f32 %v5064, %v5076
  %v5136 = vadd.f32 %v5065, %v5076
  %v5137 = vadd.f32 %v5066, %v5076
  %v5138 = vadd.f32 %v5067, %v5076
  %v5139 = vadd.f32 %v5068, %v5076
  %v5140 = vadd.f32 %v5069, %v5076
  %v5141 = vadd.f32 %v5070, %v5076
  %v5142 = vmax.f32 %v5078, 0.0
  %v5143 = vmax.f32 %v5079, 0.0
  %v5144 = vmax.f32 %v5080, 0.0
  %v5145 = vmax.f32 %v5081, 0.0
  %v5146 = vmax.f32 %v5082, 0.0
  %v5147 = vmax.f32 %v5083, 0.0
  %v5148 = vmax.f32 %v5084, 0.0
  %v5149 = vmax.f32 %v5085, 0.0
  %v5150 = vmax.f32 %v5086, 0.0
  %v5151 = vmax.f32 %v5087, 0.0
  %v5152 = vmax.f32 %v5088, 0.0
  %v5153 = vmax.f32 %v5089, 0.0
  %v5154 = vmax.f32 %v5090, 0.0
  %v5155 = vmax.f32 %v5091, 0.0
  %v5156 = vmax.f32 %v5092, 0.0
  %v5157 = vmax.f32 %v5093, 0.0
  %v5158 = vmax.f32 %v5094, 0.0
  %v5159 = vmax.f32 %v5095, 0.0
  %v5160 = vmax.f32 %v5096, 0.0
  %v5161 = vmax.f32 %v5097, 0.0
  %v5162 = vmax.f32 %v5098, 0.0
  %v5163 = vmax.f32 %v5099, 0.0
  %v5164 = vmax.f32 %v5100, 0.0
  %v5165 = vmax.f32 %v5101, 0.0
  %v5166 = vmax.f32 %v5102, 0.0
  %v5167 = vmax.f32 %v5103, 0.0
  %v5168 = vmax.f32 %v5104, 0.0
  %v5169 = vmax.f32 %v5105, 0.0
  %v5170 = vmax.f32 %v5106, 0.0
  %v5171 = vmax.f32 %v5107, 0.0
  %v5172 = vmax.f32 %v5108, 0.0
  %v5173 = vmax.f32 %v5109, 0.0
  %v5174 = vmax.f32 %v5110, 0.0
  %v5175 = vmax.f32 %v5111, 0.0
  %v5176 = vmax.f32 %v5112, 0.0
  %v5177 = vmax.f32 %v5113, 0.0
  %v5178 = vmax.f32 %v5114, 0.0
  %v5179 = vmax.f32 %v5115, 0.0
  %v5180 = vmax.f32 %v5116, 0.0
  %v5181 = vmax.f32 %v5117, 0.0
  %v5182 = vmax.f32 %v5118, 0.0
  %v5183 = vmax.f32 %v5119, 0.0
  %v5184 = vmax.f32 %v5120, 0.0
  %v5185 = vmax.f32 %v5121, 0.0
  %v5186 = vmax.f32 %v5122, 0.0
  %v5187 = vmax.f32 %v5123, 0.0
  %v5188 = vmax.f32 %v5124, 0.0
  %v5189 = vmax.f32 %v5125, 0.0
  %v5190 = vmax.f32 %v5126, 0.0
  %v5191 = vmax.f32 %v5127, 0.0
  %v5192 = vmax.f32 %v5128, 0.0
  %v5193 = vmax.f32 %v5129, 0.0
  %v5194 = vmax.f32 %v5130, 0.0
  %v5195 = vmax.f32 %v5131, 0.0
  %v5196 = vmax.f32 %v5132, 0.0
  %v5197 = vmax.f32 %v5133, 0.0
  %v5198 = vmax.f32 %v5134, 0.0
  %v5199 = vmax.f32 %v5135, 0.0
  %v5200 = vmax.f32 %v5136, 0.0
  %v5201 = vmax.f32 %v5137, 0.0
  %v5202 = vmax.f32 %v5138, 0.0
  %v5203 = vmax.f32 %v5139, 0.0
  %v5204 = vmax.f32 %v5140, 0.0
  %v5205 = vmax.f32 %v5141, 0.0
  %v5206 = vpack.c.bf16 %v5143, %v5142
  %v5207 = vpack.c.bf16 %v5145, %v5144
  %v5208 = vpack.c.bf16 %v5147, %v5146
  %v5209 = vpack.c.bf16 %v5149, %v5148
  %v5210 = vpack.c.bf16 %v5151, %v5150
  %v5211 = vpack.c.bf16 %v5153, %v5152
  %v5212 = vpack.c.bf16 %v5155, %v5154
  %v5213 = vpack.c.bf16 %v5157, %v5156
  %v5214 = vpack.c.bf16 %v5159, %v5158
  %v5215 = vpack.c.bf16 %v5161, %v5160
  %v5216 = vpack.c.bf16 %v5163, %v5162
  %v5217 = vpack.c.bf16 %v5165, %v5164
  %v5218 = vpack.c.bf16 %v5167, %v5166
  %v5219 = vpack.c.bf16 %v5169, %v5168
  %v5220 = vpack.c.bf16 %v5171, %v5170
  %v5221 = vpack.c.bf16 %v5173, %v5172
  %v5222 = vpack.c.bf16 %v5175, %v5174
  %v5223 = vpack.c.bf16 %v5177, %v5176
  %v5224 = vpack.c.bf16 %v5179, %v5178
  %v5225 = vpack.c.bf16 %v5181, %v5180
  %v5226 = vpack.c.bf16 %v5183, %v5182
  %v5227 = vpack.c.bf16 %v5185, %v5184
  %v5228 = vpack.c.bf16 %v5187, %v5186
  %v5229 = vpack.c.bf16 %v5189, %v5188
  %v5230 = vpack.c.bf16 %v5191, %v5190
  %v5231 = vpack.c.bf16 %v5193, %v5192
  %v5232 = vpack.c.bf16 %v5195, %v5194
  %v5233 = vpack.c.bf16 %v5197, %v5196
  %v5234 = vpack.c.bf16 %v5199, %v5198
  %v5235 = vpack.c.bf16 %v5201, %v5200
  %v5236 = vpack.c.bf16 %v5203, %v5202
  %v5237 = vpack.c.bf16 %v5205, %v5204
  %v5238 = vld [vmem:[%s3] sm:$0xf]
  %v5240 = vsel %vm1894, %v5206, 0
  %v5243 = vsel %vm1894, %v5207, 0
  %v5246 = vsel %vm1894, %v5208, 0
  %v5249 = vsel %vm1894, %v5209, 0
  %v5252 = vsel %vm1894, %v5210, 0
  %v5255 = vsel %vm1894, %v5211, 0
  %v5258 = vsel %vm1894, %v5212, 0
  %v5261 = vsel %vm1894, %v5213, 0
  %v5264 = vsel %vm1894, %v5214, 0
  %v5267 = vsel %vm1894, %v5215, 0
  %v5270 = vsel %vm1894, %v5216, 0
  %v5273 = vsel %vm1894, %v5217, 0
  %v5276 = vsel %vm1894, %v5218, 0
  %v5279 = vsel %vm1894, %v5219, 0
  %v5282 = vsel %vm1894, %v5220, 0
  %v5285 = vsel %vm1894, %v5221, 0
  %v5288 = vsel %vm1894, %v5222, 0
  %v5291 = vsel %vm1894, %v5223, 0
  %v5294 = vsel %vm1894, %v5224, 0
  %v5297 = vsel %vm1894, %v5225, 0
  %v5300 = vsel %vm1894, %v5226, 0
  %v5303 = vsel %vm1894, %v5227, 0
  %v5306 = vsel %vm1894, %v5228, 0
  %v5309 = vsel %vm1894, %v5229, 0
  %v5312 = vsel %vm1894, %v5230, 0
  %v5315 = vsel %vm1894, %v5231, 0
  %v5318 = vsel %vm1894, %v5232, 0
  %v5321 = vsel %vm1894, %v5233, 0
  %v5324 = vsel %vm1894, %v5234, 0
  %v5327 = vsel %vm1894, %v5235, 0
  %v5330 = vsel %vm1894, %v5236, 0
  %v5333 = vsel %vm1894, %v5237, 0
  %v5336 = vsel %vm4308, %v5238, 0
  %5338 = vmatprep.subr.bf16.mxu0 0
  %5339 = vmatpush1.bf16.msra.mxu0 %v5336
  %5340 = vmatprep.subr.bf16.mxu0 0
  %5341 = vmatpush1.bf16.msra.mxu0 0
  %5342 = vmatprep.subr.bf16.mxu0 0
  %5343 = vmatpush1.bf16.msra.mxu0 0
  %5344 = vmatprep.subr.bf16.mxu0 0
  %5345 = vmatpush1.bf16.msra.mxu0 0
  %5346 = vmatprep.subr.bf16.mxu0 0
  %5347 = vmatpush1.bf16.msra.mxu0 0
  %5348 = vmatprep.subr.bf16.mxu0 0
  %5349 = vmatpush1.bf16.msra.mxu0 0
  %5350 = vmatprep.subr.bf16.mxu0 0
  %5351 = vmatpush1.bf16.msra.mxu0 0
  %5352 = vmatprep.subr.bf16.mxu0 0
  %5353 = vmatpush1.bf16.msra.mxu0 0
  %5354 = vmatprep.subr.bf16.mxu0 0
  %5355 = vmatpush1.bf16.msra.mxu0 0
  %5356 = vmatprep.subr.bf16.mxu0 0
  %5357 = vmatpush1.bf16.msra.mxu0 0
  %5358 = vmatprep.subr.bf16.mxu0 0
  %5359 = vmatpush1.bf16.msra.mxu0 0
  %5360 = vmatprep.subr.bf16.mxu0 0
  %5361 = vmatpush1.bf16.msra.mxu0 0
  %5362 = vmatprep.subr.bf16.mxu0 0
  %5363 = vmatpush1.bf16.msra.mxu0 0
  %5364 = vmatprep.subr.bf16.mxu0 0
  %5365 = vmatpush1.bf16.msra.mxu0 0
  %5366 = vmatprep.subr.bf16.mxu0 0
  %5367 = vmatpush1.bf16.msra.mxu0 0
  %5368 = vmatprep.subr.bf16.mxu0 0
  %5369 = vmatpush1.bf16.msra.mxu0 0
  %5370 = vmatprep.mubr.bf16.mxu0 0
  %5371 = vmatmul.mubr.bf16.gmra.mrb[0].mxu0 %v5240
  %v5372 = vpop.f32.mrb[0].mxu0
  %v5373 = vadd.f32 0.0, %v5372
  %v5374 = vpop.f32.mrb[0].mxu0
  %v5375 = vpop.f32.mrb[0].mxu0
  %v5376 = vadd.f32 0.0, %v5375
  %v5377 = vpop.f32.mrb[0].mxu0
  %5378 = vmatprep.mubr.bf16.mxu0 0
  %5379 = vmatmul.mubr.bf16.gmra.mrb[0].mxu0 %v5243
  %v5380 = vpop.f32.mrb[0].mxu0
  %v5381 = vadd.f32 0.0, %v5380
  %v5382 = vpop.f32.mrb[0].mxu0
  %v5383 = vpop.f32.mrb[0].mxu0
  %v5384 = vadd.f32 0.0, %v5383
  %v5385 = vpop.f32.mrb[0].mxu0
  %5386 = vmatprep.mubr.bf16.mxu0 0
  %5387 = vmatmul.mubr.bf16.gmra.mrb[0].mxu0 %v5246
  %v5388 = vpop.f32.mrb[0].mxu0
  %v5389 = vadd.f32 0.0, %v5388
  %v5390 = vpop.f32.mrb[0].mxu0
  %v5391 = vpop.f32.mrb[0].mxu0
  %v5392 = vadd.f32 0.0, %v5391
  %v5393 = vpop.f32.mrb[0].mxu0
  %5394 = vmatprep.mubr.bf16.mxu0 0
  %5395 = vmatmul.mubr.bf16.gmra.mrb[0].mxu0 %v5249
  %v5396 = vpop.f32.mrb[0].mxu0
  %v5397 = vadd.f32 0.0, %v5396
  %v5398 = vpop.f32.mrb[0].mxu0
  %v5399 = vpop.f32.mrb[0].mxu0
  %v5400 = vadd.f32 0.0, %v5399
  %v5401 = vpop.f32.mrb[0].mxu0
  %5402 = vmatprep.mubr.bf16.mxu0 0
  %5403 = vmatmul.mubr.bf16.gmra.mrb[0].mxu0 %v5252
  %v5404 = vpop.f32.mrb[0].mxu0
  %v5405 = vadd.f32 0.0, %v5404
  %v5406 = vpop.f32.mrb[0].mxu0
  %v5407 = vpop.f32.mrb[0].mxu0
  %v5408 = vadd.f32 0.0, %v5407
  %v5409 = vpop.f32.mrb[0].mxu0
  %5410 = vmatprep.mubr.bf16.mxu0 0
  %5411 = vmatmul.mubr.bf16.gmra.mrb[0].mxu0 %v5255
  %v5412 = vpop.f32.mrb[0].mxu0
  %v5413 = vadd.f32 0.0, %v5412
  %v5414 = vpop.f32.mrb[0].mxu0
  %v5415 = vpop.f32.mrb[0].mxu0
  %v5416 = vadd.f32 0.0, %v5415
  %v5417 = vpop.f32.mrb[0].mxu0
  %5418 = vmatprep.mubr.bf16.mxu0 0
  %5419 = vmatmul.mubr.bf16.gmra.mrb[0].mxu0 %v5258
  %v5420 = vpop.f32.mrb[0].mxu0
  %v5421 = vadd.f32 0.0, %v5420
  %v5422 = vpop.f32.mrb[0].mxu0
  %v5423 = vpop.f32.mrb[0].mxu0
  %v5424 = vadd.f32 0.0, %v5423
  %v5425 = vpop.f32.mrb[0].mxu0
  %5426 = vmatprep.mubr.bf16.mxu0 0
  %5427 = vmatmul.mubr.bf16.gmra.mrb[0].mxu0 %v5261
  %v5428 = vpop.f32.mrb[0].mxu0
  %v5429 = vadd.f32 0.0, %v5428
  %v5430 = vpop.f32.mrb[0].mxu0
  %v5431 = vpop.f32.mrb[0].mxu0
  %v5432 = vadd.f32 0.0, %v5431
  %v5433 = vpop.f32.mrb[0].mxu0
  %5434 = vmatprep.mubr.bf16.mxu0 0
  %5435 = vmatmul.mubr.bf16.gmra.mrb[0].mxu0 %v5264
  %v5436 = vpop.f32.mrb[0].mxu0
  %v5437 = vadd.f32 0.0, %v5436
  %v5438 = vpop.f32.mrb[0].mxu0
  %v5439 = vpop.f32.mrb[0].mxu0
  %v5440 = vadd.f32 0.0, %v5439
  %v5441 = vpop.f32.mrb[0].mxu0
  %5442 = vmatprep.mubr.bf16.mxu0 0
  %5443 = vmatmul.mubr.bf16.gmra.mrb[0].mxu0 %v5267
  %v5444 = vpop.f32.mrb[0].mxu0
  %v5445 = vadd.f32 0.0, %v5444
  %v5446 = vpop.f32.mrb[0].mxu0
  %v5447 = vpop.f32.mrb[0].mxu0
  %v5448 = vadd.f32 0.0, %v5447
  %v5449 = vpop.f32.mrb[0].mxu0
  %5450 = vmatprep.mubr.bf16.mxu0 0
  %5451 = vmatmul.mubr.bf16.gmra.mrb[0].mxu0 %v5270
  %v5452 = vpop.f32.mrb[0].mxu0
  %v5453 = vadd.f32 0.0, %v5452
  %v5454 = vpop.f32.mrb[0].mxu0
  %v5455 = vpop.f32.mrb[0].mxu0
  %v5456 = vadd.f32 0.0, %v5455
  %v5457 = vpop.f32.mrb[0].mxu0
  %5458 = vmatprep.mubr.bf16.mxu0 0
  %5459 = vmatmul.mubr.bf16.gmra.mrb[0].mxu0 %v5273
  %v5460 = vpop.f32.mrb[0].mxu0
  %v5461 = vadd.f32 0.0, %v5460
  %v5462 = vpop.f32.mrb[0].mxu0
  %v5463 = vpop.f32.mrb[0].mxu0
  %v5464 = vadd.f32 0.0, %v5463
  %v5465 = vpop.f32.mrb[0].mxu0
  %5466 = vmatprep.mubr.bf16.mxu0 0
  %5467 = vmatmul.mubr.bf16.gmra.mrb[0].mxu0 %v5276
  %v5468 = vpop.f32.mrb[0].mxu0
  %v5469 = vadd.f32 0.0, %v5468
  %v5470 = vpop.f32.mrb[0].mxu0
  %v5471 = vpop.f32.mrb[0].mxu0
  %v5472 = vadd.f32 0.0, %v5471
  %v5473 = vpop.f32.mrb[0].mxu0
  %5474 = vmatprep.mubr.bf16.mxu0 0
  %5475 = vmatmul.mubr.bf16.gmra.mrb[0].mxu0 %v5279
  %v5476 = vpop.f32.mrb[0].mxu0
  %v5477 = vadd.f32 0.0, %v5476
  %v5478 = vpop.f32.mrb[0].mxu0
  %v5479 = vpop.f32.mrb[0].mxu0
  %v5480 = vadd.f32 0.0, %v5479
  %v5481 = vpop.f32.mrb[0].mxu0
  %5482 = vmatprep.mubr.bf16.mxu0 0
  %5483 = vmatmul.mubr.bf16.gmra.mrb[0].mxu0 %v5282
  %v5484 = vpop.f32.mrb[0].mxu0
  %v5485 = vadd.f32 0.0, %v5484
  %v5486 = vpop.f32.mrb[0].mxu0
  %v5487 = vpop.f32.mrb[0].mxu0
  %v5488 = vadd.f32 0.0, %v5487
  %v5489 = vpop.f32.mrb[0].mxu0
  %5490 = vmatprep.mubr.bf16.mxu0 0
  %5491 = vmatmul.mubr.bf16.gmra.mrb[0].mxu0 %v5285
  %v5492 = vpop.f32.mrb[0].mxu0
  %v5493 = vadd.f32 0.0, %v5492
  %v5494 = vpop.f32.mrb[0].mxu0
  %v5495 = vpop.f32.mrb[0].mxu0
  %v5496 = vadd.f32 0.0, %v5495
  %v5497 = vpop.f32.mrb[0].mxu0
  %5498 = vmatprep.mubr.bf16.mxu0 0
  %5499 = vmatmul.mubr.bf16.gmra.mrb[0].mxu0 %v5288
  %v5500 = vpop.f32.mrb[0].mxu0
  %v5501 = vadd.f32 0.0, %v5500
  %v5502 = vpop.f32.mrb[0].mxu0
  %v5503 = vpop.f32.mrb[0].mxu0
  %v5504 = vadd.f32 0.0, %v5503
  %v5505 = vpop.f32.mrb[0].mxu0
  %5506 = vmatprep.mubr.bf16.mxu0 0
  %5507 = vmatmul.mubr.bf16.gmra.mrb[0].mxu0 %v5291
  %v5508 = vpop.f32.mrb[0].mxu0
  %v5509 = vadd.f32 0.0, %v5508
  %v5510 = vpop.f32.mrb[0].mxu0
  %v5511 = vpop.f32.mrb[0].mxu0
  %v5512 = vadd.f32 0.0, %v5511
  %v5513 = vpop.f32.mrb[0].mxu0
  %5514 = vmatprep.mubr.bf16.mxu0 0
  %5515 = vmatmul.mubr.bf16.gmra.mrb[0].mxu0 %v5294
  %v5516 = vpop.f32.mrb[0].mxu0
  %v5517 = vadd.f32 0.0, %v5516
  %v5518 = vpop.f32.mrb[0].mxu0
  %v5519 = vpop.f32.mrb[0].mxu0
  %v5520 = vadd.f32 0.0, %v5519
  %v5521 = vpop.f32.mrb[0].mxu0
  %5522 = vmatprep.mubr.bf16.mxu0 0
  %5523 = vmatmul.mubr.bf16.gmra.mrb[0].mxu0 %v5297
  %v5524 = vpop.f32.mrb[0].mxu0
  %v5525 = vadd.f32 0.0, %v5524
  %v5526 = vpop.f32.mrb[0].mxu0
  %v5527 = vpop.f32.mrb[0].mxu0
  %v5528 = vadd.f32 0.0, %v5527
  %v5529 = vpop.f32.mrb[0].mxu0
  %5530 = vmatprep.mubr.bf16.mxu0 0
  %5531 = vmatmul.mubr.bf16.gmra.mrb[0].mxu0 %v5300
  %v5532 = vpop.f32.mrb[0].mxu0
  %v5533 = vadd.f32 0.0, %v5532
  %v5534 = vpop.f32.mrb[0].mxu0
  %v5535 = vpop.f32.mrb[0].mxu0
  %v5536 = vadd.f32 0.0, %v5535
  %v5537 = vpop.f32.mrb[0].mxu0
  %5538 = vmatprep.mubr.bf16.mxu0 0
  %5539 = vmatmul.mubr.bf16.gmra.mrb[0].mxu0 %v5303
  %v5540 = vpop.f32.mrb[0].mxu0
  %v5541 = vadd.f32 0.0, %v5540
  %v5542 = vpop.f32.mrb[0].mxu0
  %v5543 = vpop.f32.mrb[0].mxu0
  %v5544 = vadd.f32 0.0, %v5543
  %v5545 = vpop.f32.mrb[0].mxu0
  %5546 = vmatprep.mubr.bf16.mxu0 0
  %5547 = vmatmul.mubr.bf16.gmra.mrb[0].mxu0 %v5306
  %v5548 = vpop.f32.mrb[0].mxu0
  %v5549 = vadd.f32 0.0, %v5548
  %v5550 = vpop.f32.mrb[0].mxu0
  %v5551 = vpop.f32.mrb[0].mxu0
  %v5552 = vadd.f32 0.0, %v5551
  %v5553 = vpop.f32.mrb[0].mxu0
  %5554 = vmatprep.mubr.bf16.mxu0 0
  %5555 = vmatmul.mubr.bf16.gmra.mrb[0].mxu0 %v5309
  %v5556 = vpop.f32.mrb[0].mxu0
  %v5557 = vadd.f32 0.0, %v5556
  %v5558 = vpop.f32.mrb[0].mxu0
  %v5559 = vpop.f32.mrb[0].mxu0
  %v5560 = vadd.f32 0.0, %v5559
  %v5561 = vpop.f32.mrb[0].mxu0
  %5562 = vmatprep.mubr.bf16.mxu0 0
  %5563 = vmatmul.mubr.bf16.gmra.mrb[0].mxu0 %v5312
  %v5564 = vpop.f32.mrb[0].mxu0
  %v5565 = vadd.f32 0.0, %v5564
  %v5566 = vpop.f32.mrb[0].mxu0
  %v5567 = vpop.f32.mrb[0].mxu0
  %v5568 = vadd.f32 0.0, %v5567
  %v5569 = vpop.f32.mrb[0].mxu0
  %5570 = vmatprep.mubr.bf16.mxu0 0
  %5571 = vmatmul.mubr.bf16.gmra.mrb[0].mxu0 %v5315
  %v5572 = vpop.f32.mrb[0].mxu0
  %v5573 = vadd.f32 0.0, %v5572
  %v5574 = vpop.f32.mrb[0].mxu0
  %v5575 = vpop.f32.mrb[0].mxu0
  %v5576 = vadd.f32 0.0, %v5575
  %v5577 = vpop.f32.mrb[0].mxu0
  %5578 = vmatprep.mubr.bf16.mxu0 0
  %5579 = vmatmul.mubr.bf16.gmra.mrb[0].mxu0 %v5318
  %v5580 = vpop.f32.mrb[0].mxu0
  %v5581 = vadd.f32 0.0, %v5580
  %v5582 = vpop.f32.mrb[0].mxu0
  %v5583 = vpop.f32.mrb[0].mxu0
  %v5584 = vadd.f32 0.0, %v5583
  %v5585 = vpop.f32.mrb[0].mxu0
  %5586 = vmatprep.mubr.bf16.mxu0 0
  %5587 = vmatmul.mubr.bf16.gmra.mrb[0].mxu0 %v5321
  %v5588 = vpop.f32.mrb[0].mxu0
  %v5589 = vadd.f32 0.0, %v5588
  %v5590 = vpop.f32.mrb[0].mxu0
  %v5591 = vpop.f32.mrb[0].mxu0
  %v5592 = vadd.f32 0.0, %v5591
  %v5593 = vpop.f32.mrb[0].mxu0
  %5594 = vmatprep.mubr.bf16.mxu0 0
  %5595 = vmatmul.mubr.bf16.gmra.mrb[0].mxu0 %v5324
  %v5596 = vpop.f32.mrb[0].mxu0
  %v5597 = vadd.f32 0.0, %v5596
  %v5598 = vpop.f32.mrb[0].mxu0
  %v5599 = vpop.f32.mrb[0].mxu0
  %v5600 = vadd.f32 0.0, %v5599
  %v5601 = vpop.f32.mrb[0].mxu0
  %5602 = vmatprep.mubr.bf16.mxu0 0
  %5603 = vmatmul.mubr.bf16.gmra.mrb[0].mxu0 %v5327
  %v5604 = vpop.f32.mrb[0].mxu0
  %v5605 = vadd.f32 0.0, %v5604
  %v5606 = vpop.f32.mrb[0].mxu0
  %v5607 = vpop.f32.mrb[0].mxu0
  %v5608 = vadd.f32 0.0, %v5607
  %v5609 = vpop.f32.mrb[0].mxu0
  %5610 = vmatprep.mubr.bf16.mxu0 0
  %5611 = vmatmul.mubr.bf16.gmra.mrb[0].mxu0 %v5330
  %v5612 = vpop.f32.mrb[0].mxu0
  %v5613 = vadd.f32 0.0, %v5612
  %v5614 = vpop.f32.mrb[0].mxu0
  %v5615 = vpop.f32.mrb[0].mxu0
  %v5616 = vadd.f32 0.0, %v5615
  %v5617 = vpop.f32.mrb[0].mxu0
  %5618 = vmatprep.mubr.bf16.mxu0 0
  %5619 = vmatmul.mubr.bf16.gmra.mrb[0].mxu0 %v5333
  %v5620 = vpop.f32.mrb[0].mxu0
  %v5621 = vadd.f32 0.0, %v5620
  %v5622 = vpop.f32.mrb[0].mxu0
  %v5623 = vpop.f32.mrb[0].mxu0
  %v5624 = vadd.f32 0.0, %v5623
  %v5625 = vpop.f32.mrb[0].mxu0
  %5626 = vdwg.mxu0
  %vm5627 = vcmask 130048
  %v5628 = vsel %vm5627, %v5373, 0.0
  %v5629 = vsel %vm5627, %v5376, 0.0
  %v5630 = vadd.f32 %v5628, %v5629
  %v5631 = vsel %vm5627, %v5381, 0.0
  %v5632 = vadd.f32 %v5630, %v5631
  %v5633 = vsel %vm5627, %v5384, 0.0
  %v5634 = vadd.f32 %v5632, %v5633
  %v5635 = vsel %vm5627, %v5389, 0.0
  %v5636 = vadd.f32 %v5634, %v5635
  %v5637 = vsel %vm5627, %v5392, 0.0
  %v5638 = vadd.f32 %v5636, %v5637
  %v5639 = vsel %vm5627, %v5397, 0.0
  %v5640 = vadd.f32 %v5638, %v5639
  %v5641 = vsel %vm5627, %v5400, 0.0
  %v5642 = vadd.f32 %v5640, %v5641
  %v5643 = vsel %vm5627, %v5405, 0.0
  %v5644 = vadd.f32 %v5642, %v5643
  %v5645 = vsel %vm5627, %v5408, 0.0
  %v5646 = vadd.f32 %v5644, %v5645
  %v5647 = vsel %vm5627, %v5413, 0.0
  %v5648 = vadd.f32 %v5646, %v5647
  %v5649 = vsel %vm5627, %v5416, 0.0
  %v5650 = vadd.f32 %v5648, %v5649
  %v5651 = vsel %vm5627, %v5421, 0.0
  %v5652 = vadd.f32 %v5650, %v5651
  %v5653 = vsel %vm5627, %v5424, 0.0
  %v5654 = vadd.f32 %v5652, %v5653
  %v5655 = vsel %vm5627, %v5429, 0.0
  %v5656 = vadd.f32 %v5654, %v5655
  %v5657 = vsel %vm5627, %v5432, 0.0
  %v5658 = vadd.f32 %v5656, %v5657
  %v5659 = vsel %vm5627, %v5437, 0.0
  %v5660 = vadd.f32 %v5658, %v5659
  %v5661 = vsel %vm5627, %v5440, 0.0
  %v5662 = vadd.f32 %v5660, %v5661
  %v5663 = vsel %vm5627, %v5445, 0.0
  %v5664 = vadd.f32 %v5662, %v5663
  %v5665 = vsel %vm5627, %v5448, 0.0
  %v5666 = vadd.f32 %v5664, %v5665
  %v5667 = vsel %vm5627, %v5453, 0.0
  %v5668 = vadd.f32 %v5666, %v5667
  %v5669 = vsel %vm5627, %v5456, 0.0
  %v5670 = vadd.f32 %v5668, %v5669
  %v5671 = vsel %vm5627, %v5461, 0.0
  %v5672 = vadd.f32 %v5670, %v5671
  %v5673 = vsel %vm5627, %v5464, 0.0
  %v5674 = vadd.f32 %v5672, %v5673
  %v5675 = vsel %vm5627, %v5469, 0.0
  %v5676 = vadd.f32 %v5674, %v5675
  %v5677 = vsel %vm5627, %v5472, 0.0
  %v5678 = vadd.f32 %v5676, %v5677
  %v5679 = vsel %vm5627, %v5477, 0.0
  %v5680 = vadd.f32 %v5678, %v5679
  %v5681 = vsel %vm5627, %v5480, 0.0
  %v5682 = vadd.f32 %v5680, %v5681
  %v5683 = vsel %vm5627, %v5485, 0.0
  %v5684 = vadd.f32 %v5682, %v5683
  %v5685 = vsel %vm5627, %v5488, 0.0
  %v5686 = vadd.f32 %v5684, %v5685
  %v5687 = vsel %vm5627, %v5493, 0.0
  %v5688 = vadd.f32 %v5686, %v5687
  %v5689 = vsel %vm5627, %v5496, 0.0
  %v5690 = vadd.f32 %v5688, %v5689
  %v5691 = vsel %vm5627, %v5501, 0.0
  %v5692 = vadd.f32 %v5690, %v5691
  %v5693 = vsel %vm5627, %v5504, 0.0
  %v5694 = vadd.f32 %v5692, %v5693
  %v5695 = vsel %vm5627, %v5509, 0.0
  %v5696 = vadd.f32 %v5694, %v5695
  %v5697 = vsel %vm5627, %v5512, 0.0
  %v5698 = vadd.f32 %v5696, %v5697
  %v5699 = vsel %vm5627, %v5517, 0.0
  %v5700 = vadd.f32 %v5698, %v5699
  %v5701 = vsel %vm5627, %v5520, 0.0
  %v5702 = vadd.f32 %v5700, %v5701
  %v5703 = vsel %vm5627, %v5525, 0.0
  %v5704 = vadd.f32 %v5702, %v5703
  %v5705 = vsel %vm5627, %v5528, 0.0
  %v5706 = vadd.f32 %v5704, %v5705
  %v5707 = vsel %vm5627, %v5533, 0.0
  %v5708 = vadd.f32 %v5706, %v5707
  %v5709 = vsel %vm5627, %v5536, 0.0
  %v5710 = vadd.f32 %v5708, %v5709
  %v5711 = vsel %vm5627, %v5541, 0.0
  %v5712 = vadd.f32 %v5710, %v5711
  %v5713 = vsel %vm5627, %v5544, 0.0
  %v5714 = vadd.f32 %v5712, %v5713
  %v5715 = vsel %vm5627, %v5549, 0.0
  %v5716 = vadd.f32 %v5714, %v5715
  %v5717 = vsel %vm5627, %v5552, 0.0
  %v5718 = vadd.f32 %v5716, %v5717
  %v5719 = vsel %vm5627, %v5557, 0.0
  %v5720 = vadd.f32 %v5718, %v5719
  %v5721 = vsel %vm5627, %v5560, 0.0
  %v5722 = vadd.f32 %v5720, %v5721
  %v5723 = vsel %vm5627, %v5565, 0.0
  %v5724 = vadd.f32 %v5722, %v5723
  %v5725 = vsel %vm5627, %v5568, 0.0
  %v5726 = vadd.f32 %v5724, %v5725
  %v5727 = vsel %vm5627, %v5573, 0.0
  %v5728 = vadd.f32 %v5726, %v5727
  %v5729 = vsel %vm5627, %v5576, 0.0
  %v5730 = vadd.f32 %v5728, %v5729
  %v5731 = vsel %vm5627, %v5581, 0.0
  %v5732 = vadd.f32 %v5730, %v5731
  %v5733 = vsel %vm5627, %v5584, 0.0
  %v5734 = vadd.f32 %v5732, %v5733
  %v5735 = vsel %vm5627, %v5589, 0.0
  %v5736 = vadd.f32 %v5734, %v5735
  %v5737 = vsel %vm5627, %v5592, 0.0
  %v5738 = vadd.f32 %v5736, %v5737
  %v5739 = vsel %vm5627, %v5597, 0.0
  %v5740 = vadd.f32 %v5738, %v5739
  %v5741 = vsel %vm5627, %v5600, 0.0
  %v5742 = vadd.f32 %v5740, %v5741
  %v5743 = vsel %vm5627, %v5605, 0.0
  %v5744 = vadd.f32 %v5742, %v5743
  %v5745 = vsel %vm5627, %v5608, 0.0
  %v5746 = vadd.f32 %v5744, %v5745
  %v5747 = vsel %vm5627, %v5613, 0.0
  %v5748 = vadd.f32 %v5746, %v5747
  %v5749 = vsel %vm5627, %v5616, 0.0
  %v5750 = vadd.f32 %v5748, %v5749
  %v5751 = vsel %vm5627, %v5621, 0.0
  %v5752 = vadd.f32 %v5750, %v5751
  %v5753 = vsel %vm5627, %v5624, 0.0
  %v5754 = vadd.f32 %v5752, %v5753
  %v5755 = vrot.slane %v5754, 4
  %v5756 = vadd.f32 %v5754, %v5755
  %v5757 = vrot.slane %v5756, 2
  %v5758 = vadd.f32 %v5756, %v5757
  %v5759 = vrot.slane %v5758, 1
  %v5760 = vadd.f32 %v5758, %v5759
  %v5761 = vmul.f32 %v5760, %v785
  %v5762 = vsub.f32 %v5373, %v5761
  %v5763 = vsub.f32 %v5376, %v5761
  %v5764 = vsub.f32 %v5381, %v5761
  %v5765 = vsub.f32 %v5384, %v5761
  %v5766 = vsub.f32 %v5389, %v5761
  %v5767 = vsub.f32 %v5392, %v5761
  %v5768 = vsub.f32 %v5397, %v5761
  %v5769 = vsub.f32 %v5400, %v5761
  %v5770 = vsub.f32 %v5405, %v5761
  %v5771 = vsub.f32 %v5408, %v5761
  %v5772 = vsub.f32 %v5413, %v5761
  %v5773 = vsub.f32 %v5416, %v5761
  %v5774 = vsub.f32 %v5421, %v5761
  %v5775 = vsub.f32 %v5424, %v5761
  %v5776 = vsub.f32 %v5429, %v5761
  %v5777 = vsub.f32 %v5432, %v5761
  %v5778 = vsub.f32 %v5437, %v5761
  %v5779 = vsub.f32 %v5440, %v5761
  %v5780 = vsub.f32 %v5445, %v5761
  %v5781 = vsub.f32 %v5448, %v5761
  %v5782 = vsub.f32 %v5453, %v5761
  %v5783 = vsub.f32 %v5456, %v5761
  %v5784 = vsub.f32 %v5461, %v5761
  %v5785 = vsub.f32 %v5464, %v5761
  %v5786 = vsub.f32 %v5469, %v5761
  %v5787 = vsub.f32 %v5472, %v5761
  %v5788 = vsub.f32 %v5477, %v5761
  %v5789 = vsub.f32 %v5480, %v5761
  %v5790 = vsub.f32 %v5485, %v5761
  %v5791 = vsub.f32 %v5488, %v5761
  %v5792 = vsub.f32 %v5493, %v5761
  %v5793 = vsub.f32 %v5496, %v5761
  %v5794 = vsub.f32 %v5501, %v5761
  %v5795 = vsub.f32 %v5504, %v5761
  %v5796 = vsub.f32 %v5509, %v5761
  %v5797 = vsub.f32 %v5512, %v5761
  %v5798 = vsub.f32 %v5517, %v5761
  %v5799 = vsub.f32 %v5520, %v5761
  %v5800 = vsub.f32 %v5525, %v5761
  %v5801 = vsub.f32 %v5528, %v5761
  %v5802 = vsub.f32 %v5533, %v5761
  %v5803 = vsub.f32 %v5536, %v5761
  %v5804 = vsub.f32 %v5541, %v5761
  %v5805 = vsub.f32 %v5544, %v5761
  %v5806 = vsub.f32 %v5549, %v5761
  %v5807 = vsub.f32 %v5552, %v5761
  %v5808 = vsub.f32 %v5557, %v5761
  %v5809 = vsub.f32 %v5560, %v5761
  %v5810 = vsub.f32 %v5565, %v5761
  %v5811 = vsub.f32 %v5568, %v5761
  %v5812 = vsub.f32 %v5573, %v5761
  %v5813 = vsub.f32 %v5576, %v5761
  %v5814 = vsub.f32 %v5581, %v5761
  %v5815 = vsub.f32 %v5584, %v5761
  %v5816 = vsub.f32 %v5589, %v5761
  %v5817 = vsub.f32 %v5592, %v5761
  %v5818 = vsub.f32 %v5597, %v5761
  %v5819 = vsub.f32 %v5600, %v5761
  %v5820 = vsub.f32 %v5605, %v5761
  %v5821 = vsub.f32 %v5608, %v5761
  %v5822 = vsub.f32 %v5613, %v5761
  %v5823 = vsub.f32 %v5616, %v5761
  %v5824 = vsub.f32 %v5621, %v5761
  %v5825 = vsub.f32 %v5624, %v5761
  %v5826 = vmul.f32 %v5762, %v5762
  %v5827 = vmul.f32 %v5763, %v5763
  %v5828 = vmul.f32 %v5764, %v5764
  %v5829 = vmul.f32 %v5765, %v5765
  %v5830 = vmul.f32 %v5766, %v5766
  %v5831 = vmul.f32 %v5767, %v5767
  %v5832 = vmul.f32 %v5768, %v5768
  %v5833 = vmul.f32 %v5769, %v5769
  %v5834 = vmul.f32 %v5770, %v5770
  %v5835 = vmul.f32 %v5771, %v5771
  %v5836 = vmul.f32 %v5772, %v5772
  %v5837 = vmul.f32 %v5773, %v5773
  %v5838 = vmul.f32 %v5774, %v5774
  %v5839 = vmul.f32 %v5775, %v5775
  %v5840 = vmul.f32 %v5776, %v5776
  %v5841 = vmul.f32 %v5777, %v5777
  %v5842 = vmul.f32 %v5778, %v5778
  %v5843 = vmul.f32 %v5779, %v5779
  %v5844 = vmul.f32 %v5780, %v5780
  %v5845 = vmul.f32 %v5781, %v5781
  %v5846 = vmul.f32 %v5782, %v5782
  %v5847 = vmul.f32 %v5783, %v5783
  %v5848 = vmul.f32 %v5784, %v5784
  %v5849 = vmul.f32 %v5785, %v5785
  %v5850 = vmul.f32 %v5786, %v5786
  %v5851 = vmul.f32 %v5787, %v5787
  %v5852 = vmul.f32 %v5788, %v5788
  %v5853 = vmul.f32 %v5789, %v5789
  %v5854 = vmul.f32 %v5790, %v5790
  %v5855 = vmul.f32 %v5791, %v5791
  %v5856 = vmul.f32 %v5792, %v5792
  %v5857 = vmul.f32 %v5793, %v5793
  %v5858 = vmul.f32 %v5794, %v5794
  %v5859 = vmul.f32 %v5795, %v5795
  %v5860 = vmul.f32 %v5796, %v5796
  %v5861 = vmul.f32 %v5797, %v5797
  %v5862 = vmul.f32 %v5798, %v5798
  %v5863 = vmul.f32 %v5799, %v5799
  %v5864 = vmul.f32 %v5800, %v5800
  %v5865 = vmul.f32 %v5801, %v5801
  %v5866 = vmul.f32 %v5802, %v5802
  %v5867 = vmul.f32 %v5803, %v5803
  %v5868 = vmul.f32 %v5804, %v5804
  %v5869 = vmul.f32 %v5805, %v5805
  %v5870 = vmul.f32 %v5806, %v5806
  %v5871 = vmul.f32 %v5807, %v5807
  %v5872 = vmul.f32 %v5808, %v5808
  %v5873 = vmul.f32 %v5809, %v5809
  %v5874 = vmul.f32 %v5810, %v5810
  %v5875 = vmul.f32 %v5811, %v5811
  %v5876 = vmul.f32 %v5812, %v5812
  %v5877 = vmul.f32 %v5813, %v5813
  %v5878 = vmul.f32 %v5814, %v5814
  %v5879 = vmul.f32 %v5815, %v5815
  %v5880 = vmul.f32 %v5816, %v5816
  %v5881 = vmul.f32 %v5817, %v5817
  %v5882 = vmul.f32 %v5818, %v5818
  %v5883 = vmul.f32 %v5819, %v5819
  %v5884 = vmul.f32 %v5820, %v5820
  %v5885 = vmul.f32 %v5821, %v5821
  %v5886 = vmul.f32 %v5822, %v5822
  %v5887 = vmul.f32 %v5823, %v5823
  %v5888 = vmul.f32 %v5824, %v5824
  %v5889 = vmul.f32 %v5825, %v5825
  %v5890 = vsel %vm5627, %v5826, 0.0
  %v5891 = vsel %vm5627, %v5827, 0.0
  %v5892 = vadd.f32 %v5890, %v5891
  %v5893 = vsel %vm5627, %v5828, 0.0
  %v5894 = vadd.f32 %v5892, %v5893
  %v5895 = vsel %vm5627, %v5829, 0.0
  %v5896 = vadd.f32 %v5894, %v5895
  %v5897 = vsel %vm5627, %v5830, 0.0
  %v5898 = vadd.f32 %v5896, %v5897
  %v5899 = vsel %vm5627, %v5831, 0.0
  %v5900 = vadd.f32 %v5898, %v5899
  %v5901 = vsel %vm5627, %v5832, 0.0
  %v5902 = vadd.f32 %v5900, %v5901
  %v5903 = vsel %vm5627, %v5833, 0.0
  %v5904 = vadd.f32 %v5902, %v5903
  %v5905 = vsel %vm5627, %v5834, 0.0
  %v5906 = vadd.f32 %v5904, %v5905
  %v5907 = vsel %vm5627, %v5835, 0.0
  %v5908 = vadd.f32 %v5906, %v5907
  %v5909 = vsel %vm5627, %v5836, 0.0
  %v5910 = vadd.f32 %v5908, %v5909
  %v5911 = vsel %vm5627, %v5837, 0.0
  %v5912 = vadd.f32 %v5910, %v5911
  %v5913 = vsel %vm5627, %v5838, 0.0
  %v5914 = vadd.f32 %v5912, %v5913
  %v5915 = vsel %vm5627, %v5839, 0.0
  %v5916 = vadd.f32 %v5914, %v5915
  %v5917 = vsel %vm5627, %v5840, 0.0
  %v5918 = vadd.f32 %v5916, %v5917
  %v5919 = vsel %vm5627, %v5841, 0.0
  %v5920 = vadd.f32 %v5918, %v5919
  %v5921 = vsel %vm5627, %v5842, 0.0
  %v5922 = vadd.f32 %v5920, %v5921
  %v5923 = vsel %vm5627, %v5843, 0.0
  %v5924 = vadd.f32 %v5922, %v5923
  %v5925 = vsel %vm5627, %v5844, 0.0
  %v5926 = vadd.f32 %v5924, %v5925
  %v5927 = vsel %vm5627, %v5845, 0.0
  %v5928 = vadd.f32 %v5926, %v5927
  %v5929 = vsel %vm5627, %v5846, 0.0
  %v5930 = vadd.f32 %v5928, %v5929
  %v5931 = vsel %vm5627, %v5847, 0.0
  %v5932 = vadd.f32 %v5930, %v5931
  %v5933 = vsel %vm5627, %v5848, 0.0
  %v5934 = vadd.f32 %v5932, %v5933
  %v5935 = vsel %vm5627, %v5849, 0.0
  %v5936 = vadd.f32 %v5934, %v5935
  %v5937 = vsel %vm5627, %v5850, 0.0
  %v5938 = vadd.f32 %v5936, %v5937
  %v5939 = vsel %vm5627, %v5851, 0.0
  %v5940 = vadd.f32 %v5938, %v5939
  %v5941 = vsel %vm5627, %v5852, 0.0
  %v5942 = vadd.f32 %v5940, %v5941
  %v5943 = vsel %vm5627, %v5853, 0.0
  %v5944 = vadd.f32 %v5942, %v5943
  %v5945 = vsel %vm5627, %v5854, 0.0
  %v5946 = vadd.f32 %v5944, %v5945
  %v5947 = vsel %vm5627, %v5855, 0.0
  %v5948 = vadd.f32 %v5946, %v5947
  %v5949 = vsel %vm5627, %v5856, 0.0
  %v5950 = vadd.f32 %v5948, %v5949
  %v5951 = vsel %vm5627, %v5857, 0.0
  %v5952 = vadd.f32 %v5950, %v5951
  %v5953 = vsel %vm5627, %v5858, 0.0
  %v5954 = vadd.f32 %v5952, %v5953
  %v5955 = vsel %vm5627, %v5859, 0.0
  %v5956 = vadd.f32 %v5954, %v5955
  %v5957 = vsel %vm5627, %v5860, 0.0
  %v5958 = vadd.f32 %v5956, %v5957
  %v5959 = vsel %vm5627, %v5861, 0.0
  %v5960 = vadd.f32 %v5958, %v5959
  %v5961 = vsel %vm5627, %v5862, 0.0
  %v5962 = vadd.f32 %v5960, %v5961
  %v5963 = vsel %vm5627, %v5863, 0.0
  %v5964 = vadd.f32 %v5962, %v5963
  %v5965 = vsel %vm5627, %v5864, 0.0
  %v5966 = vadd.f32 %v5964, %v5965
  %v5967 = vsel %vm5627, %v5865, 0.0
  %v5968 = vadd.f32 %v5966, %v5967
  %v5969 = vsel %vm5627, %v5866, 0.0
  %v5970 = vadd.f32 %v5968, %v5969
  %v5971 = vsel %vm5627, %v5867, 0.0
  %v5972 = vadd.f32 %v5970, %v5971
  %v5973 = vsel %vm5627, %v5868, 0.0
  %v5974 = vadd.f32 %v5972, %v5973
  %v5975 = vsel %vm5627, %v5869, 0.0
  %v5976 = vadd.f32 %v5974, %v5975
  %v5977 = vsel %vm5627, %v5870, 0.0
  %v5978 = vadd.f32 %v5976, %v5977
  %v5979 = vsel %vm5627, %v5871, 0.0
  %v5980 = vadd.f32 %v5978, %v5979
  %v5981 = vsel %vm5627, %v5872, 0.0
  %v5982 = vadd.f32 %v5980, %v5981
  %v5983 = vsel %vm5627, %v5873, 0.0
  %v5984 = vadd.f32 %v5982, %v5983
  %v5985 = vsel %vm5627, %v5874, 0.0
  %v5986 = vadd.f32 %v5984, %v5985
  %v5987 = vsel %vm5627, %v5875, 0.0
  %v5988 = vadd.f32 %v5986, %v5987
  %v5989 = vsel %vm5627, %v5876, 0.0
  %v5990 = vadd.f32 %v5988, %v5989
  %v5991 = vsel %vm5627, %v5877, 0.0
  %v5992 = vadd.f32 %v5990, %v5991
  %v5993 = vsel %vm5627, %v5878, 0.0
  %v5994 = vadd.f32 %v5992, %v5993
  %v5995 = vsel %vm5627, %v5879, 0.0
  %v5996 = vadd.f32 %v5994, %v5995
  %v5997 = vsel %vm5627, %v5880, 0.0
  %v5998 = vadd.f32 %v5996, %v5997
  %v5999 = vsel %vm5627, %v5881, 0.0
  %v6000 = vadd.f32 %v5998, %v5999
  %v6001 = vsel %vm5627, %v5882, 0.0
  %v6002 = vadd.f32 %v6000, %v6001
  %v6003 = vsel %vm5627, %v5883, 0.0
  %v6004 = vadd.f32 %v6002, %v6003
  %v6005 = vsel %vm5627, %v5884, 0.0
  %v6006 = vadd.f32 %v6004, %v6005
  %v6007 = vsel %vm5627, %v5885, 0.0
  %v6008 = vadd.f32 %v6006, %v6007
  %v6009 = vsel %vm5627, %v5886, 0.0
  %v6010 = vadd.f32 %v6008, %v6009
  %v6011 = vsel %vm5627, %v5887, 0.0
  %v6012 = vadd.f32 %v6010, %v6011
  %v6013 = vsel %vm5627, %v5888, 0.0
  %v6014 = vadd.f32 %v6012, %v6013
  %v6015 = vsel %vm5627, %v5889, 0.0
  %v6016 = vadd.f32 %v6014, %v6015
  %v6017 = vrot.slane %v6016, 4
  %v6018 = vadd.f32 %v6016, %v6017
  %v6019 = vrot.slane %v6018, 2
  %v6020 = vadd.f32 %v6018, %v6019
  %v6021 = vrot.slane %v6020, 1
  %v6022 = vadd.f32 %v6020, %v6021
  %v6023 = vmul.f32 %v6022, %v785
  %v6024 = vld [vmem:[%s8] sm:$0x1]
  %v6025 = vadd.f32 %v6023, 1e-05
  %v6026 = vrsqrt.pop %v6025
  %v6027 = vmul.f32 %v6024, %v6026
  %v6029 = vlaneseq
  %v6030 = vshrl.u32 %v6029, 7
  %v6031 = vsub.s32 0, %v6030
  %v6032 = vrot.slane %v6027, %v6031
  %v6034 = vmul.f32 %v5762, %v6032
  %v6035 = vmul.f32 %v5763, %v6032
  %v6036 = vmul.f32 %v5764, %v6032
  %v6037 = vmul.f32 %v5765, %v6032
  %v6038 = vmul.f32 %v5766, %v6032
  %v6039 = vmul.f32 %v5767, %v6032
  %v6040 = vmul.f32 %v5768, %v6032
  %v6041 = vmul.f32 %v5769, %v6032
  %v6042 = vmul.f32 %v5770, %v6032
  %v6043 = vmul.f32 %v5771, %v6032
  %v6044 = vmul.f32 %v5772, %v6032
  %v6045 = vmul.f32 %v5773, %v6032
  %v6046 = vmul.f32 %v5774, %v6032
  %v6047 = vmul.f32 %v5775, %v6032
  %v6048 = vmul.f32 %v5776, %v6032
  %v6049 = vmul.f32 %v5777, %v6032
  %v6050 = vmul.f32 %v5778, %v6032
  %v6051 = vmul.f32 %v5779, %v6032
  %v6052 = vmul.f32 %v5780, %v6032
  %v6053 = vmul.f32 %v5781, %v6032
  %v6054 = vmul.f32 %v5782, %v6032
  %v6055 = vmul.f32 %v5783, %v6032
  %v6056 = vmul.f32 %v5784, %v6032
  %v6057 = vmul.f32 %v5785, %v6032
  %v6058 = vmul.f32 %v5786, %v6032
  %v6059 = vmul.f32 %v5787, %v6032
  %v6060 = vmul.f32 %v5788, %v6032
  %v6061 = vmul.f32 %v5789, %v6032
  %v6062 = vmul.f32 %v5790, %v6032
  %v6063 = vmul.f32 %v5791, %v6032
  %v6064 = vmul.f32 %v5792, %v6032
  %v6065 = vmul.f32 %v5793, %v6032
  %v6066 = vmul.f32 %v5794, %v6032
  %v6067 = vmul.f32 %v5795, %v6032
  %v6068 = vmul.f32 %v5796, %v6032
  %v6069 = vmul.f32 %v5797, %v6032
  %v6070 = vmul.f32 %v5798, %v6032
  %v6071 = vmul.f32 %v5799, %v6032
  %v6072 = vmul.f32 %v5800, %v6032
  %v6073 = vmul.f32 %v5801, %v6032
  %v6074 = vmul.f32 %v5802, %v6032
  %v6075 = vmul.f32 %v5803, %v6032
  %v6076 = vmul.f32 %v5804, %v6032
  %v6077 = vmul.f32 %v5805, %v6032
  %v6078 = vmul.f32 %v5806, %v6032
  %v6079 = vmul.f32 %v5807, %v6032
  %v6080 = vmul.f32 %v5808, %v6032
  %v6081 = vmul.f32 %v5809, %v6032
  %v6082 = vmul.f32 %v5810, %v6032
  %v6083 = vmul.f32 %v5811, %v6032
  %v6084 = vmul.f32 %v5812, %v6032
  %v6085 = vmul.f32 %v5813, %v6032
  %v6086 = vmul.f32 %v5814, %v6032
  %v6087 = vmul.f32 %v5815, %v6032
  %v6088 = vmul.f32 %v5816, %v6032
  %v6089 = vmul.f32 %v5817, %v6032
  %v6090 = vmul.f32 %v5818, %v6032
  %v6091 = vmul.f32 %v5819, %v6032
  %v6092 = vmul.f32 %v5820, %v6032
  %v6093 = vmul.f32 %v5821, %v6032
  %v6094 = vmul.f32 %v5822, %v6032
  %v6095 = vmul.f32 %v5823, %v6032
  %v6096 = vmul.f32 %v5824, %v6032
  %v6097 = vmul.f32 %v5825, %v6032
  %v6098 = vld [vmem:[%s9] sm:$0x1]
  %v6100 = vlaneseq
  %v6101 = vshrl.u32 %v6100, 7
  %v6102 = vsub.s32 0, %v6101
  %v6103 = vrot.slane %v6098, %v6102
  %v6105 = vadd.f32 %v6034, %v6103
  %v6106 = vadd.f32 %v6035, %v6103
  %v6107 = vadd.f32 %v6036, %v6103
  %v6108 = vadd.f32 %v6037, %v6103
  %v6109 = vadd.f32 %v6038, %v6103
  %v6110 = vadd.f32 %v6039, %v6103
  %v6111 = vadd.f32 %v6040, %v6103
  %v6112 = vadd.f32 %v6041, %v6103
  %v6113 = vadd.f32 %v6042, %v6103
  %v6114 = vadd.f32 %v6043, %v6103
  %v6115 = vadd.f32 %v6044, %v6103
  %v6116 = vadd.f32 %v6045, %v6103
  %v6117 = vadd.f32 %v6046, %v6103
  %v6118 = vadd.f32 %v6047, %v6103
  %v6119 = vadd.f32 %v6048, %v6103
  %v6120 = vadd.f32 %v6049, %v6103
  %v6121 = vadd.f32 %v6050, %v6103
  %v6122 = vadd.f32 %v6051, %v6103
  %v6123 = vadd.f32 %v6052, %v6103
  %v6124 = vadd.f32 %v6053, %v6103
  %v6125 = vadd.f32 %v6054, %v6103
  %v6126 = vadd.f32 %v6055, %v6103
  %v6127 = vadd.f32 %v6056, %v6103
  %v6128 = vadd.f32 %v6057, %v6103
  %v6129 = vadd.f32 %v6058, %v6103
  %v6130 = vadd.f32 %v6059, %v6103
  %v6131 = vadd.f32 %v6060, %v6103
  %v6132 = vadd.f32 %v6061, %v6103
  %v6133 = vadd.f32 %v6062, %v6103
  %v6134 = vadd.f32 %v6063, %v6103
  %v6135 = vadd.f32 %v6064, %v6103
  %v6136 = vadd.f32 %v6065, %v6103
  %v6137 = vadd.f32 %v6066, %v6103
  %v6138 = vadd.f32 %v6067, %v6103
  %v6139 = vadd.f32 %v6068, %v6103
  %v6140 = vadd.f32 %v6069, %v6103
  %v6141 = vadd.f32 %v6070, %v6103
  %v6142 = vadd.f32 %v6071, %v6103
  %v6143 = vadd.f32 %v6072, %v6103
  %v6144 = vadd.f32 %v6073, %v6103
  %v6145 = vadd.f32 %v6074, %v6103
  %v6146 = vadd.f32 %v6075, %v6103
  %v6147 = vadd.f32 %v6076, %v6103
  %v6148 = vadd.f32 %v6077, %v6103
  %v6149 = vadd.f32 %v6078, %v6103
  %v6150 = vadd.f32 %v6079, %v6103
  %v6151 = vadd.f32 %v6080, %v6103
  %v6152 = vadd.f32 %v6081, %v6103
  %v6153 = vadd.f32 %v6082, %v6103
  %v6154 = vadd.f32 %v6083, %v6103
  %v6155 = vadd.f32 %v6084, %v6103
  %v6156 = vadd.f32 %v6085, %v6103
  %v6157 = vadd.f32 %v6086, %v6103
  %v6158 = vadd.f32 %v6087, %v6103
  %v6159 = vadd.f32 %v6088, %v6103
  %v6160 = vadd.f32 %v6089, %v6103
  %v6161 = vadd.f32 %v6090, %v6103
  %v6162 = vadd.f32 %v6091, %v6103
  %v6163 = vadd.f32 %v6092, %v6103
  %v6164 = vadd.f32 %v6093, %v6103
  %v6165 = vadd.f32 %v6094, %v6103
  %v6166 = vadd.f32 %v6095, %v6103
  %v6167 = vadd.f32 %v6096, %v6103
  %v6168 = vadd.f32 %v6097, %v6103
  %v6169 = vadd.f32 %v6105, %v397
  %v6170 = vadd.f32 %v6106, %v400
  %v6171 = vadd.f32 %v6107, %v405
  %v6172 = vadd.f32 %v6108, %v408
  %v6173 = vadd.f32 %v6109, %v413
  %v6174 = vadd.f32 %v6110, %v416
  %v6175 = vadd.f32 %v6111, %v421
  %v6176 = vadd.f32 %v6112, %v424
  %v6177 = vadd.f32 %v6113, %v429
  %v6178 = vadd.f32 %v6114, %v432
  %v6179 = vadd.f32 %v6115, %v437
  %v6180 = vadd.f32 %v6116, %v440
  %v6181 = vadd.f32 %v6117, %v445
  %v6182 = vadd.f32 %v6118, %v448
  %v6183 = vadd.f32 %v6119, %v453
  %v6184 = vadd.f32 %v6120, %v456
  %v6185 = vadd.f32 %v6121, %v461
  %v6186 = vadd.f32 %v6122, %v464
  %v6187 = vadd.f32 %v6123, %v469
  %v6188 = vadd.f32 %v6124, %v472
  %v6189 = vadd.f32 %v6125, %v477
  %v6190 = vadd.f32 %v6126, %v480
  %v6191 = vadd.f32 %v6127, %v485
  %v6192 = vadd.f32 %v6128, %v488
  %v6193 = vadd.f32 %v6129, %v493
  %v6194 = vadd.f32 %v6130, %v496
  %v6195 = vadd.f32 %v6131, %v501
  %v6196 = vadd.f32 %v6132, %v504
  %v6197 = vadd.f32 %v6133, %v509
  %v6198 = vadd.f32 %v6134, %v512
  %v6199 = vadd.f32 %v6135, %v517
  %v6200 = vadd.f32 %v6136, %v520
  %v6201 = vadd.f32 %v6137, %v525
  %v6202 = vadd.f32 %v6138, %v528
  %v6203 = vadd.f32 %v6139, %v533
  %v6204 = vadd.f32 %v6140, %v536
  %v6205 = vadd.f32 %v6141, %v541
  %v6206 = vadd.f32 %v6142, %v544
  %v6207 = vadd.f32 %v6143, %v549
  %v6208 = vadd.f32 %v6144, %v552
  %v6209 = vadd.f32 %v6145, %v557
  %v6210 = vadd.f32 %v6146, %v560
  %v6211 = vadd.f32 %v6147, %v565
  %v6212 = vadd.f32 %v6148, %v568
  %v6213 = vadd.f32 %v6149, %v573
  %v6214 = vadd.f32 %v6150, %v576
  %v6215 = vadd.f32 %v6151, %v581
  %v6216 = vadd.f32 %v6152, %v584
  %v6217 = vadd.f32 %v6153, %v589
  %v6218 = vadd.f32 %v6154, %v592
  %v6219 = vadd.f32 %v6155, %v597
  %v6220 = vadd.f32 %v6156, %v600
  %v6221 = vadd.f32 %v6157, %v605
  %v6222 = vadd.f32 %v6158, %v608
  %v6223 = vadd.f32 %v6159, %v613
  %v6224 = vadd.f32 %v6160, %v616
  %v6225 = vadd.f32 %v6161, %v621
  %v6226 = vadd.f32 %v6162, %v624
  %v6227 = vadd.f32 %v6163, %v629
  %v6228 = vadd.f32 %v6164, %v632
  %v6229 = vadd.f32 %v6165, %v637
  %v6230 = vadd.f32 %v6166, %v640
  %v6231 = vadd.f32 %v6167, %v645
  %v6232 = vadd.f32 %v6168, %v648
  %v6233 = vmax.f32 %v6169, 0.0
  %v6234 = vmax.f32 %v6170, 0.0
  %v6235 = vmax.f32 %v6171, 0.0
  %v6236 = vmax.f32 %v6172, 0.0
  %v6237 = vmax.f32 %v6173, 0.0
  %v6238 = vmax.f32 %v6174, 0.0
  %v6239 = vmax.f32 %v6175, 0.0
  %v6240 = vmax.f32 %v6176, 0.0
  %v6241 = vmax.f32 %v6177, 0.0
  %v6242 = vmax.f32 %v6178, 0.0
  %v6243 = vmax.f32 %v6179, 0.0
  %v6244 = vmax.f32 %v6180, 0.0
  %v6245 = vmax.f32 %v6181, 0.0
  %v6246 = vmax.f32 %v6182, 0.0
  %v6247 = vmax.f32 %v6183, 0.0
  %v6248 = vmax.f32 %v6184, 0.0
  %v6249 = vmax.f32 %v6185, 0.0
  %v6250 = vmax.f32 %v6186, 0.0
  %v6251 = vmax.f32 %v6187, 0.0
  %v6252 = vmax.f32 %v6188, 0.0
  %v6253 = vmax.f32 %v6189, 0.0
  %v6254 = vmax.f32 %v6190, 0.0
  %v6255 = vmax.f32 %v6191, 0.0
  %v6256 = vmax.f32 %v6192, 0.0
  %v6257 = vmax.f32 %v6193, 0.0
  %v6258 = vmax.f32 %v6194, 0.0
  %v6259 = vmax.f32 %v6195, 0.0
  %v6260 = vmax.f32 %v6196, 0.0
  %v6261 = vmax.f32 %v6197, 0.0
  %v6262 = vmax.f32 %v6198, 0.0
  %v6263 = vmax.f32 %v6199, 0.0
  %v6264 = vmax.f32 %v6200, 0.0
  %v6265 = vmax.f32 %v6201, 0.0
  %v6266 = vmax.f32 %v6202, 0.0
  %v6267 = vmax.f32 %v6203, 0.0
  %v6268 = vmax.f32 %v6204, 0.0
  %v6269 = vmax.f32 %v6205, 0.0
  %v6270 = vmax.f32 %v6206, 0.0
  %v6271 = vmax.f32 %v6207, 0.0
  %v6272 = vmax.f32 %v6208, 0.0
  %v6273 = vmax.f32 %v6209, 0.0
  %v6274 = vmax.f32 %v6210, 0.0
  %v6275 = vmax.f32 %v6211, 0.0
  %v6276 = vmax.f32 %v6212, 0.0
  %v6277 = vmax.f32 %v6213, 0.0
  %v6278 = vmax.f32 %v6214, 0.0
  %v6279 = vmax.f32 %v6215, 0.0
  %v6280 = vmax.f32 %v6216, 0.0
  %v6281 = vmax.f32 %v6217, 0.0
  %v6282 = vmax.f32 %v6218, 0.0
  %v6283 = vmax.f32 %v6219, 0.0
  %v6284 = vmax.f32 %v6220, 0.0
  %v6285 = vmax.f32 %v6221, 0.0
  %v6286 = vmax.f32 %v6222, 0.0
  %v6287 = vmax.f32 %v6223, 0.0
  %v6288 = vmax.f32 %v6224, 0.0
  %v6289 = vmax.f32 %v6225, 0.0
  %v6290 = vmax.f32 %v6226, 0.0
  %v6291 = vmax.f32 %v6227, 0.0
  %v6292 = vmax.f32 %v6228, 0.0
  %v6293 = vmax.f32 %v6229, 0.0
  %v6294 = vmax.f32 %v6230, 0.0
  %v6295 = vmax.f32 %v6231, 0.0
  %v6296 = vmax.f32 %v6232, 0.0
  %6297 = vst.msk [vmem:[%s10] sm:$0xff] %vm5627, %v6233
  %6298 = vst.msk [vmem:[%s10 + $0x8] sm:$0xff] %vm5627, %v6234
  %6299 = vst.msk [vmem:[%s10 + $0x10] sm:$0xff] %vm5627, %v6235
  %6300 = vst.msk [vmem:[%s10 + $0x18] sm:$0xff] %vm5627, %v6236
  %6301 = vst.msk [vmem:[%s10 + $0x20] sm:$0xff] %vm5627, %v6237
  %6302 = vst.msk [vmem:[%s10 + $0x28] sm:$0xff] %vm5627, %v6238
  %6303 = vst.msk [vmem:[%s10 + $0x30] sm:$0xff] %vm5627, %v6239
  %6304 = vst.msk [vmem:[%s10 + $0x38] sm:$0xff] %vm5627, %v6240
  %6305 = vst.msk [vmem:[%s10 + $0x40] sm:$0xff] %vm5627, %v6241
  %6306 = vst.msk [vmem:[%s10 + $0x48] sm:$0xff] %vm5627, %v6242
  %6307 = vst.msk [vmem:[%s10 + $0x50] sm:$0xff] %vm5627, %v6243
  %6308 = vst.msk [vmem:[%s10 + $0x58] sm:$0xff] %vm5627, %v6244
  %6309 = vst.msk [vmem:[%s10 + $0x60] sm:$0xff] %vm5627, %v6245
  %6310 = vst.msk [vmem:[%s10 + $0x68] sm:$0xff] %vm5627, %v6246
  %6311 = vst.msk [vmem:[%s10 + $0x70] sm:$0xff] %vm5627, %v6247
  %6312 = vst.msk [vmem:[%s10 + $0x78] sm:$0xff] %vm5627, %v6248
  %6313 = vst.msk [vmem:[%s10 + $0x80] sm:$0xff] %vm5627, %v6249
  %6314 = vst.msk [vmem:[%s10 + $0x88] sm:$0xff] %vm5627, %v6250
  %6315 = vst.msk [vmem:[%s10 + $0x90] sm:$0xff] %vm5627, %v6251
  %6316 = vst.msk [vmem:[%s10 + $0x98] sm:$0xff] %vm5627, %v6252
  %6317 = vst.msk [vmem:[%s10 + $0xa0] sm:$0xff] %vm5627, %v6253
  %6318 = vst.msk [vmem:[%s10 + $0xa8] sm:$0xff] %vm5627, %v6254
  %6319 = vst.msk [vmem:[%s10 + $0xb0] sm:$0xff] %vm5627, %v6255
  %6320 = vst.msk [vmem:[%s10 + $0xb8] sm:$0xff] %vm5627, %v6256
  %6321 = vst.msk [vmem:[%s10 + $0xc0] sm:$0xff] %vm5627, %v6257
  %6322 = vst.msk [vmem:[%s10 + $0xc8] sm:$0xff] %vm5627, %v6258
  %6323 = vst.msk [vmem:[%s10 + $0xd0] sm:$0xff] %vm5627, %v6259
  %6324 = vst.msk [vmem:[%s10 + $0xd8] sm:$0xff] %vm5627, %v6260
  %6325 = vst.msk [vmem:[%s10 + $0xe0] sm:$0xff] %vm5627, %v6261
  %6326 = vst.msk [vmem:[%s10 + $0xe8] sm:$0xff] %vm5627, %v6262
  %6327 = vst.msk [vmem:[%s10 + $0xf0] sm:$0xff] %vm5627, %v6263
  %6328 = vst.msk [vmem:[%s10 + $0xf8] sm:$0xff] %vm5627, %v6264
  %6329 = vst.msk [vmem:[%s10 + $0x100] sm:$0xff] %vm5627, %v6265
  %6330 = vst.msk [vmem:[%s10 + $0x108] sm:$0xff] %vm5627, %v6266
  %6331 = vst.msk [vmem:[%s10 + $0x110] sm:$0xff] %vm5627, %v6267
  %6332 = vst.msk [vmem:[%s10 + $0x118] sm:$0xff] %vm5627, %v6268
  %6333 = vst.msk [vmem:[%s10 + $0x120] sm:$0xff] %vm5627, %v6269
  %6334 = vst.msk [vmem:[%s10 + $0x128] sm:$0xff] %vm5627, %v6270
  %6335 = vst.msk [vmem:[%s10 + $0x130] sm:$0xff] %vm5627, %v6271
  %6336 = vst.msk [vmem:[%s10 + $0x138] sm:$0xff] %vm5627, %v6272
  %6337 = vst.msk [vmem:[%s10 + $0x140] sm:$0xff] %vm5627, %v6273
  %6338 = vst.msk [vmem:[%s10 + $0x148] sm:$0xff] %vm5627, %v6274
  %6339 = vst.msk [vmem:[%s10 + $0x150] sm:$0xff] %vm5627, %v6275
  %6340 = vst.msk [vmem:[%s10 + $0x158] sm:$0xff] %vm5627, %v6276
  %6341 = vst.msk [vmem:[%s10 + $0x160] sm:$0xff] %vm5627, %v6277
  %6342 = vst.msk [vmem:[%s10 + $0x168] sm:$0xff] %vm5627, %v6278
  %6343 = vst.msk [vmem:[%s10 + $0x170] sm:$0xff] %vm5627, %v6279
  %6344 = vst.msk [vmem:[%s10 + $0x178] sm:$0xff] %vm5627, %v6280
  %6345 = vst.msk [vmem:[%s10 + $0x180] sm:$0xff] %vm5627, %v6281
  %6346 = vst.msk [vmem:[%s10 + $0x188] sm:$0xff] %vm5627, %v6282
  %6347 = vst.msk [vmem:[%s10 + $0x190] sm:$0xff] %vm5627, %v6283
  %6348 = vst.msk [vmem:[%s10 + $0x198] sm:$0xff] %vm5627, %v6284
  %6349 = vst.msk [vmem:[%s10 + $0x1a0] sm:$0xff] %vm5627, %v6285
  %6350 = vst.msk [vmem:[%s10 + $0x1a8] sm:$0xff] %vm5627, %v6286
  %6351 = vst.msk [vmem:[%s10 + $0x1b0] sm:$0xff] %vm5627, %v6287
  %6352 = vst.msk [vmem:[%s10 + $0x1b8] sm:$0xff] %vm5627, %v6288
  %6353 = vst.msk [vmem:[%s10 + $0x1c0] sm:$0xff] %vm5627, %v6289
  %6354 = vst.msk [vmem:[%s10 + $0x1c8] sm:$0xff] %vm5627, %v6290
  %6355 = vst.msk [vmem:[%s10 + $0x1d0] sm:$0xff] %vm5627, %v6291
  %6356 = vst.msk [vmem:[%s10 + $0x1d8] sm:$0xff] %vm5627, %v6292
  %6357 = vst.msk [vmem:[%s10 + $0x1e0] sm:$0xff] %vm5627, %v6293
  %6358 = vst.msk [vmem:[%s10 + $0x1e8] sm:$0xff] %vm5627, %v6294
  %6359 = vst.msk [vmem:[%s10 + $0x1f0] sm:$0xff] %vm5627, %v6295
  %6360 = vst.msk [vmem:[%s10 + $0x1f8] sm:$0xff] %vm5627, %v6296
  // Predicated region
  $region42: #{first_residual_block.1} parent=0 // pred_check
    _
  $region43: #{first_residual_block.1} parent=0 // pred_check_branch
    %6362 = sbr.rel (0) target = $region45
  $region44: #{first_residual_block.1} parent=0 // pred_region
    _
  $region45: #{first_residual_block.1} parent=0 // pred_fallthru
    _
  // Predicated region
  $region46: #{first_residual_block.1} parent=0 // pred_check
    _
  $region47: #{first_residual_block.1} parent=0 // pred_check_branch
    %6364 = sbr.rel (0) target = $region49
  $region48: #{first_residual_block.1} parent=0 // pred_region
    _
  $region49: #{first_residual_block.1} parent=0 // pred_fallthru
    _

</llo_original>
